<compile_context>
chip_gen: v7x
topology: tpu7x:2x2x1
jax: 0.10.0
libtpu: 0.0.40
codegen_flags: <defaults>
</compile_context>

<pallas_src>
import functools

import jax
import jax.numpy as jnp
from jax.experimental import pallas as pl
from jax.experimental.pallas import tpu as pltpu


_VMEM_LIMIT = 32 * 1024 * 1024            # scoped-VMEM request (== v7x default scoped budget)
_VMEM_WORKING_SET_CAP = 24 * 1024 * 1024  # headroom for compiler-internal scratch on v7x


# ----------------------------------------------------------------------------
# Fused kernel
# ----------------------------------------------------------------------------

def _fsm_kernel(activation, z_ref, w1_ref, b1_ref, w2_ref, b2_ref, o_ref):
    """Everything resident in VMEM; single grid step.

    z_ref: (B, L) original dtype, w1_ref: (L, HID), b1_ref: (1, HID) f32,
    w2_ref: (HID, L), b2_ref: (1, L) f32, o_ref: (B, L) original dtype.
    """
    z = z_ref[...]                                            # (B, L)

    # fc1: h = relu(z @ W1 + b1) -- bf16 MXU operands, f32 accumulation.
    h = jnp.dot(z.astype(jnp.bfloat16), w1_ref[...].astype(jnp.bfloat16),
                preferred_element_type=jnp.float32)
    h = jnp.maximum(h + b1_ref[...], 0.0)                     # (B, HID) f32, stays in VMEM

    # fc2 + activation: y = act(h @ W2 + b2) -- h kept f32, cast only for MXU.
    y = jnp.dot(h.astype(jnp.bfloat16), w2_ref[...].astype(jnp.bfloat16),
                preferred_element_type=jnp.float32)
    y = activation(y + b2_ref[...])                           # (B, L) f32

    # Batch-wise attenuation: mean over the batch (sublane reduction).
    s = jnp.mean(y, axis=0, keepdims=True)                    # (1, L) f32

    # Feature-mask normalization: numerically stable softmax over features (XLU + EUP).
    s_max = jnp.max(s, axis=-1, keepdims=True)
    e = jnp.exp(s - s_max)
    m = e * pl.reciprocal(jnp.sum(e, axis=-1, keepdims=True), approx=False)

    # Apply the mask to the flattened input (broadcast over batch), lane-dense store.
    o_ref[...] = (z.astype(jnp.float32) * m).astype(o_ref.dtype)


# ----------------------------------------------------------------------------
# Wrapper
# ----------------------------------------------------------------------------

def feature_selection_module(z, w1, b1, w2, b2, *, activation=jax.nn.sigmoid):
    """z: (B, C, H, W) (any trailing shape, flattened to L = prod(trailing)).

    Weights are stored pre-transposed for `x @ W`:
      w1 = fc1.weight.T  with shape (L, HID),  b1: (HID,)
      w2 = fc2.weight.T  with shape (HID, L),  b2: (L,)
    """
    B = int(z.shape[0])
    L = 1
    for d in z.shape[1:]:
        L *= int(d)
    HID = int(w1.shape[1])
    assert w1.shape == (L, HID) and w2.shape == (HID, L)
    assert b1.shape == (HID,) and b2.shape == (L,)

    z_flat = z.reshape(B, L)                        # no wrapper-side dtype cast
    b1_2d = b1.reshape(1, HID).astype(jnp.float32)
    b2_2d = b2.reshape(1, L).astype(jnp.float32)

    # Conservative VMEM working-set estimate for the fully-fused single step:
    # inputs + in-kernel bf16 copies + f32 intermediates + output.
    est = (
        2 * B * L * z.dtype.itemsize                 # z in + out
        + L * HID * (w1.dtype.itemsize + 2)          # W1 + bf16 copy
        + HID * L * (w2.dtype.itemsize + 2)          # W2 + bf16 copy
        + B * HID * (4 + 2)                          # h f32 + h bf16
        + B * L * (4 + 2)                            # y f32 + z bf16
        + (HID + L) * 4                              # biases
    )
    if est > _VMEM_WORKING_SET_CAP:
        # TODO(synk): add a tiled two-pass path for shapes whose fused working set exceeds VMEM.
        raise ValueError(
            f"feature_selection_module: fused working set (~{est} bytes) exceeds "
            f"the VMEM budget ({_VMEM_WORKING_SET_CAP} bytes)")

    itemsize = jnp.dtype(z.dtype).itemsize
    out_flat = pl.pallas_call(
        functools.partial(_fsm_kernel, activation),
        out_shape=jax.ShapeDtypeStruct((B, L), z.dtype),
        in_specs=[pl.BlockSpec(memory_space=pltpu.MemorySpace.VMEM)] * 5,
        out_specs=pl.BlockSpec(memory_space=pltpu.MemorySpace.VMEM),
        compiler_params=pltpu.CompilerParams(vmem_limit_bytes=_VMEM_LIMIT),
        cost_estimate=pl.CostEstimate(
            flops=2 * B * L * HID + 2 * B * HID * L + B * L,
            transcendentals=B * L + L,
            bytes_accessed=(2 * B * L * itemsize
                            + L * HID * w1.dtype.itemsize
                            + HID * L * w2.dtype.itemsize
                            + (HID + L) * 4),
        ),
    )(z_flat, w1, b1_2d, w2, b2_2d)

    return out_flat.reshape(z.shape)


# ----------------------------------------------------------------------------
# Pure-JAX reference (matches the PyTorch forward with activation = sigmoid)
# ----------------------------------------------------------------------------

def _reference(z, w1, b1, w2, b2):
    B = z.shape[0]
    z_flat_1 = z.reshape(B, -1)
    h = jax.nn.relu(z_flat_1 @ w1 + b1)
    y = jax.nn.sigmoid(h @ w2 + b2)
    z_avg = jnp.mean(y, axis=0)
    m = jax.nn.softmax(z_avg, axis=0)
    return (z_flat_1 * m[None, :]).reshape(z.shape)


if __name__ == "__main__":
    # Small shapes consistent with the module: input_l = C*H*W = 4*16*16 = 1024.
    B, C, H, W = 2, 4, 16, 16
    L = C * H * W
    HID = L // 2

    key = jax.random.PRNGKey(0)
    kz, k1, k2, k3, k4 = jax.random.split(key, 5)

    z = jax.random.normal(kz, (B, C, H, W), dtype=jnp.float32)
    # nn.Linear stores fc1.weight (HID, L) and fc2.weight (L, HID); we pass the transposes.
    w1 = jax.random.normal(k1, (L, HID), dtype=jnp.float32) * 0.02
    b1 = jax.random.normal(k2, (HID,), dtype=jnp.float32) * 0.02
    w2 = jax.random.normal(k3, (HID, L), dtype=jnp.float32) * 0.02
    b2 = jax.random.normal(k4, (L,), dtype=jnp.float32) * 0.02

    out = feature_selection_module(z, w1, b1, w2, b2)
    out = jax.block_until_ready(out)

    ref = _reference(z, w1, b1, w2, b2)
    assert out.shape == z.shape
    # bf16 MXU operands with f32 accumulation -> slightly looser tolerance vs f32 reference.
    assert jnp.allclose(out, ref, atol=1e-4, rtol=2e-2), float(jnp.max(jnp.abs(out - ref)))

    print("KERNEL_OK")
</pallas_src>

<mosaic_0001>
module attributes {stable_mosaic.version = 11 : i64} {
  func.func @_fsm_kernel(%arg0: memref<2x1024xf32, #tpu.memory_space<vmem>>, %arg1: memref<1024x512xf32, #tpu.memory_space<vmem>>, %arg2: memref<1x512xf32, #tpu.memory_space<vmem>>, %arg3: memref<512x1024xf32, #tpu.memory_space<vmem>>, %arg4: memref<1x1024xf32, #tpu.memory_space<vmem>>, %arg5: memref<2x1024xf32, #tpu.memory_space<vmem>>) attributes {dimension_semantics = [], scalar_prefetch = 0 : i64, scratch_operands = 0 : i64, tpu.core_type = #tpu.core_type<tc>} {
    %c0 = arith.constant 0 : index
    %c0_0 = arith.constant 0 : index
    %0 = vector.load %arg0[%c0, %c0_0] : memref<2x1024xf32, #tpu.memory_space<vmem>>, vector<2x1024xf32>
    %1 = arith.truncf %0 : vector<2x1024xf32> to vector<2x1024xbf16>
    %c0_1 = arith.constant 0 : index
    %c0_2 = arith.constant 0 : index
    %2 = vector.load %arg1[%c0_1, %c0_2] : memref<1024x512xf32, #tpu.memory_space<vmem>>, vector<1024x512xf32>
    %3 = arith.truncf %2 : vector<1024x512xf32> to vector<1024x512xbf16>
    %cst = arith.constant dense<0.000000e+00> : vector<2x512xf32>
    %4 = tpu.matmul %1, %3, %cst {dimension_numbers = #tpu.dot_dimension_numbers<[1], [0], [0], [1], [0, 0, 1, 1], [], []>} : vector<2x1024xbf16>, vector<1024x512xbf16>, vector<2x512xf32> -> vector<2x512xf32>
    %c0_3 = arith.constant 0 : index
    %c0_4 = arith.constant 0 : index
    %5 = vector.load %arg2[%c0_3, %c0_4] : memref<1x512xf32, #tpu.memory_space<vmem>>, vector<1x512xf32>
    %6 = vector.broadcast %5 : vector<1x512xf32> to vector<2x512xf32>
    %7 = arith.addf %4, %6 : vector<2x512xf32>
    %cst_5 = arith.constant 0.000000e+00 : f32
    %8 = vector.broadcast %cst_5 : f32 to vector<2x512xf32>
    %9 = arith.maximumf %7, %8 : vector<2x512xf32>
    %10 = arith.truncf %9 : vector<2x512xf32> to vector<2x512xbf16>
    %c0_6 = arith.constant 0 : index
    %c0_7 = arith.constant 0 : index
    %11 = vector.load %arg3[%c0_6, %c0_7] : memref<512x1024xf32, #tpu.memory_space<vmem>>, vector<512x1024xf32>
    %12 = arith.truncf %11 : vector<512x1024xf32> to vector<512x1024xbf16>
    %cst_8 = arith.constant dense<0.000000e+00> : vector<2x1024xf32>
    %13 = tpu.matmul %10, %12, %cst_8 {dimension_numbers = #tpu.dot_dimension_numbers<[1], [0], [0], [1], [0, 0, 1, 1], [], []>} : vector<2x512xbf16>, vector<512x1024xbf16>, vector<2x1024xf32> -> vector<2x1024xf32>
    %c0_9 = arith.constant 0 : index
    %c0_10 = arith.constant 0 : index
    %14 = vector.load %arg4[%c0_9, %c0_10] : memref<1x1024xf32, #tpu.memory_space<vmem>>, vector<1x1024xf32>
    %15 = vector.broadcast %14 : vector<1x1024xf32> to vector<2x1024xf32>
    %16 = arith.addf %13, %15 : vector<2x1024xf32>
    %17 = arith.negf %16 : vector<2x1024xf32>
    %18 = math.exp %17 : vector<2x1024xf32>
    %cst_11 = arith.constant 1.000000e+00 : f32
    %19 = vector.broadcast %cst_11 : f32 to vector<2x1024xf32>
    %20 = arith.addf %19, %18 : vector<2x1024xf32>
    %21 = arith.divf %19, %20 : vector<2x1024xf32>
    %cst_12 = arith.constant dense<0.000000e+00> : vector<1024xf32>
    %22 = vector.multi_reduction <add>, %21, %cst_12 [0] : vector<2x1024xf32> to vector<1024xf32>
    %23 = vector.shape_cast %22 : vector<1024xf32> to vector<1x1024xf32>
    %cst_13 = arith.constant 2.000000e+00 : f32
    %24 = vector.broadcast %cst_13 : f32 to vector<1x1024xf32>
    %25 = arith.divf %23, %24 : vector<1x1024xf32>
    %cst_14 = arith.constant dense<0xFF800000> : vector<1xf32>
    %26 = vector.multi_reduction <maximumf>, %25, %cst_14 [1] : vector<1x1024xf32> to vector<1xf32>
    %27 = vector.shape_cast %26 : vector<1xf32> to vector<1x1xf32>
    %28 = vector.broadcast %27 : vector<1x1xf32> to vector<1x1024xf32>
    %29 = arith.subf %25, %28 : vector<1x1024xf32>
    %30 = math.exp %29 : vector<1x1024xf32>
    %cst_15 = arith.constant dense<0.000000e+00> : vector<1xf32>
    %31 = vector.multi_reduction <add>, %30, %cst_15 [1] : vector<1x1024xf32> to vector<1xf32>
    %32 = vector.shape_cast %31 : vector<1xf32> to vector<1x1xf32>
    %33 = tpu.reciprocal %32 : vector<1x1xf32> -> vector<1x1xf32>
    %34 = vector.broadcast %33 : vector<1x1xf32> to vector<1x1024xf32>
    %35 = arith.mulf %30, %34 : vector<1x1024xf32>
    %36 = vector.broadcast %35 : vector<1x1024xf32> to vector<2x1024xf32>
    %37 = arith.mulf %0, %36 : vector<2x1024xf32>
    %c0_16 = arith.constant 0 : index
    %c0_17 = arith.constant 0 : index
    %38 = vector.load %arg5[%c0_16, %c0_17] : memref<2x1024xf32, #tpu.memory_space<vmem>>, vector<2x1024xf32>
    tpu.vector_store %arg5[%c0_16, %c0_17], %37 {strides = array<i32>} : memref<2x1024xf32, #tpu.memory_space<vmem>>, vector<2x1024xf32>,
    return
  }
}

</mosaic_0001>

<llo_original>
// kernel: tpu_custom_call.1
$region0: #{tpu_custom_call.1}
  #allocation0 [shape = 'u32[]', space=smem, size = 0x4, offset = 0x4, fixed_abs, tag = 'smem constant byte address 0x4 - core index']
  #allocation1 [shape = 'u32[144,128]{1,0:T(1,128)}', space=vmem, size = 0x12000, scoped, tag = 'internal scratch']
  %s0 = inlined_call_operand.hbm [shape: f32[2,1024], index: 0, kind: input, shape index: {}]
  %s1 = inlined_call_operand.hbm [shape: f32[1024,512], index: 1, kind: input, shape index: {}]
  %s2 = inlined_call_operand.hbm [shape: f32[1,512], index: 2, kind: input, shape index: {}]
  %s3 = inlined_call_operand.hbm [shape: f32[512,1024], index: 3, kind: input, shape index: {}]
  %s4 = inlined_call_operand.hbm [shape: f32[1,1024], index: 4, kind: input, shape index: {}]
  %s5 = inlined_call_operand.hbm [shape: f32[2,1024], index: 5, kind: output, shape index: {}]
  %s6 = sld [smem:[#allocation0]]
  $region50: #{tpu_custom_call.1} parent=0
    _
  %s8 = ssub.s32 1, %s6
  %s9 = scalar_select 0, %s8, %s6
  $region1: #{tpu_custom_call.1} parent=0
    #allocation2 [shape = 'u8[8192]{0}', space=vmem, size = 0x2000, scoped, tag = 'input window, operand 0, single buffered']
    #allocation3 [shape = 's32[1]{0}', space=sflag, size = 0x4, scoped, tag = 'scoped memory for tpu_custom_call.1']
    #allocation4 [shape = 's32[1]{0}', space=sflag, size = 0x4, scoped, tag = 'scoped memory for tpu_custom_call.1']
    #allocation5 [shape = 'u8[2097152]{0}', space=vmem, size = 0x200000, scoped, tag = 'input window, operand 1, single buffered']
    #allocation6 [shape = 's32[1]{0}', space=sflag, size = 0x4, scoped, tag = 'scoped memory for tpu_custom_call.1']
    #allocation7 [shape = 'u8[2048]{0}', space=vmem, size = 0x800, scoped, tag = 'input window, operand 2, single buffered']
    #allocation8 [shape = 'u8[2097152]{0}', space=vmem, size = 0x200000, scoped, tag = 'input window, operand 3, single buffered']
    #allocation9 [shape = 's32[1]{0}', space=sflag, size = 0x4, scoped, tag = 'scoped memory for tpu_custom_call.1']
    #allocation10 [shape = 'u8[4096]{0}', space=vmem, size = 0x1000, scoped, tag = 'input window, operand 4, single buffered']
    #allocation11 [shape = 'u8[8192]{0}', space=vmem, size = 0x2000, scoped, tag = 'output window, operand 0, single buffered']
    %10 = vsyncpa [#allocation3], 0
    %11 = vsyncpa [#allocation6], 0
    %12 = vsyncpa [#allocation9], 0
    %13 = vsyncpa [#allocation4], 0
    // Predicated region
    $region2: #{tpu_custom_call.1} parent=1 // pred_check
      _
    $region3: #{tpu_custom_call.1} parent=1 // pred_check_branch
      %15 = sbr.rel (0) target = $region5
    $region4: #{tpu_custom_call.1} parent=1 // pred_region
      %s17 = ssub.s32 256, 256
      %18 = vsyncadd [#allocation3], %s17
      %s20 = sshll.u32 [#allocation2], 4
      %s21 = int_to_ptr.vmem [resolvable:$true] %s20
      %23 = dma.hbm_to_vmem [thread:$0]  %s0, 256, %s21, [#allocation3]
    $region5: #{tpu_custom_call.1} parent=1 // pred_fallthru
      _
    // Predicated region
    $region6: #{tpu_custom_call.1} parent=1 // pred_check
      _
    $region7: #{tpu_custom_call.1} parent=1 // pred_check_branch
      %25 = sbr.rel (0) target = $region9
    $region8: #{tpu_custom_call.1} parent=1 // pred_region
      %s27 = ssub.s32 65536, 65536
      %28 = vsyncadd [#allocation6], %s27
      %s29 = sshll.u32 [#allocation5], 4
      %s30 = int_to_ptr.vmem [resolvable:$true] %s29
      %35 = dma.hbm_to_vmem [thread:$0]  %s1, 65536, %s30, [#allocation6], 512, 512, 32
    $region9: #{tpu_custom_call.1} parent=1 // pred_fallthru
      _
    // Predicated region
    $region10: #{tpu_custom_call.1} parent=1 // pred_check
      _
    $region11: #{tpu_custom_call.1} parent=1 // pred_check_branch
      %37 = sbr.rel (0) target = $region13
    $region12: #{tpu_custom_call.1} parent=1 // pred_region
      %s39 = ssub.s32 64, 64
      %40 = vsyncadd [#allocation6], %s39
      %s42 = sshll.u32 [#allocation7], 4
      %s43 = int_to_ptr.vmem [resolvable:$true] %s42
      %45 = dma.hbm_to_vmem [thread:$0]  %s2, 64, %s43, [#allocation6]
    $region13: #{tpu_custom_call.1} parent=1 // pred_fallthru
      _
    // Predicated region
    $region14: #{tpu_custom_call.1} parent=1 // pred_check
      _
    $region15: #{tpu_custom_call.1} parent=1 // pred_check_branch
      %47 = sbr.rel (0) target = $region17
    $region16: #{tpu_custom_call.1} parent=1 // pred_region
      %s49 = ssub.s32 65536, 65536
      %50 = vsyncadd [#allocation9], %s49
      %s51 = sshll.u32 [#allocation8], 4
      %s52 = int_to_ptr.vmem [resolvable:$true] %s51
      %57 = dma.hbm_to_vmem [thread:$0]  %s3, 65536, %s52, [#allocation9], 1024, 1024, 64
    $region17: #{tpu_custom_call.1} parent=1 // pred_fallthru
      _
    // Predicated region
    $region18: #{tpu_custom_call.1} parent=1 // pred_check
      _
    $region19: #{tpu_custom_call.1} parent=1 // pred_check_branch
      %59 = sbr.rel (0) target = $region21
    $region20: #{tpu_custom_call.1} parent=1 // pred_region
      %s61 = ssub.s32 128, 128
      %62 = vsyncadd [#allocation9], %s61
      %s64 = sshll.u32 [#allocation10], 4
      %s65 = int_to_ptr.vmem [resolvable:$true] %s64
      %67 = dma.hbm_to_vmem [thread:$0]  %s4, 128, %s65, [#allocation9]
    $region21: #{tpu_custom_call.1} parent=1 // pred_fallthru
      _
    // Predicated region
    $region22: #{tpu_custom_call.1} parent=1 // pred_check
      _
    $region23: #{tpu_custom_call.1} parent=1 // pred_check_branch
      %69 = sbr.rel (0) target = $region25
    $region24: #{tpu_custom_call.1} parent=1 // pred_region
      %70 = dma.done [#allocation3], 256
    $region25: #{tpu_custom_call.1} parent=1 // pred_fallthru
      _
    // Predicated region
    $region26: #{tpu_custom_call.1} parent=1 // pred_check
      _
    $region27: #{tpu_custom_call.1} parent=1 // pred_check_branch
      %72 = sbr.rel (0) target = $region29
    $region28: #{tpu_custom_call.1} parent=1 // pred_region
      %73 = dma.done [#allocation6], 65536
    $region29: #{tpu_custom_call.1} parent=1 // pred_fallthru
      _
    // Predicated region
    $region30: #{tpu_custom_call.1} parent=1 // pred_check
      _
    $region31: #{tpu_custom_call.1} parent=1 // pred_check_branch
      %75 = sbr.rel (0) target = $region33
    $region32: #{tpu_custom_call.1} parent=1 // pred_region
      %76 = dma.done [#allocation6], 64
    $region33: #{tpu_custom_call.1} parent=1 // pred_fallthru
      _
    // Predicated region
    $region34: #{tpu_custom_call.1} parent=1 // pred_check
      _
    $region35: #{tpu_custom_call.1} parent=1 // pred_check_branch
      %78 = sbr.rel (0) target = $region37
    $region36: #{tpu_custom_call.1} parent=1 // pred_region
      %79 = dma.done [#allocation9], 65536
    $region37: #{tpu_custom_call.1} parent=1 // pred_fallthru
      _
    // Predicated region
    $region38: #{tpu_custom_call.1} parent=1 // pred_check
      _
    $region39: #{tpu_custom_call.1} parent=1 // pred_check_branch
      %81 = sbr.rel (0) target = $region41
    $region40: #{tpu_custom_call.1} parent=1 // pred_region
      %82 = dma.done [#allocation9], 128
    $region41: #{tpu_custom_call.1} parent=1 // pred_fallthru
      _
    %v83 = vld [vmem:[#allocation2] sm:$0xff]
    %v84 = vld [vmem:[#allocation2 + $0x8] sm:$0xff]
    %v87 = vcombine.high %v83, %v83
    %v89 = vunpack.c.l.s4 1983009808
    %v90 = vunpack.c.0.s8 %v89
    %v91 = vlaneseq
    %v92 = vshrl.u32 %v91, 7
    %v93 = vsub.s32 %v90, %v92
    %v94 = vrot.slane %v83, %v93
    %v96 = vunpack.c.l.s4 1983009808
    %v97 = vunpack.c.0.s8 %v96
    %v98 = vlaneseq
    %v99 = vshrl.u32 %v98, 7
    %v100 = vsub.s32 %v97, %v99
    %v101 = vrot.slane %v87, %v100
    %v102 = vcombine.high %v94, %v94
    %v103 = vcombine.high %v101, %v101
    %v104 = vcombine.high %v84, %v84
    %v106 = vunpack.c.l.s4 1983009808
    %v107 = vunpack.c.0.s8 %v106
    %v108 = vlaneseq
    %v109 = vshrl.u32 %v108, 7
    %v110 = vsub.s32 %v107, %v109
    %v111 = vrot.slane %v84, %v110
    %v113 = vunpack.c.l.s4 1983009808
    %v114 = vunpack.c.0.s8 %v113
    %v115 = vlaneseq
    %v116 = vshrl.u32 %v115, 7
    %v117 = vsub.s32 %v114, %v116
    %v118 = vrot.slane %v104, %v117
    %v119 = vcombine.high %v111, %v111
    %v120 = vcombine.high %v118, %v118
    %v129 = vpack.c.bf16 %v94, %v94
    %v130 = vpack.c.bf16 %v102, %v102
    %v131 = vpack.c.bf16 %v101, %v101
    %v132 = vpack.c.bf16 %v103, %v103
    %v133 = vpack.c.bf16 %v111, %v111
    %v134 = vpack.c.bf16 %v119, %v119
    %v135 = vpack.c.bf16 %v118, %v118
    %v136 = vpack.c.bf16 %v120, %v120
    %v137 = vld [vmem:[#allocation5] sm:$0xff]
    %v138 = vld [vmem:[#allocation5 + $0x8] sm:$0xff]
    %v139 = vld [vmem:[#allocation5 + $0x10] sm:$0xff]
    %v140 = vld [vmem:[#allocation5 + $0x18] sm:$0xff]
    %v141 = vld [vmem:[#allocation5 + $0x20] sm:$0xff]
    %v142 = vld [vmem:[#allocation5 + $0x28] sm:$0xff]
    %v143 = vld [vmem:[#allocation5 + $0x30] sm:$0xff]
    %v144 = vld [vmem:[#allocation5 + $0x38] sm:$0xff]
    %v145 = vld [vmem:[#allocation5 + $0x40] sm:$0xff]
    %v146 = vld [vmem:[#allocation5 + $0x48] sm:$0xff]
    %v147 = vld [vmem:[#allocation5 + $0x50] sm:$0xff]
    %v148 = vld [vmem:[#allocation5 + $0x58] sm:$0xff]
    %v149 = vld [vmem:[#allocation5 + $0x60] sm:$0xff]
    %v150 = vld [vmem:[#allocation5 + $0x68] sm:$0xff]
    %v151 = vld [vmem:[#allocation5 + $0x70] sm:$0xff]
    %v152 = vld [vmem:[#allocation5 + $0x78] sm:$0xff]
    %v153 = vld [vmem:[#allocation5 + $0x80] sm:$0xff]
    %v154 = vld [vmem:[#allocation5 + $0x88] sm:$0xff]
    %v155 = vld [vmem:[#allocation5 + $0x90] sm:$0xff]
    %v156 = vld [vmem:[#allocation5 + $0x98] sm:$0xff]
    %v157 = vld [vmem:[#allocation5 + $0xa0] sm:$0xff]
    %v158 = vld [vmem:[#allocation5 + $0xa8] sm:$0xff]
    %v159 = vld [vmem:[#allocation5 + $0xb0] sm:$0xff]
    %v160 = vld [vmem:[#allocation5 + $0xb8] sm:$0xff]
    %v161 = vld [vmem:[#allocation5 + $0xc0] sm:$0xff]
    %v162 = vld [vmem:[#allocation5 + $0xc8] sm:$0xff]
    %v163 = vld [vmem:[#allocation5 + $0xd0] sm:$0xff]
    %v164 = vld [vmem:[#allocation5 + $0xd8] sm:$0xff]
    %v165 = vld [vmem:[#allocation5 + $0xe0] sm:$0xff]
    %v166 = vld [vmem:[#allocation5 + $0xe8] sm:$0xff]
    %v167 = vld [vmem:[#allocation5 + $0xf0] sm:$0xff]
    %v168 = vld [vmem:[#allocation5 + $0xf8] sm:$0xff]
    %v169 = vld [vmem:[#allocation5 + $0x100] sm:$0xff]
    %v170 = vld [vmem:[#allocation5 + $0x108] sm:$0xff]
    %v171 = vld [vmem:[#allocation5 + $0x110] sm:$0xff]
    %v172 = vld [vmem:[#allocation5 + $0x118] sm:$0xff]
    %v173 = vld [vmem:[#allocation5 + $0x120] sm:$0xff]
    %v174 = vld [vmem:[#allocation5 + $0x128] sm:$0xff]
    %v175 = vld [vmem:[#allocation5 + $0x130] sm:$0xff]
    %v176 = vld [vmem:[#allocation5 + $0x138] sm:$0xff]
    %v177 = vld [vmem:[#allocation5 + $0x140] sm:$0xff]
    %v178 = vld [vmem:[#allocation5 + $0x148] sm:$0xff]
    %v179 = vld [vmem:[#allocation5 + $0x150] sm:$0xff]
    %v180 = vld [vmem:[#allocation5 + $0x158] sm:$0xff]
    %v181 = vld [vmem:[#allocation5 + $0x160] sm:$0xff]
    %v182 = vld [vmem:[#allocation5 + $0x168] sm:$0xff]
    %v183 = vld [vmem:[#allocation5 + $0x170] sm:$0xff]
    %v184 = vld [vmem:[#allocation5 + $0x178] sm:$0xff]
    %v185 = vld [vmem:[#allocation5 + $0x180] sm:$0xff]
    %v186 = vld [vmem:[#allocation5 + $0x188] sm:$0xff]
    %v187 = vld [vmem:[#allocation5 + $0x190] sm:$0xff]
    %v188 = vld [vmem:[#allocation5 + $0x198] sm:$0xff]
    %v189 = vld [vmem:[#allocation5 + $0x1a0] sm:$0xff]
    %v190 = vld [vmem:[#allocation5 + $0x1a8] sm:$0xff]
    %v191 = vld [vmem:[#allocation5 + $0x1b0] sm:$0xff]
    %v192 = vld [vmem:[#allocation5 + $0x1b8] sm:$0xff]
    %v193 = vld [vmem:[#allocation5 + $0x1c0] sm:$0xff]
    %v194 = vld [vmem:[#allocation5 + $0x1c8] sm:$0xff]
    %v195 = vld [vmem:[#allocation5 + $0x1d0] sm:$0xff]
    %v196 = vld [vmem:[#allocation5 + $0x1d8] sm:$0xff]
    %v197 = vld [vmem:[#allocation5 + $0x1e0] sm:$0xff]
    %v198 = vld [vmem:[#allocation5 + $0x1e8] sm:$0xff]
    %v199 = vld [vmem:[#allocation5 + $0x1f0] sm:$0xff]
    %v200 = vld [vmem:[#allocation5 + $0x1f8] sm:$0xff]
    %v201 = vld [vmem:[#allocation5 + $0x200] sm:$0xff]
    %v202 = vld [vmem:[#allocation5 + $0x208] sm:$0xff]
    %v203 = vld [vmem:[#allocation5 + $0x210] sm:$0xff]
    %v204 = vld [vmem:[#allocation5 + $0x218] sm:$0xff]
    %v205 = vld [vmem:[#allocation5 + $0x220] sm:$0xff]
    %v206 = vld [vmem:[#allocation5 + $0x228] sm:$0xff]
    %v207 = vld [vmem:[#allocation5 + $0x230] sm:$0xff]
    %v208 = vld [vmem:[#allocation5 + $0x238] sm:$0xff]
    %v209 = vld [vmem:[#allocation5 + $0x240] sm:$0xff]
    %v210 = vld [vmem:[#allocation5 + $0x248] sm:$0xff]
    %v211 = vld [vmem:[#allocation5 + $0x250] sm:$0xff]
    %v212 = vld [vmem:[#allocation5 + $0x258] sm:$0xff]
    %v213 = vld [vmem:[#allocation5 + $0x260] sm:$0xff]
    %v214 = vld [vmem:[#allocation5 + $0x268] sm:$0xff]
    %v215 = vld [vmem:[#allocation5 + $0x270] sm:$0xff]
    %v216 = vld [vmem:[#allocation5 + $0x278] sm:$0xff]
    %v217 = vld [vmem:[#allocation5 + $0x280] sm:$0xff]
    %v218 = vld [vmem:[#allocation5 + $0x288] sm:$0xff]
    %v219 = vld [vmem:[#allocation5 + $0x290] sm:$0xff]
    %v220 = vld [vmem:[#allocation5 + $0x298] sm:$0xff]
    %v221 = vld [vmem:[#allocation5 + $0x2a0] sm:$0xff]
    %v222 = vld [vmem:[#allocation5 + $0x2a8] sm:$0xff]
    %v223 = vld [vmem:[#allocation5 + $0x2b0] sm:$0xff]
    %v224 = vld [vmem:[#allocation5 + $0x2b8] sm:$0xff]
    %v225 = vld [vmem:[#allocation5 + $0x2c0] sm:$0xff]
    %v226 = vld [vmem:[#allocation5 + $0x2c8] sm:$0xff]
    %v227 = vld [vmem:[#allocation5 + $0x2d0] sm:$0xff]
    %v228 = vld [vmem:[#allocation5 + $0x2d8] sm:$0xff]
    %v229 = vld [vmem:[#allocation5 + $0x2e0] sm:$0xff]
    %v230 = vld [vmem:[#allocation5 + $0x2e8] sm:$0xff]
    %v231 = vld [vmem:[#allocation5 + $0x2f0] sm:$0xff]
    %v232 = vld [vmem:[#allocation5 + $0x2f8] sm:$0xff]
    %v233 = vld [vmem:[#allocation5 + $0x300] sm:$0xff]
    %v234 = vld [vmem:[#allocation5 + $0x308] sm:$0xff]
    %v235 = vld [vmem:[#allocation5 + $0x310] sm:$0xff]
    %v236 = vld [vmem:[#allocation5 + $0x318] sm:$0xff]
    %v237 = vld [vmem:[#allocation5 + $0x320] sm:$0xff]
    %v238 = vld [vmem:[#allocation5 + $0x328] sm:$0xff]
    %v239 = vld [vmem:[#allocation5 + $0x330] sm:$0xff]
    %v240 = vld [vmem:[#allocation5 + $0x338] sm:$0xff]
    %v241 = vld [vmem:[#allocation5 + $0x340] sm:$0xff]
    %v242 = vld [vmem:[#allocation5 + $0x348] sm:$0xff]
    %v243 = vld [vmem:[#allocation5 + $0x350] sm:$0xff]
    %v244 = vld [vmem:[#allocation5 + $0x358] sm:$0xff]
    %v245 = vld [vmem:[#allocation5 + $0x360] sm:$0xff]
    %v246 = vld [vmem:[#allocation5 + $0x368] sm:$0xff]
    %v247 = vld [vmem:[#allocation5 + $0x370] sm:$0xff]
    %v248 = vld [vmem:[#allocation5 + $0x378] sm:$0xff]
    %v249 = vld [vmem:[#allocation5 + $0x380] sm:$0xff]
    %v250 = vld [vmem:[#allocation5 + $0x388] sm:$0xff]
    %v251 = vld [vmem:[#allocation5 + $0x390] sm:$0xff]
    %v252 = vld [vmem:[#allocation5 + $0x398] sm:$0xff]
    %v253 = vld [vmem:[#allocation5 + $0x3a0] sm:$0xff]
    %v254 = vld [vmem:[#allocation5 + $0x3a8] sm:$0xff]
    %v255 = vld [vmem:[#allocation5 + $0x3b0] sm:$0xff]
    %v256 = vld [vmem:[#allocation5 + $0x3b8] sm:$0xff]
    %v257 = vld [vmem:[#allocation5 + $0x3c0] sm:$0xff]
    %v258 = vld [vmem:[#allocation5 + $0x3c8] sm:$0xff]
    %v259 = vld [vmem:[#allocation5 + $0x3d0] sm:$0xff]
    %v260 = vld [vmem:[#allocation5 + $0x3d8] sm:$0xff]
    %v261 = vld [vmem:[#allocation5 + $0x3e0] sm:$0xff]
    %v262 = vld [vmem:[#allocation5 + $0x3e8] sm:$0xff]
    %v263 = vld [vmem:[#allocation5 + $0x3f0] sm:$0xff]
    %v264 = vld [vmem:[#allocation5 + $0x3f8] sm:$0xff]
    %v265 = vld [vmem:[#allocation5 + $0x400] sm:$0xff]
    %v266 = vld [vmem:[#allocation5 + $0x408] sm:$0xff]
    %v267 = vld [vmem:[#allocation5 + $0x410] sm:$0xff]
    %v268 = vld [vmem:[#allocation5 + $0x418] sm:$0xff]
    %v269 = vld [vmem:[#allocation5 + $0x420] sm:$0xff]
    %v270 = vld [vmem:[#allocation5 + $0x428] sm:$0xff]
    %v271 = vld [vmem:[#allocation5 + $0x430] sm:$0xff]
    %v272 = vld [vmem:[#allocation5 + $0x438] sm:$0xff]
    %v273 = vld [vmem:[#allocation5 + $0x440] sm:$0xff]
    %v274 = vld [vmem:[#allocation5 + $0x448] sm:$0xff]
    %v275 = vld [vmem:[#allocation5 + $0x450] sm:$0xff]
    %v276 = vld [vmem:[#allocation5 + $0x458] sm:$0xff]
    %v277 = vld [vmem:[#allocation5 + $0x460] sm:$0xff]
    %v278 = vld [vmem:[#allocation5 + $0x468] sm:$0xff]
    %v279 = vld [vmem:[#allocation5 + $0x470] sm:$0xff]
    %v280 = vld [vmem:[#allocation5 + $0x478] sm:$0xff]
    %v281 = vld [vmem:[#allocation5 + $0x480] sm:$0xff]
    %v282 = vld [vmem:[#allocation5 + $0x488] sm:$0xff]
    %v283 = vld [vmem:[#allocation5 + $0x490] sm:$0xff]
    %v284 = vld [vmem:[#allocation5 + $0x498] sm:$0xff]
    %v285 = vld [vmem:[#allocation5 + $0x4a0] sm:$0xff]
    %v286 = vld [vmem:[#allocation5 + $0x4a8] sm:$0xff]
    %v287 = vld [vmem:[#allocation5 + $0x4b0] sm:$0xff]
    %v288 = vld [vmem:[#allocation5 + $0x4b8] sm:$0xff]
    %v289 = vld [vmem:[#allocation5 + $0x4c0] sm:$0xff]
    %v290 = vld [vmem:[#allocation5 + $0x4c8] sm:$0xff]
    %v291 = vld [vmem:[#allocation5 + $0x4d0] sm:$0xff]
    %v292 = vld [vmem:[#allocation5 + $0x4d8] sm:$0xff]
    %v293 = vld [vmem:[#allocation5 + $0x4e0] sm:$0xff]
    %v294 = vld [vmem:[#allocation5 + $0x4e8] sm:$0xff]
    %v295 = vld [vmem:[#allocation5 + $0x4f0] sm:$0xff]
    %v296 = vld [vmem:[#allocation5 + $0x4f8] sm:$0xff]
    %v297 = vld [vmem:[#allocation5 + $0x500] sm:$0xff]
    %v298 = vld [vmem:[#allocation5 + $0x508] sm:$0xff]
    %v299 = vld [vmem:[#allocation5 + $0x510] sm:$0xff]
    %v300 = vld [vmem:[#allocation5 + $0x518] sm:$0xff]
    %v301 = vld [vmem:[#allocation5 + $0x520] sm:$0xff]
    %v302 = vld [vmem:[#allocation5 + $0x528] sm:$0xff]
    %v303 = vld [vmem:[#allocation5 + $0x530] sm:$0xff]
    %v304 = vld [vmem:[#allocation5 + $0x538] sm:$0xff]
    %v305 = vld [vmem:[#allocation5 + $0x540] sm:$0xff]
    %v306 = vld [vmem:[#allocation5 + $0x548] sm:$0xff]
    %v307 = vld [vmem:[#allocation5 + $0x550] sm:$0xff]
    %v308 = vld [vmem:[#allocation5 + $0x558] sm:$0xff]
    %v309 = vld [vmem:[#allocation5 + $0x560] sm:$0xff]
    %v310 = vld [vmem:[#allocation5 + $0x568] sm:$0xff]
    %v311 = vld [vmem:[#allocation5 + $0x570] sm:$0xff]
    %v312 = vld [vmem:[#allocation5 + $0x578] sm:$0xff]
    %v313 = vld [vmem:[#allocation5 + $0x580] sm:$0xff]
    %v314 = vld [vmem:[#allocation5 + $0x588] sm:$0xff]
    %v315 = vld [vmem:[#allocation5 + $0x590] sm:$0xff]
    %v316 = vld [vmem:[#allocation5 + $0x598] sm:$0xff]
    %v317 = vld [vmem:[#allocation5 + $0x5a0] sm:$0xff]
    %v318 = vld [vmem:[#allocation5 + $0x5a8] sm:$0xff]
    %v319 = vld [vmem:[#allocation5 + $0x5b0] sm:$0xff]
    %v320 = vld [vmem:[#allocation5 + $0x5b8] sm:$0xff]
    %v321 = vld [vmem:[#allocation5 + $0x5c0] sm:$0xff]
    %v322 = vld [vmem:[#allocation5 + $0x5c8] sm:$0xff]
    %v323 = vld [vmem:[#allocation5 + $0x5d0] sm:$0xff]
    %v324 = vld [vmem:[#allocation5 + $0x5d8] sm:$0xff]
    %v325 = vld [vmem:[#allocation5 + $0x5e0] sm:$0xff]
    %v326 = vld [vmem:[#allocation5 + $0x5e8] sm:$0xff]
    %v327 = vld [vmem:[#allocation5 + $0x5f0] sm:$0xff]
    %v328 = vld [vmem:[#allocation5 + $0x5f8] sm:$0xff]
    %v329 = vld [vmem:[#allocation5 + $0x600] sm:$0xff]
    %v330 = vld [vmem:[#allocation5 + $0x608] sm:$0xff]
    %v331 = vld [vmem:[#allocation5 + $0x610] sm:$0xff]
    %v332 = vld [vmem:[#allocation5 + $0x618] sm:$0xff]
    %v333 = vld [vmem:[#allocation5 + $0x620] sm:$0xff]
    %v334 = vld [vmem:[#allocation5 + $0x628] sm:$0xff]
    %v335 = vld [vmem:[#allocation5 + $0x630] sm:$0xff]
    %v336 = vld [vmem:[#allocation5 + $0x638] sm:$0xff]
    %v337 = vld [vmem:[#allocation5 + $0x640] sm:$0xff]
    %v338 = vld [vmem:[#allocation5 + $0x648] sm:$0xff]
    %v339 = vld [vmem:[#allocation5 + $0x650] sm:$0xff]
    %v340 = vld [vmem:[#allocation5 + $0x658] sm:$0xff]
    %v341 = vld [vmem:[#allocation5 + $0x660] sm:$0xff]
    %v342 = vld [vmem:[#allocation5 + $0x668] sm:$0xff]
    %v343 = vld [vmem:[#allocation5 + $0x670] sm:$0xff]
    %v344 = vld [vmem:[#allocation5 + $0x678] sm:$0xff]
    %v345 = vld [vmem:[#allocation5 + $0x680] sm:$0xff]
    %v346 = vld [vmem:[#allocation5 + $0x688] sm:$0xff]
    %v347 = vld [vmem:[#allocation5 + $0x690] sm:$0xff]
    %v348 = vld [vmem:[#allocation5 + $0x698] sm:$0xff]
    %v349 = vld [vmem:[#allocation5 + $0x6a0] sm:$0xff]
    %v350 = vld [vmem:[#allocation5 + $0x6a8] sm:$0xff]
    %v351 = vld [vmem:[#allocation5 + $0x6b0] sm:$0xff]
    %v352 = vld [vmem:[#allocation5 + $0x6b8] sm:$0xff]
    %v353 = vld [vmem:[#allocation5 + $0x6c0] sm:$0xff]
    %v354 = vld [vmem:[#allocation5 + $0x6c8] sm:$0xff]
    %v355 = vld [vmem:[#allocation5 + $0x6d0] sm:$0xff]
    %v356 = vld [vmem:[#allocation5 + $0x6d8] sm:$0xff]
    %v357 = vld [vmem:[#allocation5 + $0x6e0] sm:$0xff]
    %v358 = vld [vmem:[#allocation5 + $0x6e8] sm:$0xff]
    %v359 = vld [vmem:[#allocation5 + $0x6f0] sm:$0xff]
    %v360 = vld [vmem:[#allocation5 + $0x6f8] sm:$0xff]
    %v361 = vld [vmem:[#allocation5 + $0x700] sm:$0xff]
    %v362 = vld [vmem:[#allocation5 + $0x708] sm:$0xff]
    %v363 = vld [vmem:[#allocation5 + $0x710] sm:$0xff]
    %v364 = vld [vmem:[#allocation5 + $0x718] sm:$0xff]
    %v365 = vld [vmem:[#allocation5 + $0x720] sm:$0xff]
    %v366 = vld [vmem:[#allocation5 + $0x728] sm:$0xff]
    %v367 = vld [vmem:[#allocation5 + $0x730] sm:$0xff]
    %v368 = vld [vmem:[#allocation5 + $0x738] sm:$0xff]
    %v369 = vld [vmem:[#allocation5 + $0x740] sm:$0xff]
    %v370 = vld [vmem:[#allocation5 + $0x748] sm:$0xff]
    %v371 = vld [vmem:[#allocation5 + $0x750] sm:$0xff]
    %v372 = vld [vmem:[#allocation5 + $0x758] sm:$0xff]
    %v373 = vld [vmem:[#allocation5 + $0x760] sm:$0xff]
    %v374 = vld [vmem:[#allocation5 + $0x768] sm:$0xff]
    %v375 = vld [vmem:[#allocation5 + $0x770] sm:$0xff]
    %v376 = vld [vmem:[#allocation5 + $0x778] sm:$0xff]
    %v377 = vld [vmem:[#allocation5 + $0x780] sm:$0xff]
    %v378 = vld [vmem:[#allocation5 + $0x788] sm:$0xff]
    %v379 = vld [vmem:[#allocation5 + $0x790] sm:$0xff]
    %v380 = vld [vmem:[#allocation5 + $0x798] sm:$0xff]
    %v381 = vld [vmem:[#allocation5 + $0x7a0] sm:$0xff]
    %v382 = vld [vmem:[#allocation5 + $0x7a8] sm:$0xff]
    %v383 = vld [vmem:[#allocation5 + $0x7b0] sm:$0xff]
    %v384 = vld [vmem:[#allocation5 + $0x7b8] sm:$0xff]
    %v385 = vld [vmem:[#allocation5 + $0x7c0] sm:$0xff]
    %v386 = vld [vmem:[#allocation5 + $0x7c8] sm:$0xff]
    %v387 = vld [vmem:[#allocation5 + $0x7d0] sm:$0xff]
    %v388 = vld [vmem:[#allocation5 + $0x7d8] sm:$0xff]
    %v389 = vld [vmem:[#allocation5 + $0x7e0] sm:$0xff]
    %v390 = vld [vmem:[#allocation5 + $0x7e8] sm:$0xff]
    %v391 = vld [vmem:[#allocation5 + $0x7f0] sm:$0xff]
    %v392 = vld [vmem:[#allocation5 + $0x7f8] sm:$0xff]
    %v393 = vld [vmem:[#allocation5 + $0x800] sm:$0xff]
    %v394 = vld [vmem:[#allocation5 + $0x808] sm:$0xff]
    %v395 = vld [vmem:[#allocation5 + $0x810] sm:$0xff]
    %v396 = vld [vmem:[#allocation5 + $0x818] sm:$0xff]
    %v397 = vld [vmem:[#allocation5 + $0x820] sm:$0xff]
    %v398 = vld [vmem:[#allocation5 + $0x828] sm:$0xff]
    %v399 = vld [vmem:[#allocation5 + $0x830] sm:$0xff]
    %v400 = vld [vmem:[#allocation5 + $0x838] sm:$0xff]
    %v401 = vld [vmem:[#allocation5 + $0x840] sm:$0xff]
    %v402 = vld [vmem:[#allocation5 + $0x848] sm:$0xff]
    %v403 = vld [vmem:[#allocation5 + $0x850] sm:$0xff]
    %v404 = vld [vmem:[#allocation5 + $0x858] sm:$0xff]
    %v405 = vld [vmem:[#allocation5 + $0x860] sm:$0xff]
    %v406 = vld [vmem:[#allocation5 + $0x868] sm:$0xff]
    %v407 = vld [vmem:[#allocation5 + $0x870] sm:$0xff]
    %v408 = vld [vmem:[#allocation5 + $0x878] sm:$0xff]
    %v409 = vld [vmem:[#allocation5 + $0x880] sm:$0xff]
    %v410 = vld [vmem:[#allocation5 + $0x888] sm:$0xff]
    %v411 = vld [vmem:[#allocation5 + $0x890] sm:$0xff]
    %v412 = vld [vmem:[#allocation5 + $0x898] sm:$0xff]
    %v413 = vld [vmem:[#allocation5 + $0x8a0] sm:$0xff]
    %v414 = vld [vmem:[#allocation5 + $0x8a8] sm:$0xff]
    %v415 = vld [vmem:[#allocation5 + $0x8b0] sm:$0xff]
    %v416 = vld [vmem:[#allocation5 + $0x8b8] sm:$0xff]
    %v417 = vld [vmem:[#allocation5 + $0x8c0] sm:$0xff]
    %v418 = vld [vmem:[#allocation5 + $0x8c8] sm:$0xff]
    %v419 = vld [vmem:[#allocation5 + $0x8d0] sm:$0xff]
    %v420 = vld [vmem:[#allocation5 + $0x8d8] sm:$0xff]
    %v421 = vld [vmem:[#allocation5 + $0x8e0] sm:$0xff]
    %v422 = vld [vmem:[#allocation5 + $0x8e8] sm:$0xff]
    %v423 = vld [vmem:[#allocation5 + $0x8f0] sm:$0xff]
    %v424 = vld [vmem:[#allocation5 + $0x8f8] sm:$0xff]
    %v425 = vld [vmem:[#allocation5 + $0x900] sm:$0xff]
    %v426 = vld [vmem:[#allocation5 + $0x908] sm:$0xff]
    %v427 = vld [vmem:[#allocation5 + $0x910] sm:$0xff]
    %v428 = vld [vmem:[#allocation5 + $0x918] sm:$0xff]
    %v429 = vld [vmem:[#allocation5 + $0x920] sm:$0xff]
    %v430 = vld [vmem:[#allocation5 + $0x928] sm:$0xff]
    %v431 = vld [vmem:[#allocation5 + $0x930] sm:$0xff]
    %v432 = vld [vmem:[#allocation5 + $0x938] sm:$0xff]
    %v433 = vld [vmem:[#allocation5 + $0x940] sm:$0xff]
    %v434 = vld [vmem:[#allocation5 + $0x948] sm:$0xff]
    %v435 = vld [vmem:[#allocation5 + $0x950] sm:$0xff]
    %v436 = vld [vmem:[#allocation5 + $0x958] sm:$0xff]
    %v437 = vld [vmem:[#allocation5 + $0x960] sm:$0xff]
    %v438 = vld [vmem:[#allocation5 + $0x968] sm:$0xff]
    %v439 = vld [vmem:[#allocation5 + $0x970] sm:$0xff]
    %v440 = vld [vmem:[#allocation5 + $0x978] sm:$0xff]
    %v441 = vld [vmem:[#allocation5 + $0x980] sm:$0xff]
    %v442 = vld [vmem:[#allocation5 + $0x988] sm:$0xff]
    %v443 = vld [vmem:[#allocation5 + $0x990] sm:$0xff]
    %v444 = vld [vmem:[#allocation5 + $0x998] sm:$0xff]
    %v445 = vld [vmem:[#allocation5 + $0x9a0] sm:$0xff]
    %v446 = vld [vmem:[#allocation5 + $0x9a8] sm:$0xff]
    %v447 = vld [vmem:[#allocation5 + $0x9b0] sm:$0xff]
    %v448 = vld [vmem:[#allocation5 + $0x9b8] sm:$0xff]
    %v449 = vld [vmem:[#allocation5 + $0x9c0] sm:$0xff]
    %v450 = vld [vmem:[#allocation5 + $0x9c8] sm:$0xff]
    %v451 = vld [vmem:[#allocation5 + $0x9d0] sm:$0xff]
    %v452 = vld [vmem:[#allocation5 + $0x9d8] sm:$0xff]
    %v453 = vld [vmem:[#allocation5 + $0x9e0] sm:$0xff]
    %v454 = vld [vmem:[#allocation5 + $0x9e8] sm:$0xff]
    %v455 = vld [vmem:[#allocation5 + $0x9f0] sm:$0xff]
    %v456 = vld [vmem:[#allocation5 + $0x9f8] sm:$0xff]
    %v457 = vld [vmem:[#allocation5 + $0xa00] sm:$0xff]
    %v458 = vld [vmem:[#allocation5 + $0xa08] sm:$0xff]
    %v459 = vld [vmem:[#allocation5 + $0xa10] sm:$0xff]
    %v460 = vld [vmem:[#allocation5 + $0xa18] sm:$0xff]
    %v461 = vld [vmem:[#allocation5 + $0xa20] sm:$0xff]
    %v462 = vld [vmem:[#allocation5 + $0xa28] sm:$0xff]
    %v463 = vld [vmem:[#allocation5 + $0xa30] sm:$0xff]
    %v464 = vld [vmem:[#allocation5 + $0xa38] sm:$0xff]
    %v465 = vld [vmem:[#allocation5 + $0xa40] sm:$0xff]
    %v466 = vld [vmem:[#allocation5 + $0xa48] sm:$0xff]
    %v467 = vld [vmem:[#allocation5 + $0xa50] sm:$0xff]
    %v468 = vld [vmem:[#allocation5 + $0xa58] sm:$0xff]
    %v469 = vld [vmem:[#allocation5 + $0xa60] sm:$0xff]
    %v470 = vld [vmem:[#allocation5 + $0xa68] sm:$0xff]
    %v471 = vld [vmem:[#allocation5 + $0xa70] sm:$0xff]
    %v472 = vld [vmem:[#allocation5 + $0xa78] sm:$0xff]
    %v473 = vld [vmem:[#allocation5 + $0xa80] sm:$0xff]
    %v474 = vld [vmem:[#allocation5 + $0xa88] sm:$0xff]
    %v475 = vld [vmem:[#allocation5 + $0xa90] sm:$0xff]
    %v476 = vld [vmem:[#allocation5 + $0xa98] sm:$0xff]
    %v477 = vld [vmem:[#allocation5 + $0xaa0] sm:$0xff]
    %v478 = vld [vmem:[#allocation5 + $0xaa8] sm:$0xff]
    %v479 = vld [vmem:[#allocation5 + $0xab0] sm:$0xff]
    %v480 = vld [vmem:[#allocation5 + $0xab8] sm:$0xff]
    %v481 = vld [vmem:[#allocation5 + $0xac0] sm:$0xff]
    %v482 = vld [vmem:[#allocation5 + $0xac8] sm:$0xff]
    %v483 = vld [vmem:[#allocation5 + $0xad0] sm:$0xff]
    %v484 = vld [vmem:[#allocation5 + $0xad8] sm:$0xff]
    %v485 = vld [vmem:[#allocation5 + $0xae0] sm:$0xff]
    %v486 = vld [vmem:[#allocation5 + $0xae8] sm:$0xff]
    %v487 = vld [vmem:[#allocation5 + $0xaf0] sm:$0xff]
    %v488 = vld [vmem:[#allocation5 + $0xaf8] sm:$0xff]
    %v489 = vld [vmem:[#allocation5 + $0xb00] sm:$0xff]
    %v490 = vld [vmem:[#allocation5 + $0xb08] sm:$0xff]
    %v491 = vld [vmem:[#allocation5 + $0xb10] sm:$0xff]
    %v492 = vld [vmem:[#allocation5 + $0xb18] sm:$0xff]
    %v493 = vld [vmem:[#allocation5 + $0xb20] sm:$0xff]
    %v494 = vld [vmem:[#allocation5 + $0xb28] sm:$0xff]
    %v495 = vld [vmem:[#allocation5 + $0xb30] sm:$0xff]
    %v496 = vld [vmem:[#allocation5 + $0xb38] sm:$0xff]
    %v497 = vld [vmem:[#allocation5 + $0xb40] sm:$0xff]
    %v498 = vld [vmem:[#allocation5 + $0xb48] sm:$0xff]
    %v499 = vld [vmem:[#allocation5 + $0xb50] sm:$0xff]
    %v500 = vld [vmem:[#allocation5 + $0xb58] sm:$0xff]
    %v501 = vld [vmem:[#allocation5 + $0xb60] sm:$0xff]
    %v502 = vld [vmem:[#allocation5 + $0xb68] sm:$0xff]
    %v503 = vld [vmem:[#allocation5 + $0xb70] sm:$0xff]
    %v504 = vld [vmem:[#allocation5 + $0xb78] sm:$0xff]
    %v505 = vld [vmem:[#allocation5 + $0xb80] sm:$0xff]
    %v506 = vld [vmem:[#allocation5 + $0xb88] sm:$0xff]
    %v507 = vld [vmem:[#allocation5 + $0xb90] sm:$0xff]
    %v508 = vld [vmem:[#allocation5 + $0xb98] sm:$0xff]
    %v509 = vld [vmem:[#allocation5 + $0xba0] sm:$0xff]
    %v510 = vld [vmem:[#allocation5 + $0xba8] sm:$0xff]
    %v511 = vld [vmem:[#allocation5 + $0xbb0] sm:$0xff]
    %v512 = vld [vmem:[#allocation5 + $0xbb8] sm:$0xff]
    %v513 = vld [vmem:[#allocation5 + $0xbc0] sm:$0xff]
    %v514 = vld [vmem:[#allocation5 + $0xbc8] sm:$0xff]
    %v515 = vld [vmem:[#allocation5 + $0xbd0] sm:$0xff]
    %v516 = vld [vmem:[#allocation5 + $0xbd8] sm:$0xff]
    %v517 = vld [vmem:[#allocation5 + $0xbe0] sm:$0xff]
    %v518 = vld [vmem:[#allocation5 + $0xbe8] sm:$0xff]
    %v519 = vld [vmem:[#allocation5 + $0xbf0] sm:$0xff]
    %v520 = vld [vmem:[#allocation5 + $0xbf8] sm:$0xff]
    %v521 = vld [vmem:[#allocation5 + $0xc00] sm:$0xff]
    %v522 = vld [vmem:[#allocation5 + $0xc08] sm:$0xff]
    %v523 = vld [vmem:[#allocation5 + $0xc10] sm:$0xff]
    %v524 = vld [vmem:[#allocation5 + $0xc18] sm:$0xff]
    %v525 = vld [vmem:[#allocation5 + $0xc20] sm:$0xff]
    %v526 = vld [vmem:[#allocation5 + $0xc28] sm:$0xff]
    %v527 = vld [vmem:[#allocation5 + $0xc30] sm:$0xff]
    %v528 = vld [vmem:[#allocation5 + $0xc38] sm:$0xff]
    %v529 = vld [vmem:[#allocation5 + $0xc40] sm:$0xff]
    %v530 = vld [vmem:[#allocation5 + $0xc48] sm:$0xff]
    %v531 = vld [vmem:[#allocation5 + $0xc50] sm:$0xff]
    %v532 = vld [vmem:[#allocation5 + $0xc58] sm:$0xff]
    %v533 = vld [vmem:[#allocation5 + $0xc60] sm:$0xff]
    %v534 = vld [vmem:[#allocation5 + $0xc68] sm:$0xff]
    %v535 = vld [vmem:[#allocation5 + $0xc70] sm:$0xff]
    %v536 = vld [vmem:[#allocation5 + $0xc78] sm:$0xff]
    %v537 = vld [vmem:[#allocation5 + $0xc80] sm:$0xff]
    %v538 = vld [vmem:[#allocation5 + $0xc88] sm:$0xff]
    %v539 = vld [vmem:[#allocation5 + $0xc90] sm:$0xff]
    %v540 = vld [vmem:[#allocation5 + $0xc98] sm:$0xff]
    %v541 = vld [vmem:[#allocation5 + $0xca0] sm:$0xff]
    %v542 = vld [vmem:[#allocation5 + $0xca8] sm:$0xff]
    %v543 = vld [vmem:[#allocation5 + $0xcb0] sm:$0xff]
    %v544 = vld [vmem:[#allocation5 + $0xcb8] sm:$0xff]
    %v545 = vld [vmem:[#allocation5 + $0xcc0] sm:$0xff]
    %v546 = vld [vmem:[#allocation5 + $0xcc8] sm:$0xff]
    %v547 = vld [vmem:[#allocation5 + $0xcd0] sm:$0xff]
    %v548 = vld [vmem:[#allocation5 + $0xcd8] sm:$0xff]
    %v549 = vld [vmem:[#allocation5 + $0xce0] sm:$0xff]
    %v550 = vld [vmem:[#allocation5 + $0xce8] sm:$0xff]
    %v551 = vld [vmem:[#allocation5 + $0xcf0] sm:$0xff]
    %v552 = vld [vmem:[#allocation5 + $0xcf8] sm:$0xff]
    %v553 = vld [vmem:[#allocation5 + $0xd00] sm:$0xff]
    %v554 = vld [vmem:[#allocation5 + $0xd08] sm:$0xff]
    %v555 = vld [vmem:[#allocation5 + $0xd10] sm:$0xff]
    %v556 = vld [vmem:[#allocation5 + $0xd18] sm:$0xff]
    %v557 = vld [vmem:[#allocation5 + $0xd20] sm:$0xff]
    %v558 = vld [vmem:[#allocation5 + $0xd28] sm:$0xff]
    %v559 = vld [vmem:[#allocation5 + $0xd30] sm:$0xff]
    %v560 = vld [vmem:[#allocation5 + $0xd38] sm:$0xff]
    %v561 = vld [vmem:[#allocation5 + $0xd40] sm:$0xff]
    %v562 = vld [vmem:[#allocation5 + $0xd48] sm:$0xff]
    %v563 = vld [vmem:[#allocation5 + $0xd50] sm:$0xff]
    %v564 = vld [vmem:[#allocation5 + $0xd58] sm:$0xff]
    %v565 = vld [vmem:[#allocation5 + $0xd60] sm:$0xff]
    %v566 = vld [vmem:[#allocation5 + $0xd68] sm:$0xff]
    %v567 = vld [vmem:[#allocation5 + $0xd70] sm:$0xff]
    %v568 = vld [vmem:[#allocation5 + $0xd78] sm:$0xff]
    %v569 = vld [vmem:[#allocation5 + $0xd80] sm:$0xff]
    %v570 = vld [vmem:[#allocation5 + $0xd88] sm:$0xff]
    %v571 = vld [vmem:[#allocation5 + $0xd90] sm:$0xff]
    %v572 = vld [vmem:[#allocation5 + $0xd98] sm:$0xff]
    %v573 = vld [vmem:[#allocation5 + $0xda0] sm:$0xff]
    %v574 = vld [vmem:[#allocation5 + $0xda8] sm:$0xff]
    %v575 = vld [vmem:[#allocation5 + $0xdb0] sm:$0xff]
    %v576 = vld [vmem:[#allocation5 + $0xdb8] sm:$0xff]
    %v577 = vld [vmem:[#allocation5 + $0xdc0] sm:$0xff]
    %v578 = vld [vmem:[#allocation5 + $0xdc8] sm:$0xff]
    %v579 = vld [vmem:[#allocation5 + $0xdd0] sm:$0xff]
    %v580 = vld [vmem:[#allocation5 + $0xdd8] sm:$0xff]
    %v581 = vld [vmem:[#allocation5 + $0xde0] sm:$0xff]
    %v582 = vld [vmem:[#allocation5 + $0xde8] sm:$0xff]
    %v583 = vld [vmem:[#allocation5 + $0xdf0] sm:$0xff]
    %v584 = vld [vmem:[#allocation5 + $0xdf8] sm:$0xff]
    %v585 = vld [vmem:[#allocation5 + $0xe00] sm:$0xff]
    %v586 = vld [vmem:[#allocation5 + $0xe08] sm:$0xff]
    %v587 = vld [vmem:[#allocation5 + $0xe10] sm:$0xff]
    %v588 = vld [vmem:[#allocation5 + $0xe18] sm:$0xff]
    %v589 = vld [vmem:[#allocation5 + $0xe20] sm:$0xff]
    %v590 = vld [vmem:[#allocation5 + $0xe28] sm:$0xff]
    %v591 = vld [vmem:[#allocation5 + $0xe30] sm:$0xff]
    %v592 = vld [vmem:[#allocation5 + $0xe38] sm:$0xff]
    %v593 = vld [vmem:[#allocation5 + $0xe40] sm:$0xff]
    %v594 = vld [vmem:[#allocation5 + $0xe48] sm:$0xff]
    %v595 = vld [vmem:[#allocation5 + $0xe50] sm:$0xff]
    %v596 = vld [vmem:[#allocation5 + $0xe58] sm:$0xff]
    %v597 = vld [vmem:[#allocation5 + $0xe60] sm:$0xff]
    %v598 = vld [vmem:[#allocation5 + $0xe68] sm:$0xff]
    %v599 = vld [vmem:[#allocation5 + $0xe70] sm:$0xff]
    %v600 = vld [vmem:[#allocation5 + $0xe78] sm:$0xff]
    %v601 = vld [vmem:[#allocation5 + $0xe80] sm:$0xff]
    %v602 = vld [vmem:[#allocation5 + $0xe88] sm:$0xff]
    %v603 = vld [vmem:[#allocation5 + $0xe90] sm:$0xff]
    %v604 = vld [vmem:[#allocation5 + $0xe98] sm:$0xff]
    %v605 = vld [vmem:[#allocation5 + $0xea0] sm:$0xff]
    %v606 = vld [vmem:[#allocation5 + $0xea8] sm:$0xff]
    %v607 = vld [vmem:[#allocation5 + $0xeb0] sm:$0xff]
    %v608 = vld [vmem:[#allocation5 + $0xeb8] sm:$0xff]
    %v609 = vld [vmem:[#allocation5 + $0xec0] sm:$0xff]
    %v610 = vld [vmem:[#allocation5 + $0xec8] sm:$0xff]
    %v611 = vld [vmem:[#allocation5 + $0xed0] sm:$0xff]
    %v612 = vld [vmem:[#allocation5 + $0xed8] sm:$0xff]
    %v613 = vld [vmem:[#allocation5 + $0xee0] sm:$0xff]
    %v614 = vld [vmem:[#allocation5 + $0xee8] sm:$0xff]
    %v615 = vld [vmem:[#allocation5 + $0xef0] sm:$0xff]
    %v616 = vld [vmem:[#allocation5 + $0xef8] sm:$0xff]
    %v617 = vld [vmem:[#allocation5 + $0xf00] sm:$0xff]
    %v618 = vld [vmem:[#allocation5 + $0xf08] sm:$0xff]
    %v619 = vld [vmem:[#allocation5 + $0xf10] sm:$0xff]
    %v620 = vld [vmem:[#allocation5 + $0xf18] sm:$0xff]
    %v621 = vld [vmem:[#allocation5 + $0xf20] sm:$0xff]
    %v622 = vld [vmem:[#allocation5 + $0xf28] sm:$0xff]
    %v623 = vld [vmem:[#allocation5 + $0xf30] sm:$0xff]
    %v624 = vld [vmem:[#allocation5 + $0xf38] sm:$0xff]
    %v625 = vld [vmem:[#allocation5 + $0xf40] sm:$0xff]
    %v626 = vld [vmem:[#allocation5 + $0xf48] sm:$0xff]
    %v627 = vld [vmem:[#allocation5 + $0xf50] sm:$0xff]
    %v628 = vld [vmem:[#allocation5 + $0xf58] sm:$0xff]
    %v629 = vld [vmem:[#allocation5 + $0xf60] sm:$0xff]
    %v630 = vld [vmem:[#allocation5 + $0xf68] sm:$0xff]
    %v631 = vld [vmem:[#allocation5 + $0xf70] sm:$0xff]
    %v632 = vld [vmem:[#allocation5 + $0xf78] sm:$0xff]
    %v633 = vld [vmem:[#allocation5 + $0xf80] sm:$0xff]
    %v634 = vld [vmem:[#allocation5 + $0xf88] sm:$0xff]
    %v635 = vld [vmem:[#allocation5 + $0xf90] sm:$0xff]
    %v636 = vld [vmem:[#allocation5 + $0xf98] sm:$0xff]
    %v637 = vld [vmem:[#allocation5 + $0xfa0] sm:$0xff]
    %v638 = vld [vmem:[#allocation5 + $0xfa8] sm:$0xff]
    %v639 = vld [vmem:[#allocation5 + $0xfb0] sm:$0xff]
    %v640 = vld [vmem:[#allocation5 + $0xfb8] sm:$0xff]
    %v641 = vld [vmem:[#allocation5 + $0xfc0] sm:$0xff]
    %v642 = vld [vmem:[#allocation5 + $0xfc8] sm:$0xff]
    %v643 = vld [vmem:[#allocation5 + $0xfd0] sm:$0xff]
    %v644 = vld [vmem:[#allocation5 + $0xfd8] sm:$0xff]
    %v645 = vld [vmem:[#allocation5 + $0xfe0] sm:$0xff]
    %v646 = vld [vmem:[#allocation5 + $0xfe8] sm:$0xff]
    %v647 = vld [vmem:[#allocation5 + $0xff0] sm:$0xff]
    %v648 = vld [vmem:[#allocation5 + $0xff8] sm:$0xff]
    %v649 = vpack.c.bf16 %v141, %v137
    %v650 = vpack.c.bf16 %v142, %v138
    %v651 = vpack.c.bf16 %v143, %v139
    %v652 = vpack.c.bf16 %v144, %v140
    %v653 = vpack.c.bf16 %v149, %v145
    %v654 = vpack.c.bf16 %v150, %v146
    %v655 = vpack.c.bf16 %v151, %v147
    %v656 = vpack.c.bf16 %v152, %v148
    %v657 = vpack.c.bf16 %v157, %v153
    %v658 = vpack.c.bf16 %v158, %v154
    %v659 = vpack.c.bf16 %v159, %v155
    %v660 = vpack.c.bf16 %v160, %v156
    %v661 = vpack.c.bf16 %v165, %v161
    %v662 = vpack.c.bf16 %v166, %v162
    %v663 = vpack.c.bf16 %v167, %v163
    %v664 = vpack.c.bf16 %v168, %v164
    %v665 = vpack.c.bf16 %v173, %v169
    %v666 = vpack.c.bf16 %v174, %v170
    %v667 = vpack.c.bf16 %v175, %v171
    %v668 = vpack.c.bf16 %v176, %v172
    %v669 = vpack.c.bf16 %v181, %v177
    %v670 = vpack.c.bf16 %v182, %v178
    %v671 = vpack.c.bf16 %v183, %v179
    %v672 = vpack.c.bf16 %v184, %v180
    %v673 = vpack.c.bf16 %v189, %v185
    %v674 = vpack.c.bf16 %v190, %v186
    %v675 = vpack.c.bf16 %v191, %v187
    %v676 = vpack.c.bf16 %v192, %v188
    %v677 = vpack.c.bf16 %v197, %v193
    %v678 = vpack.c.bf16 %v198, %v194
    %v679 = vpack.c.bf16 %v199, %v195
    %v680 = vpack.c.bf16 %v200, %v196
    %v681 = vpack.c.bf16 %v205, %v201
    %v682 = vpack.c.bf16 %v206, %v202
    %v683 = vpack.c.bf16 %v207, %v203
    %v684 = vpack.c.bf16 %v208, %v204
    %v685 = vpack.c.bf16 %v213, %v209
    %v686 = vpack.c.bf16 %v214, %v210
    %v687 = vpack.c.bf16 %v215, %v211
    %v688 = vpack.c.bf16 %v216, %v212
    %v689 = vpack.c.bf16 %v221, %v217
    %v690 = vpack.c.bf16 %v222, %v218
    %v691 = vpack.c.bf16 %v223, %v219
    %v692 = vpack.c.bf16 %v224, %v220
    %v693 = vpack.c.bf16 %v229, %v225
    %v694 = vpack.c.bf16 %v230, %v226
    %v695 = vpack.c.bf16 %v231, %v227
    %v696 = vpack.c.bf16 %v232, %v228
    %v697 = vpack.c.bf16 %v237, %v233
    %v698 = vpack.c.bf16 %v238, %v234
    %v699 = vpack.c.bf16 %v239, %v235
    %v700 = vpack.c.bf16 %v240, %v236
    %v701 = vpack.c.bf16 %v245, %v241
    %v702 = vpack.c.bf16 %v246, %v242
    %v703 = vpack.c.bf16 %v247, %v243
    %v704 = vpack.c.bf16 %v248, %v244
    %v705 = vpack.c.bf16 %v253, %v249
    %v706 = vpack.c.bf16 %v254, %v250
    %v707 = vpack.c.bf16 %v255, %v251
    %v708 = vpack.c.bf16 %v256, %v252
    %v709 = vpack.c.bf16 %v261, %v257
    %v710 = vpack.c.bf16 %v262, %v258
    %v711 = vpack.c.bf16 %v263, %v259
    %v712 = vpack.c.bf16 %v264, %v260
    %v713 = vpack.c.bf16 %v269, %v265
    %v714 = vpack.c.bf16 %v270, %v266
    %v715 = vpack.c.bf16 %v271, %v267
    %v716 = vpack.c.bf16 %v272, %v268
    %v717 = vpack.c.bf16 %v277, %v273
    %v718 = vpack.c.bf16 %v278, %v274
    %v719 = vpack.c.bf16 %v279, %v275
    %v720 = vpack.c.bf16 %v280, %v276
    %v721 = vpack.c.bf16 %v285, %v281
    %v722 = vpack.c.bf16 %v286, %v282
    %v723 = vpack.c.bf16 %v287, %v283
    %v724 = vpack.c.bf16 %v288, %v284
    %v725 = vpack.c.bf16 %v293, %v289
    %v726 = vpack.c.bf16 %v294, %v290
    %v727 = vpack.c.bf16 %v295, %v291
    %v728 = vpack.c.bf16 %v296, %v292
    %v729 = vpack.c.bf16 %v301, %v297
    %v730 = vpack.c.bf16 %v302, %v298
    %v731 = vpack.c.bf16 %v303, %v299
    %v732 = vpack.c.bf16 %v304, %v300
    %v733 = vpack.c.bf16 %v309, %v305
    %v734 = vpack.c.bf16 %v310, %v306
    %v735 = vpack.c.bf16 %v311, %v307
    %v736 = vpack.c.bf16 %v312, %v308
    %v737 = vpack.c.bf16 %v317, %v313
    %v738 = vpack.c.bf16 %v318, %v314
    %v739 = vpack.c.bf16 %v319, %v315
    %v740 = vpack.c.bf16 %v320, %v316
    %v741 = vpack.c.bf16 %v325, %v321
    %v742 = vpack.c.bf16 %v326, %v322
    %v743 = vpack.c.bf16 %v327, %v323
    %v744 = vpack.c.bf16 %v328, %v324
    %v745 = vpack.c.bf16 %v333, %v329
    %v746 = vpack.c.bf16 %v334, %v330
    %v747 = vpack.c.bf16 %v335, %v331
    %v748 = vpack.c.bf16 %v336, %v332
    %v749 = vpack.c.bf16 %v341, %v337
    %v750 = vpack.c.bf16 %v342, %v338
    %v751 = vpack.c.bf16 %v343, %v339
    %v752 = vpack.c.bf16 %v344, %v340
    %v753 = vpack.c.bf16 %v349, %v345
    %v754 = vpack.c.bf16 %v350, %v346
    %v755 = vpack.c.bf16 %v351, %v347
    %v756 = vpack.c.bf16 %v352, %v348
    %v757 = vpack.c.bf16 %v357, %v353
    %v758 = vpack.c.bf16 %v358, %v354
    %v759 = vpack.c.bf16 %v359, %v355
    %v760 = vpack.c.bf16 %v360, %v356
    %v761 = vpack.c.bf16 %v365, %v361
    %v762 = vpack.c.bf16 %v366, %v362
    %v763 = vpack.c.bf16 %v367, %v363
    %v764 = vpack.c.bf16 %v368, %v364
    %v765 = vpack.c.bf16 %v373, %v369
    %v766 = vpack.c.bf16 %v374, %v370
    %v767 = vpack.c.bf16 %v375, %v371
    %v768 = vpack.c.bf16 %v376, %v372
    %v769 = vpack.c.bf16 %v381, %v377
    %v770 = vpack.c.bf16 %v382, %v378
    %v771 = vpack.c.bf16 %v383, %v379
    %v772 = vpack.c.bf16 %v384, %v380
    %v773 = vpack.c.bf16 %v389, %v385
    %v774 = vpack.c.bf16 %v390, %v386
    %v775 = vpack.c.bf16 %v391, %v387
    %v776 = vpack.c.bf16 %v392, %v388
    %v777 = vpack.c.bf16 %v397, %v393
    %v778 = vpack.c.bf16 %v398, %v394
    %v779 = vpack.c.bf16 %v399, %v395
    %v780 = vpack.c.bf16 %v400, %v396
    %v781 = vpack.c.bf16 %v405, %v401
    %v782 = vpack.c.bf16 %v406, %v402
    %v783 = vpack.c.bf16 %v407, %v403
    %v784 = vpack.c.bf16 %v408, %v404
    %v785 = vpack.c.bf16 %v413, %v409
    %v786 = vpack.c.bf16 %v414, %v410
    %v787 = vpack.c.bf16 %v415, %v411
    %v788 = vpack.c.bf16 %v416, %v412
    %v789 = vpack.c.bf16 %v421, %v417
    %v790 = vpack.c.bf16 %v422, %v418
    %v791 = vpack.c.bf16 %v423, %v419
    %v792 = vpack.c.bf16 %v424, %v420
    %v793 = vpack.c.bf16 %v429, %v425
    %v794 = vpack.c.bf16 %v430, %v426
    %v795 = vpack.c.bf16 %v431, %v427
    %v796 = vpack.c.bf16 %v432, %v428
    %v797 = vpack.c.bf16 %v437, %v433
    %v798 = vpack.c.bf16 %v438, %v434
    %v799 = vpack.c.bf16 %v439, %v435
    %v800 = vpack.c.bf16 %v440, %v436
    %v801 = vpack.c.bf16 %v445, %v441
    %v802 = vpack.c.bf16 %v446, %v442
    %v803 = vpack.c.bf16 %v447, %v443
    %v804 = vpack.c.bf16 %v448, %v444
    %v805 = vpack.c.bf16 %v453, %v449
    %v806 = vpack.c.bf16 %v454, %v450
    %v807 = vpack.c.bf16 %v455, %v451
    %v808 = vpack.c.bf16 %v456, %v452
    %v809 = vpack.c.bf16 %v461, %v457
    %v810 = vpack.c.bf16 %v462, %v458
    %v811 = vpack.c.bf16 %v463, %v459
    %v812 = vpack.c.bf16 %v464, %v460
    %v813 = vpack.c.bf16 %v469, %v465
    %v814 = vpack.c.bf16 %v470, %v466
    %v815 = vpack.c.bf16 %v471, %v467
    %v816 = vpack.c.bf16 %v472, %v468
    %v817 = vpack.c.bf16 %v477, %v473
    %v818 = vpack.c.bf16 %v478, %v474
    %v819 = vpack.c.bf16 %v479, %v475
    %v820 = vpack.c.bf16 %v480, %v476
    %v821 = vpack.c.bf16 %v485, %v481
    %v822 = vpack.c.bf16 %v486, %v482
    %v823 = vpack.c.bf16 %v487, %v483
    %v824 = vpack.c.bf16 %v488, %v484
    %v825 = vpack.c.bf16 %v493, %v489
    %v826 = vpack.c.bf16 %v494, %v490
    %v827 = vpack.c.bf16 %v495, %v491
    %v828 = vpack.c.bf16 %v496, %v492
    %v829 = vpack.c.bf16 %v501, %v497
    %v830 = vpack.c.bf16 %v502, %v498
    %v831 = vpack.c.bf16 %v503, %v499
    %v832 = vpack.c.bf16 %v504, %v500
    %v833 = vpack.c.bf16 %v509, %v505
    %v834 = vpack.c.bf16 %v510, %v506
    %v835 = vpack.c.bf16 %v511, %v507
    %v836 = vpack.c.bf16 %v512, %v508
    %v837 = vpack.c.bf16 %v517, %v513
    %v838 = vpack.c.bf16 %v518, %v514
    %v839 = vpack.c.bf16 %v519, %v515
    %v840 = vpack.c.bf16 %v520, %v516
    %v841 = vpack.c.bf16 %v525, %v521
    %v842 = vpack.c.bf16 %v526, %v522
    %v843 = vpack.c.bf16 %v527, %v523
    %v844 = vpack.c.bf16 %v528, %v524
    %v845 = vpack.c.bf16 %v533, %v529
    %v846 = vpack.c.bf16 %v534, %v530
    %v847 = vpack.c.bf16 %v535, %v531
    %v848 = vpack.c.bf16 %v536, %v532
    %v849 = vpack.c.bf16 %v541, %v537
    %v850 = vpack.c.bf16 %v542, %v538
    %v851 = vpack.c.bf16 %v543, %v539
    %v852 = vpack.c.bf16 %v544, %v540
    %v853 = vpack.c.bf16 %v549, %v545
    %v854 = vpack.c.bf16 %v550, %v546
    %v855 = vpack.c.bf16 %v551, %v547
    %v856 = vpack.c.bf16 %v552, %v548
    %v857 = vpack.c.bf16 %v557, %v553
    %v858 = vpack.c.bf16 %v558, %v554
    %v859 = vpack.c.bf16 %v559, %v555
    %v860 = vpack.c.bf16 %v560, %v556
    %v861 = vpack.c.bf16 %v565, %v561
    %v862 = vpack.c.bf16 %v566, %v562
    %v863 = vpack.c.bf16 %v567, %v563
    %v864 = vpack.c.bf16 %v568, %v564
    %v865 = vpack.c.bf16 %v573, %v569
    %v866 = vpack.c.bf16 %v574, %v570
    %v867 = vpack.c.bf16 %v575, %v571
    %v868 = vpack.c.bf16 %v576, %v572
    %v869 = vpack.c.bf16 %v581, %v577
    %v870 = vpack.c.bf16 %v582, %v578
    %v871 = vpack.c.bf16 %v583, %v579
    %v872 = vpack.c.bf16 %v584, %v580
    %v873 = vpack.c.bf16 %v589, %v585
    %v874 = vpack.c.bf16 %v590, %v586
    %v875 = vpack.c.bf16 %v591, %v587
    %v876 = vpack.c.bf16 %v592, %v588
    %v877 = vpack.c.bf16 %v597, %v593
    %v878 = vpack.c.bf16 %v598, %v594
    %v879 = vpack.c.bf16 %v599, %v595
    %v880 = vpack.c.bf16 %v600, %v596
    %v881 = vpack.c.bf16 %v605, %v601
    %v882 = vpack.c.bf16 %v606, %v602
    %v883 = vpack.c.bf16 %v607, %v603
    %v884 = vpack.c.bf16 %v608, %v604
    %v885 = vpack.c.bf16 %v613, %v609
    %v886 = vpack.c.bf16 %v614, %v610
    %v887 = vpack.c.bf16 %v615, %v611
    %v888 = vpack.c.bf16 %v616, %v612
    %v889 = vpack.c.bf16 %v621, %v617
    %v890 = vpack.c.bf16 %v622, %v618
    %v891 = vpack.c.bf16 %v623, %v619
    %v892 = vpack.c.bf16 %v624, %v620
    %v893 = vpack.c.bf16 %v629, %v625
    %v894 = vpack.c.bf16 %v630, %v626
    %v895 = vpack.c.bf16 %v631, %v627
    %v896 = vpack.c.bf16 %v632, %v628
    %v897 = vpack.c.bf16 %v637, %v633
    %v898 = vpack.c.bf16 %v638, %v634
    %v899 = vpack.c.bf16 %v639, %v635
    %v900 = vpack.c.bf16 %v640, %v636
    %v901 = vpack.c.bf16 %v645, %v641
    %v902 = vpack.c.bf16 %v646, %v642
    %v903 = vpack.c.bf16 %v647, %v643
    %v904 = vpack.c.bf16 %v648, %v644
    %v905 = vld [vmem:[#allocation7] sm:$0xf]
    %v907 = vlaneseq
    %v908 = vshrl.u32 %v907, 7
    %v909 = vsub.s32 0, %v908
    %v910 = vrot.slane %v905, %v909
    %v911 = vlaneseq
    %v912 = vshrl.u32 %v911, 7
    %v913 = vsub.s32 1, %v912
    %v914 = vrot.slane %v905, %v913
    %v915 = vlaneseq
    %v916 = vshrl.u32 %v915, 7
    %v917 = vsub.s32 2, %v916
    %v918 = vrot.slane %v905, %v917
    %v919 = vlaneseq
    %v920 = vshrl.u32 %v919, 7
    %v921 = vsub.s32 3, %v920
    %v922 = vrot.slane %v905, %v921
    %927 = vmatprep.subr.bf16.mxu0 %v650
    %928 = vmatpush1.bf16.msra.mxu0 %v649
    %929 = vmatprep.subr.bf16.mxu0 %v654
    %930 = vmatpush1.bf16.msra.mxu0 %v653
    %931 = vmatprep.subr.bf16.mxu0 %v658
    %932 = vmatpush1.bf16.msra.mxu0 %v657
    %933 = vmatprep.subr.bf16.mxu0 %v662
    %934 = vmatpush1.bf16.msra.mxu0 %v661
    %935 = vmatprep.subr.bf16.mxu0 %v666
    %936 = vmatpush1.bf16.msra.mxu0 %v665
    %937 = vmatprep.subr.bf16.mxu0 %v670
    %938 = vmatpush1.bf16.msra.mxu0 %v669
    %939 = vmatprep.subr.bf16.mxu0 %v674
    %940 = vmatpush1.bf16.msra.mxu0 %v673
    %941 = vmatprep.subr.bf16.mxu0 %v678
    %942 = vmatpush1.bf16.msra.mxu0 %v677
    %943 = vmatprep.subr.bf16.mxu0 %v682
    %944 = vmatpush1.bf16.msra.mxu0 %v681
    %945 = vmatprep.subr.bf16.mxu0 %v686
    %946 = vmatpush1.bf16.msra.mxu0 %v685
    %947 = vmatprep.subr.bf16.mxu0 %v690
    %948 = vmatpush1.bf16.msra.mxu0 %v689
    %949 = vmatprep.subr.bf16.mxu0 %v694
    %950 = vmatpush1.bf16.msra.mxu0 %v693
    %951 = vmatprep.subr.bf16.mxu0 %v698
    %952 = vmatpush1.bf16.msra.mxu0 %v697
    %953 = vmatprep.subr.bf16.mxu0 %v702
    %954 = vmatpush1.bf16.msra.mxu0 %v701
    %955 = vmatprep.subr.bf16.mxu0 %v706
    %956 = vmatpush1.bf16.msra.mxu0 %v705
    %957 = vmatprep.subr.bf16.mxu0 %v710
    %958 = vmatpush1.bf16.msra.mxu0 %v709
    %959 = vmatprep.mubr.bf16.mxu0 %v130
    %960 = vmatmul.mubr.bf16.gmra.mrb[0].mxu0 %v129
    %v961 = vpop.f32.mrb[0].mxu0
    %v962 = vadd.f32 %v910, %v961
    %v963 = vpop.f32.mrb[0].mxu0
    %v964 = vadd.f32 %v914, %v963
    %v965 = vpop.f32.mrb[0].mxu0
    %v966 = vpop.f32.mrb[0].mxu0
    %967 = vdwg.mxu0
    %968 = vmatprep.subr.bf16.mxu0 %v714
    %969 = vmatpush1.bf16.msra.mxu0 %v713
    %970 = vmatprep.subr.bf16.mxu0 %v718
    %971 = vmatpush1.bf16.msra.mxu0 %v717
    %972 = vmatprep.subr.bf16.mxu0 %v722
    %973 = vmatpush1.bf16.msra.mxu0 %v721
    %974 = vmatprep.subr.bf16.mxu0 %v726
    %975 = vmatpush1.bf16.msra.mxu0 %v725
    %976 = vmatprep.subr.bf16.mxu0 %v730
    %977 = vmatpush1.bf16.msra.mxu0 %v729
    %978 = vmatprep.subr.bf16.mxu0 %v734
    %979 = vmatpush1.bf16.msra.mxu0 %v733
    %980 = vmatprep.subr.bf16.mxu0 %v738
    %981 = vmatpush1.bf16.msra.mxu0 %v737
    %982 = vmatprep.subr.bf16.mxu0 %v742
    %983 = vmatpush1.bf16.msra.mxu0 %v741
    %984 = vmatprep.subr.bf16.mxu0 %v746
    %985 = vmatpush1.bf16.msra.mxu0 %v745
    %986 = vmatprep.subr.bf16.mxu0 %v750
    %987 = vmatpush1.bf16.msra.mxu0 %v749
    %988 = vmatprep.subr.bf16.mxu0 %v754
    %989 = vmatpush1.bf16.msra.mxu0 %v753
    %990 = vmatprep.subr.bf16.mxu0 %v758
    %991 = vmatpush1.bf16.msra.mxu0 %v757
    %992 = vmatprep.subr.bf16.mxu0 %v762
    %993 = vmatpush1.bf16.msra.mxu0 %v761
    %994 = vmatprep.subr.bf16.mxu0 %v766
    %995 = vmatpush1.bf16.msra.mxu0 %v765
    %996 = vmatprep.subr.bf16.mxu0 %v770
    %997 = vmatpush1.bf16.msra.mxu0 %v769
    %998 = vmatprep.subr.bf16.mxu0 %v774
    %999 = vmatpush1.bf16.msra.mxu0 %v773
    %1000 = vmatprep.mubr.bf16.mxu0 %v132
    %1001 = vmatmul.mubr.bf16.gmra.mrb[0].mxu0 %v131
    %v1002 = vpop.f32.mrb[0].mxu0
    %v1003 = vadd.f32 %v962, %v1002
    %v1004 = vpop.f32.mrb[0].mxu0
    %v1005 = vadd.f32 %v964, %v1004
    %v1006 = vpop.f32.mrb[0].mxu0
    %v1007 = vpop.f32.mrb[0].mxu0
    %1008 = vdwg.mxu0
    %1009 = vmatprep.subr.bf16.mxu0 %v778
    %1010 = vmatpush1.bf16.msra.mxu0 %v777
    %1011 = vmatprep.subr.bf16.mxu0 %v782
    %1012 = vmatpush1.bf16.msra.mxu0 %v781
    %1013 = vmatprep.subr.bf16.mxu0 %v786
    %1014 = vmatpush1.bf16.msra.mxu0 %v785
    %1015 = vmatprep.subr.bf16.mxu0 %v790
    %1016 = vmatpush1.bf16.msra.mxu0 %v789
    %1017 = vmatprep.subr.bf16.mxu0 %v794
    %1018 = vmatpush1.bf16.msra.mxu0 %v793
    %1019 = vmatprep.subr.bf16.mxu0 %v798
    %1020 = vmatpush1.bf16.msra.mxu0 %v797
    %1021 = vmatprep.subr.bf16.mxu0 %v802
    %1022 = vmatpush1.bf16.msra.mxu0 %v801
    %1023 = vmatprep.subr.bf16.mxu0 %v806
    %1024 = vmatpush1.bf16.msra.mxu0 %v805
    %1025 = vmatprep.subr.bf16.mxu0 %v810
    %1026 = vmatpush1.bf16.msra.mxu0 %v809
    %1027 = vmatprep.subr.bf16.mxu0 %v814
    %1028 = vmatpush1.bf16.msra.mxu0 %v813
    %1029 = vmatprep.subr.bf16.mxu0 %v818
    %1030 = vmatpush1.bf16.msra.mxu0 %v817
    %1031 = vmatprep.subr.bf16.mxu0 %v822
    %1032 = vmatpush1.bf16.msra.mxu0 %v821
    %1033 = vmatprep.subr.bf16.mxu0 %v826
    %1034 = vmatpush1.bf16.msra.mxu0 %v825
    %1035 = vmatprep.subr.bf16.mxu0 %v830
    %1036 = vmatpush1.bf16.msra.mxu0 %v829
    %1037 = vmatprep.subr.bf16.mxu0 %v834
    %1038 = vmatpush1.bf16.msra.mxu0 %v833
    %1039 = vmatprep.subr.bf16.mxu0 %v838
    %1040 = vmatpush1.bf16.msra.mxu0 %v837
    %1041 = vmatprep.mubr.bf16.mxu0 %v134
    %1042 = vmatmul.mubr.bf16.gmra.mrb[0].mxu0 %v133
    %v1043 = vpop.f32.mrb[0].mxu0
    %v1044 = vadd.f32 %v1003, %v1043
    %v1045 = vpop.f32.mrb[0].mxu0
    %v1046 = vadd.f32 %v1005, %v1045
    %v1047 = vpop.f32.mrb[0].mxu0
    %v1048 = vpop.f32.mrb[0].mxu0
    %1049 = vdwg.mxu0
    %1050 = vmatprep.subr.bf16.mxu0 %v842
    %1051 = vmatpush1.bf16.msra.mxu0 %v841
    %1052 = vmatprep.subr.bf16.mxu0 %v846
    %1053 = vmatpush1.bf16.msra.mxu0 %v845
    %1054 = vmatprep.subr.bf16.mxu0 %v850
    %1055 = vmatpush1.bf16.msra.mxu0 %v849
    %1056 = vmatprep.subr.bf16.mxu0 %v854
    %1057 = vmatpush1.bf16.msra.mxu0 %v853
    %1058 = vmatprep.subr.bf16.mxu0 %v858
    %1059 = vmatpush1.bf16.msra.mxu0 %v857
    %1060 = vmatprep.subr.bf16.mxu0 %v862
    %1061 = vmatpush1.bf16.msra.mxu0 %v861
    %1062 = vmatprep.subr.bf16.mxu0 %v866
    %1063 = vmatpush1.bf16.msra.mxu0 %v865
    %1064 = vmatprep.subr.bf16.mxu0 %v870
    %1065 = vmatpush1.bf16.msra.mxu0 %v869
    %1066 = vmatprep.subr.bf16.mxu0 %v874
    %1067 = vmatpush1.bf16.msra.mxu0 %v873
    %1068 = vmatprep.subr.bf16.mxu0 %v878
    %1069 = vmatpush1.bf16.msra.mxu0 %v877
    %1070 = vmatprep.subr.bf16.mxu0 %v882
    %1071 = vmatpush1.bf16.msra.mxu0 %v881
    %1072 = vmatprep.subr.bf16.mxu0 %v886
    %1073 = vmatpush1.bf16.msra.mxu0 %v885
    %1074 = vmatprep.subr.bf16.mxu0 %v890
    %1075 = vmatpush1.bf16.msra.mxu0 %v889
    %1076 = vmatprep.subr.bf16.mxu0 %v894
    %1077 = vmatpush1.bf16.msra.mxu0 %v893
    %1078 = vmatprep.subr.bf16.mxu0 %v898
    %1079 = vmatpush1.bf16.msra.mxu0 %v897
    %1080 = vmatprep.subr.bf16.mxu0 %v902
    %1081 = vmatpush1.bf16.msra.mxu0 %v901
    %1082 = vmatprep.mubr.bf16.mxu0 %v136
    %1083 = vmatmul.mubr.bf16.gmra.mrb[0].mxu0 %v135
    %v1084 = vpop.f32.mrb[0].mxu0
    %v1085 = vadd.f32 %v1044, %v1084
    %v1086 = vpop.f32.mrb[0].mxu0
    %v1087 = vadd.f32 %v1046, %v1086
    %v1088 = vpop.f32.mrb[0].mxu0
    %v1089 = vpop.f32.mrb[0].mxu0
    %1090 = vdwg.mxu0
    %1091 = vmatprep.subr.bf16.mxu0 %v652
    %1092 = vmatpush1.bf16.msra.mxu0 %v651
    %1093 = vmatprep.subr.bf16.mxu0 %v656
    %1094 = vmatpush1.bf16.msra.mxu0 %v655
    %1095 = vmatprep.subr.bf16.mxu0 %v660
    %1096 = vmatpush1.bf16.msra.mxu0 %v659
    %1097 = vmatprep.subr.bf16.mxu0 %v664
    %1098 = vmatpush1.bf16.msra.mxu0 %v663
    %1099 = vmatprep.subr.bf16.mxu0 %v668
    %1100 = vmatpush1.bf16.msra.mxu0 %v667
    %1101 = vmatprep.subr.bf16.mxu0 %v672
    %1102 = vmatpush1.bf16.msra.mxu0 %v671
    %1103 = vmatprep.subr.bf16.mxu0 %v676
    %1104 = vmatpush1.bf16.msra.mxu0 %v675
    %1105 = vmatprep.subr.bf16.mxu0 %v680
    %1106 = vmatpush1.bf16.msra.mxu0 %v679
    %1107 = vmatprep.subr.bf16.mxu0 %v684
    %1108 = vmatpush1.bf16.msra.mxu0 %v683
    %1109 = vmatprep.subr.bf16.mxu0 %v688
    %1110 = vmatpush1.bf16.msra.mxu0 %v687
    %1111 = vmatprep.subr.bf16.mxu0 %v692
    %1112 = vmatpush1.bf16.msra.mxu0 %v691
    %1113 = vmatprep.subr.bf16.mxu0 %v696
    %1114 = vmatpush1.bf16.msra.mxu0 %v695
    %1115 = vmatprep.subr.bf16.mxu0 %v700
    %1116 = vmatpush1.bf16.msra.mxu0 %v699
    %1117 = vmatprep.subr.bf16.mxu0 %v704
    %1118 = vmatpush1.bf16.msra.mxu0 %v703
    %1119 = vmatprep.subr.bf16.mxu0 %v708
    %1120 = vmatpush1.bf16.msra.mxu0 %v707
    %1121 = vmatprep.subr.bf16.mxu0 %v712
    %1122 = vmatpush1.bf16.msra.mxu0 %v711
    %1123 = vmatprep.mubr.bf16.mxu0 %v130
    %1124 = vmatmul.mubr.bf16.gmra.mrb[0].mxu0 %v129
    %v1125 = vpop.f32.mrb[0].mxu0
    %v1126 = vadd.f32 %v918, %v1125
    %v1127 = vpop.f32.mrb[0].mxu0
    %v1128 = vadd.f32 %v922, %v1127
    %v1129 = vpop.f32.mrb[0].mxu0
    %v1130 = vpop.f32.mrb[0].mxu0
    %1131 = vdwg.mxu0
    %1132 = vmatprep.subr.bf16.mxu0 %v716
    %1133 = vmatpush1.bf16.msra.mxu0 %v715
    %1134 = vmatprep.subr.bf16.mxu0 %v720
    %1135 = vmatpush1.bf16.msra.mxu0 %v719
    %1136 = vmatprep.subr.bf16.mxu0 %v724
    %1137 = vmatpush1.bf16.msra.mxu0 %v723
    %1138 = vmatprep.subr.bf16.mxu0 %v728
    %1139 = vmatpush1.bf16.msra.mxu0 %v727
    %1140 = vmatprep.subr.bf16.mxu0 %v732
    %1141 = vmatpush1.bf16.msra.mxu0 %v731
    %1142 = vmatprep.subr.bf16.mxu0 %v736
    %1143 = vmatpush1.bf16.msra.mxu0 %v735
    %1144 = vmatprep.subr.bf16.mxu0 %v740
    %1145 = vmatpush1.bf16.msra.mxu0 %v739
    %1146 = vmatprep.subr.bf16.mxu0 %v744
    %1147 = vmatpush1.bf16.msra.mxu0 %v743
    %1148 = vmatprep.subr.bf16.mxu0 %v748
    %1149 = vmatpush1.bf16.msra.mxu0 %v747
    %1150 = vmatprep.subr.bf16.mxu0 %v752
    %1151 = vmatpush1.bf16.msra.mxu0 %v751
    %1152 = vmatprep.subr.bf16.mxu0 %v756
    %1153 = vmatpush1.bf16.msra.mxu0 %v755
    %1154 = vmatprep.subr.bf16.mxu0 %v760
    %1155 = vmatpush1.bf16.msra.mxu0 %v759
    %1156 = vmatprep.subr.bf16.mxu0 %v764
    %1157 = vmatpush1.bf16.msra.mxu0 %v763
    %1158 = vmatprep.subr.bf16.mxu0 %v768
    %1159 = vmatpush1.bf16.msra.mxu0 %v767
    %1160 = vmatprep.subr.bf16.mxu0 %v772
    %1161 = vmatpush1.bf16.msra.mxu0 %v771
    %1162 = vmatprep.subr.bf16.mxu0 %v776
    %1163 = vmatpush1.bf16.msra.mxu0 %v775
    %1164 = vmatprep.mubr.bf16.mxu0 %v132
    %1165 = vmatmul.mubr.bf16.gmra.mrb[0].mxu0 %v131
    %v1166 = vpop.f32.mrb[0].mxu0
    %v1167 = vadd.f32 %v1126, %v1166
    %v1168 = vpop.f32.mrb[0].mxu0
    %v1169 = vadd.f32 %v1128, %v1168
    %v1170 = vpop.f32.mrb[0].mxu0
    %v1171 = vpop.f32.mrb[0].mxu0
    %1172 = vdwg.mxu0
    %1173 = vmatprep.subr.bf16.mxu0 %v780
    %1174 = vmatpush1.bf16.msra.mxu0 %v779
    %1175 = vmatprep.subr.bf16.mxu0 %v784
    %1176 = vmatpush1.bf16.msra.mxu0 %v783
    %1177 = vmatprep.subr.bf16.mxu0 %v788
    %1178 = vmatpush1.bf16.msra.mxu0 %v787
    %1179 = vmatprep.subr.bf16.mxu0 %v792
    %1180 = vmatpush1.bf16.msra.mxu0 %v791
    %1181 = vmatprep.subr.bf16.mxu0 %v796
    %1182 = vmatpush1.bf16.msra.mxu0 %v795
    %1183 = vmatprep.subr.bf16.mxu0 %v800
    %1184 = vmatpush1.bf16.msra.mxu0 %v799
    %1185 = vmatprep.subr.bf16.mxu0 %v804
    %1186 = vmatpush1.bf16.msra.mxu0 %v803
    %1187 = vmatprep.subr.bf16.mxu0 %v808
    %1188 = vmatpush1.bf16.msra.mxu0 %v807
    %1189 = vmatprep.subr.bf16.mxu0 %v812
    %1190 = vmatpush1.bf16.msra.mxu0 %v811
    %1191 = vmatprep.subr.bf16.mxu0 %v816
    %1192 = vmatpush1.bf16.msra.mxu0 %v815
    %1193 = vmatprep.subr.bf16.mxu0 %v820
    %1194 = vmatpush1.bf16.msra.mxu0 %v819
    %1195 = vmatprep.subr.bf16.mxu0 %v824
    %1196 = vmatpush1.bf16.msra.mxu0 %v823
    %1197 = vmatprep.subr.bf16.mxu0 %v828
    %1198 = vmatpush1.bf16.msra.mxu0 %v827
    %1199 = vmatprep.subr.bf16.mxu0 %v832
    %1200 = vmatpush1.bf16.msra.mxu0 %v831
    %1201 = vmatprep.subr.bf16.mxu0 %v836
    %1202 = vmatpush1.bf16.msra.mxu0 %v835
    %1203 = vmatprep.subr.bf16.mxu0 %v840
    %1204 = vmatpush1.bf16.msra.mxu0 %v839
    %1205 = vmatprep.mubr.bf16.mxu0 %v134
    %1206 = vmatmul.mubr.bf16.gmra.mrb[0].mxu0 %v133
    %v1207 = vpop.f32.mrb[0].mxu0
    %v1208 = vadd.f32 %v1167, %v1207
    %v1209 = vpop.f32.mrb[0].mxu0
    %v1210 = vadd.f32 %v1169, %v1209
    %v1211 = vpop.f32.mrb[0].mxu0
    %v1212 = vpop.f32.mrb[0].mxu0
    %1213 = vdwg.mxu0
    %1214 = vmatprep.subr.bf16.mxu0 %v844
    %1215 = vmatpush1.bf16.msra.mxu0 %v843
    %1216 = vmatprep.subr.bf16.mxu0 %v848
    %1217 = vmatpush1.bf16.msra.mxu0 %v847
    %1218 = vmatprep.subr.bf16.mxu0 %v852
    %1219 = vmatpush1.bf16.msra.mxu0 %v851
    %1220 = vmatprep.subr.bf16.mxu0 %v856
    %1221 = vmatpush1.bf16.msra.mxu0 %v855
    %1222 = vmatprep.subr.bf16.mxu0 %v860
    %1223 = vmatpush1.bf16.msra.mxu0 %v859
    %1224 = vmatprep.subr.bf16.mxu0 %v864
    %1225 = vmatpush1.bf16.msra.mxu0 %v863
    %1226 = vmatprep.subr.bf16.mxu0 %v868
    %1227 = vmatpush1.bf16.msra.mxu0 %v867
    %1228 = vmatprep.subr.bf16.mxu0 %v872
    %1229 = vmatpush1.bf16.msra.mxu0 %v871
    %1230 = vmatprep.subr.bf16.mxu0 %v876
    %1231 = vmatpush1.bf16.msra.mxu0 %v875
    %1232 = vmatprep.subr.bf16.mxu0 %v880
    %1233 = vmatpush1.bf16.msra.mxu0 %v879
    %1234 = vmatprep.subr.bf16.mxu0 %v884
    %1235 = vmatpush1.bf16.msra.mxu0 %v883
    %1236 = vmatprep.subr.bf16.mxu0 %v888
    %1237 = vmatpush1.bf16.msra.mxu0 %v887
    %1238 = vmatprep.subr.bf16.mxu0 %v892
    %1239 = vmatpush1.bf16.msra.mxu0 %v891
    %1240 = vmatprep.subr.bf16.mxu0 %v896
    %1241 = vmatpush1.bf16.msra.mxu0 %v895
    %1242 = vmatprep.subr.bf16.mxu0 %v900
    %1243 = vmatpush1.bf16.msra.mxu0 %v899
    %1244 = vmatprep.subr.bf16.mxu0 %v904
    %1245 = vmatpush1.bf16.msra.mxu0 %v903
    %1246 = vmatprep.mubr.bf16.mxu0 %v136
    %1247 = vmatmul.mubr.bf16.gmra.mrb[0].mxu0 %v135
    %v1248 = vpop.f32.mrb[0].mxu0
    %v1249 = vadd.f32 %v1208, %v1248
    %v1250 = vpop.f32.mrb[0].mxu0
    %v1251 = vadd.f32 %v1210, %v1250
    %v1252 = vpop.f32.mrb[0].mxu0
    %v1253 = vpop.f32.mrb[0].mxu0
    %1254 = vdwg.mxu0
    %v1255 = vmax.f32 %v1085, 0.0
    %v1256 = vmax.f32 %v1087, 0.0
    %v1257 = vmax.f32 %v1249, 0.0
    %v1258 = vmax.f32 %v1251, 0.0
    %v1259 = vpack.c.bf16 %v1255, %v1255
    %v1260 = vpack.c.bf16 %v1256, %v1256
    %v1261 = vpack.c.bf16 %v1257, %v1257
    %v1262 = vpack.c.bf16 %v1258, %v1258
    %v1263 = vld [vmem:[#allocation8] sm:$0xff]
    %v1264 = vld [vmem:[#allocation8 + $0x8] sm:$0xff]
    %v1265 = vld [vmem:[#allocation8 + $0x10] sm:$0xff]
    %v1266 = vld [vmem:[#allocation8 + $0x18] sm:$0xff]
    %v1267 = vld [vmem:[#allocation8 + $0x20] sm:$0xff]
    %v1268 = vld [vmem:[#allocation8 + $0x28] sm:$0xff]
    %v1269 = vld [vmem:[#allocation8 + $0x30] sm:$0xff]
    %v1270 = vld [vmem:[#allocation8 + $0x38] sm:$0xff]
    %v1271 = vld [vmem:[#allocation8 + $0x40] sm:$0xff]
    %v1272 = vld [vmem:[#allocation8 + $0x48] sm:$0xff]
    %v1273 = vld [vmem:[#allocation8 + $0x50] sm:$0xff]
    %v1274 = vld [vmem:[#allocation8 + $0x58] sm:$0xff]
    %v1275 = vld [vmem:[#allocation8 + $0x60] sm:$0xff]
    %v1276 = vld [vmem:[#allocation8 + $0x68] sm:$0xff]
    %v1277 = vld [vmem:[#allocation8 + $0x70] sm:$0xff]
    %v1278 = vld [vmem:[#allocation8 + $0x78] sm:$0xff]
    %v1279 = vld [vmem:[#allocation8 + $0x80] sm:$0xff]
    %v1280 = vld [vmem:[#allocation8 + $0x88] sm:$0xff]
    %v1281 = vld [vmem:[#allocation8 + $0x90] sm:$0xff]
    %v1282 = vld [vmem:[#allocation8 + $0x98] sm:$0xff]
    %v1283 = vld [vmem:[#allocation8 + $0xa0] sm:$0xff]
    %v1284 = vld [vmem:[#allocation8 + $0xa8] sm:$0xff]
    %v1285 = vld [vmem:[#allocation8 + $0xb0] sm:$0xff]
    %v1286 = vld [vmem:[#allocation8 + $0xb8] sm:$0xff]
    %v1287 = vld [vmem:[#allocation8 + $0xc0] sm:$0xff]
    %v1288 = vld [vmem:[#allocation8 + $0xc8] sm:$0xff]
    %v1289 = vld [vmem:[#allocation8 + $0xd0] sm:$0xff]
    %v1290 = vld [vmem:[#allocation8 + $0xd8] sm:$0xff]
    %v1291 = vld [vmem:[#allocation8 + $0xe0] sm:$0xff]
    %v1292 = vld [vmem:[#allocation8 + $0xe8] sm:$0xff]
    %v1293 = vld [vmem:[#allocation8 + $0xf0] sm:$0xff]
    %v1294 = vld [vmem:[#allocation8 + $0xf8] sm:$0xff]
    %v1295 = vld [vmem:[#allocation8 + $0x100] sm:$0xff]
    %v1296 = vld [vmem:[#allocation8 + $0x108] sm:$0xff]
    %v1297 = vld [vmem:[#allocation8 + $0x110] sm:$0xff]
    %v1298 = vld [vmem:[#allocation8 + $0x118] sm:$0xff]
    %v1299 = vld [vmem:[#allocation8 + $0x120] sm:$0xff]
    %v1300 = vld [vmem:[#allocation8 + $0x128] sm:$0xff]
    %v1301 = vld [vmem:[#allocation8 + $0x130] sm:$0xff]
    %v1302 = vld [vmem:[#allocation8 + $0x138] sm:$0xff]
    %v1303 = vld [vmem:[#allocation8 + $0x140] sm:$0xff]
    %v1304 = vld [vmem:[#allocation8 + $0x148] sm:$0xff]
    %v1305 = vld [vmem:[#allocation8 + $0x150] sm:$0xff]
    %v1306 = vld [vmem:[#allocation8 + $0x158] sm:$0xff]
    %v1307 = vld [vmem:[#allocation8 + $0x160] sm:$0xff]
    %v1308 = vld [vmem:[#allocation8 + $0x168] sm:$0xff]
    %v1309 = vld [vmem:[#allocation8 + $0x170] sm:$0xff]
    %v1310 = vld [vmem:[#allocation8 + $0x178] sm:$0xff]
    %v1311 = vld [vmem:[#allocation8 + $0x180] sm:$0xff]
    %v1312 = vld [vmem:[#allocation8 + $0x188] sm:$0xff]
    %v1313 = vld [vmem:[#allocation8 + $0x190] sm:$0xff]
    %v1314 = vld [vmem:[#allocation8 + $0x198] sm:$0xff]
    %v1315 = vld [vmem:[#allocation8 + $0x1a0] sm:$0xff]
    %v1316 = vld [vmem:[#allocation8 + $0x1a8] sm:$0xff]
    %v1317 = vld [vmem:[#allocation8 + $0x1b0] sm:$0xff]
    %v1318 = vld [vmem:[#allocation8 + $0x1b8] sm:$0xff]
    %v1319 = vld [vmem:[#allocation8 + $0x1c0] sm:$0xff]
    %v1320 = vld [vmem:[#allocation8 + $0x1c8] sm:$0xff]
    %v1321 = vld [vmem:[#allocation8 + $0x1d0] sm:$0xff]
    %v1322 = vld [vmem:[#allocation8 + $0x1d8] sm:$0xff]
    %v1323 = vld [vmem:[#allocation8 + $0x1e0] sm:$0xff]
    %v1324 = vld [vmem:[#allocation8 + $0x1e8] sm:$0xff]
    %v1325 = vld [vmem:[#allocation8 + $0x1f0] sm:$0xff]
    %v1326 = vld [vmem:[#allocation8 + $0x1f8] sm:$0xff]
    %v1327 = vld [vmem:[#allocation8 + $0x200] sm:$0xff]
    %v1328 = vld [vmem:[#allocation8 + $0x208] sm:$0xff]
    %v1329 = vld [vmem:[#allocation8 + $0x210] sm:$0xff]
    %v1330 = vld [vmem:[#allocation8 + $0x218] sm:$0xff]
    %v1331 = vld [vmem:[#allocation8 + $0x220] sm:$0xff]
    %v1332 = vld [vmem:[#allocation8 + $0x228] sm:$0xff]
    %v1333 = vld [vmem:[#allocation8 + $0x230] sm:$0xff]
    %v1334 = vld [vmem:[#allocation8 + $0x238] sm:$0xff]
    %v1335 = vld [vmem:[#allocation8 + $0x240] sm:$0xff]
    %v1336 = vld [vmem:[#allocation8 + $0x248] sm:$0xff]
    %v1337 = vld [vmem:[#allocation8 + $0x250] sm:$0xff]
    %v1338 = vld [vmem:[#allocation8 + $0x258] sm:$0xff]
    %v1339 = vld [vmem:[#allocation8 + $0x260] sm:$0xff]
    %v1340 = vld [vmem:[#allocation8 + $0x268] sm:$0xff]
    %v1341 = vld [vmem:[#allocation8 + $0x270] sm:$0xff]
    %v1342 = vld [vmem:[#allocation8 + $0x278] sm:$0xff]
    %v1343 = vld [vmem:[#allocation8 + $0x280] sm:$0xff]
    %v1344 = vld [vmem:[#allocation8 + $0x288] sm:$0xff]
    %v1345 = vld [vmem:[#allocation8 + $0x290] sm:$0xff]
    %v1346 = vld [vmem:[#allocation8 + $0x298] sm:$0xff]
    %v1347 = vld [vmem:[#allocation8 + $0x2a0] sm:$0xff]
    %v1348 = vld [vmem:[#allocation8 + $0x2a8] sm:$0xff]
    %v1349 = vld [vmem:[#allocation8 + $0x2b0] sm:$0xff]
    %v1350 = vld [vmem:[#allocation8 + $0x2b8] sm:$0xff]
    %v1351 = vld [vmem:[#allocation8 + $0x2c0] sm:$0xff]
    %v1352 = vld [vmem:[#allocation8 + $0x2c8] sm:$0xff]
    %v1353 = vld [vmem:[#allocation8 + $0x2d0] sm:$0xff]
    %v1354 = vld [vmem:[#allocation8 + $0x2d8] sm:$0xff]
    %v1355 = vld [vmem:[#allocation8 + $0x2e0] sm:$0xff]
    %v1356 = vld [vmem:[#allocation8 + $0x2e8] sm:$0xff]
    %v1357 = vld [vmem:[#allocation8 + $0x2f0] sm:$0xff]
    %v1358 = vld [vmem:[#allocation8 + $0x2f8] sm:$0xff]
    %v1359 = vld [vmem:[#allocation8 + $0x300] sm:$0xff]
    %v1360 = vld [vmem:[#allocation8 + $0x308] sm:$0xff]
    %v1361 = vld [vmem:[#allocation8 + $0x310] sm:$0xff]
    %v1362 = vld [vmem:[#allocation8 + $0x318] sm:$0xff]
    %v1363 = vld [vmem:[#allocation8 + $0x320] sm:$0xff]
    %v1364 = vld [vmem:[#allocation8 + $0x328] sm:$0xff]
    %v1365 = vld [vmem:[#allocation8 + $0x330] sm:$0xff]
    %v1366 = vld [vmem:[#allocation8 + $0x338] sm:$0xff]
    %v1367 = vld [vmem:[#allocation8 + $0x340] sm:$0xff]
    %v1368 = vld [vmem:[#allocation8 + $0x348] sm:$0xff]
    %v1369 = vld [vmem:[#allocation8 + $0x350] sm:$0xff]
    %v1370 = vld [vmem:[#allocation8 + $0x358] sm:$0xff]
    %v1371 = vld [vmem:[#allocation8 + $0x360] sm:$0xff]
    %v1372 = vld [vmem:[#allocation8 + $0x368] sm:$0xff]
    %v1373 = vld [vmem:[#allocation8 + $0x370] sm:$0xff]
    %v1374 = vld [vmem:[#allocation8 + $0x378] sm:$0xff]
    %v1375 = vld [vmem:[#allocation8 + $0x380] sm:$0xff]
    %v1376 = vld [vmem:[#allocation8 + $0x388] sm:$0xff]
    %v1377 = vld [vmem:[#allocation8 + $0x390] sm:$0xff]
    %v1378 = vld [vmem:[#allocation8 + $0x398] sm:$0xff]
    %v1379 = vld [vmem:[#allocation8 + $0x3a0] sm:$0xff]
    %v1380 = vld [vmem:[#allocation8 + $0x3a8] sm:$0xff]
    %v1381 = vld [vmem:[#allocation8 + $0x3b0] sm:$0xff]
    %v1382 = vld [vmem:[#allocation8 + $0x3b8] sm:$0xff]
    %v1383 = vld [vmem:[#allocation8 + $0x3c0] sm:$0xff]
    %v1384 = vld [vmem:[#allocation8 + $0x3c8] sm:$0xff]
    %v1385 = vld [vmem:[#allocation8 + $0x3d0] sm:$0xff]
    %v1386 = vld [vmem:[#allocation8 + $0x3d8] sm:$0xff]
    %v1387 = vld [vmem:[#allocation8 + $0x3e0] sm:$0xff]
    %v1388 = vld [vmem:[#allocation8 + $0x3e8] sm:$0xff]
    %v1389 = vld [vmem:[#allocation8 + $0x3f0] sm:$0xff]
    %v1390 = vld [vmem:[#allocation8 + $0x3f8] sm:$0xff]
    %v1391 = vld [vmem:[#allocation8 + $0x400] sm:$0xff]
    %v1392 = vld [vmem:[#allocation8 + $0x408] sm:$0xff]
    %v1393 = vld [vmem:[#allocation8 + $0x410] sm:$0xff]
    %v1394 = vld [vmem:[#allocation8 + $0x418] sm:$0xff]
    %v1395 = vld [vmem:[#allocation8 + $0x420] sm:$0xff]
    %v1396 = vld [vmem:[#allocation8 + $0x428] sm:$0xff]
    %v1397 = vld [vmem:[#allocation8 + $0x430] sm:$0xff]
    %v1398 = vld [vmem:[#allocation8 + $0x438] sm:$0xff]
    %v1399 = vld [vmem:[#allocation8 + $0x440] sm:$0xff]
    %v1400 = vld [vmem:[#allocation8 + $0x448] sm:$0xff]
    %v1401 = vld [vmem:[#allocation8 + $0x450] sm:$0xff]
    %v1402 = vld [vmem:[#allocation8 + $0x458] sm:$0xff]
    %v1403 = vld [vmem:[#allocation8 + $0x460] sm:$0xff]
    %v1404 = vld [vmem:[#allocation8 + $0x468] sm:$0xff]
    %v1405 = vld [vmem:[#allocation8 + $0x470] sm:$0xff]
    %v1406 = vld [vmem:[#allocation8 + $0x478] sm:$0xff]
    %v1407 = vld [vmem:[#allocation8 + $0x480] sm:$0xff]
    %v1408 = vld [vmem:[#allocation8 + $0x488] sm:$0xff]
    %v1409 = vld [vmem:[#allocation8 + $0x490] sm:$0xff]
    %v1410 = vld [vmem:[#allocation8 + $0x498] sm:$0xff]
    %v1411 = vld [vmem:[#allocation8 + $0x4a0] sm:$0xff]
    %v1412 = vld [vmem:[#allocation8 + $0x4a8] sm:$0xff]
    %v1413 = vld [vmem:[#allocation8 + $0x4b0] sm:$0xff]
    %v1414 = vld [vmem:[#allocation8 + $0x4b8] sm:$0xff]
    %v1415 = vld [vmem:[#allocation8 + $0x4c0] sm:$0xff]
    %v1416 = vld [vmem:[#allocation8 + $0x4c8] sm:$0xff]
    %v1417 = vld [vmem:[#allocation8 + $0x4d0] sm:$0xff]
    %v1418 = vld [vmem:[#allocation8 + $0x4d8] sm:$0xff]
    %v1419 = vld [vmem:[#allocation8 + $0x4e0] sm:$0xff]
    %v1420 = vld [vmem:[#allocation8 + $0x4e8] sm:$0xff]
    %v1421 = vld [vmem:[#allocation8 + $0x4f0] sm:$0xff]
    %v1422 = vld [vmem:[#allocation8 + $0x4f8] sm:$0xff]
    %v1423 = vld [vmem:[#allocation8 + $0x500] sm:$0xff]
    %v1424 = vld [vmem:[#allocation8 + $0x508] sm:$0xff]
    %v1425 = vld [vmem:[#allocation8 + $0x510] sm:$0xff]
    %v1426 = vld [vmem:[#allocation8 + $0x518] sm:$0xff]
    %v1427 = vld [vmem:[#allocation8 + $0x520] sm:$0xff]
    %v1428 = vld [vmem:[#allocation8 + $0x528] sm:$0xff]
    %v1429 = vld [vmem:[#allocation8 + $0x530] sm:$0xff]
    %v1430 = vld [vmem:[#allocation8 + $0x538] sm:$0xff]
    %v1431 = vld [vmem:[#allocation8 + $0x540] sm:$0xff]
    %v1432 = vld [vmem:[#allocation8 + $0x548] sm:$0xff]
    %v1433 = vld [vmem:[#allocation8 + $0x550] sm:$0xff]
    %v1434 = vld [vmem:[#allocation8 + $0x558] sm:$0xff]
    %v1435 = vld [vmem:[#allocation8 + $0x560] sm:$0xff]
    %v1436 = vld [vmem:[#allocation8 + $0x568] sm:$0xff]
    %v1437 = vld [vmem:[#allocation8 + $0x570] sm:$0xff]
    %v1438 = vld [vmem:[#allocation8 + $0x578] sm:$0xff]
    %v1439 = vld [vmem:[#allocation8 + $0x580] sm:$0xff]
    %v1440 = vld [vmem:[#allocation8 + $0x588] sm:$0xff]
    %v1441 = vld [vmem:[#allocation8 + $0x590] sm:$0xff]
    %v1442 = vld [vmem:[#allocation8 + $0x598] sm:$0xff]
    %v1443 = vld [vmem:[#allocation8 + $0x5a0] sm:$0xff]
    %v1444 = vld [vmem:[#allocation8 + $0x5a8] sm:$0xff]
    %v1445 = vld [vmem:[#allocation8 + $0x5b0] sm:$0xff]
    %v1446 = vld [vmem:[#allocation8 + $0x5b8] sm:$0xff]
    %v1447 = vld [vmem:[#allocation8 + $0x5c0] sm:$0xff]
    %v1448 = vld [vmem:[#allocation8 + $0x5c8] sm:$0xff]
    %v1449 = vld [vmem:[#allocation8 + $0x5d0] sm:$0xff]
    %v1450 = vld [vmem:[#allocation8 + $0x5d8] sm:$0xff]
    %v1451 = vld [vmem:[#allocation8 + $0x5e0] sm:$0xff]
    %v1452 = vld [vmem:[#allocation8 + $0x5e8] sm:$0xff]
    %v1453 = vld [vmem:[#allocation8 + $0x5f0] sm:$0xff]
    %v1454 = vld [vmem:[#allocation8 + $0x5f8] sm:$0xff]
    %v1455 = vld [vmem:[#allocation8 + $0x600] sm:$0xff]
    %v1456 = vld [vmem:[#allocation8 + $0x608] sm:$0xff]
    %v1457 = vld [vmem:[#allocation8 + $0x610] sm:$0xff]
    %v1458 = vld [vmem:[#allocation8 + $0x618] sm:$0xff]
    %v1459 = vld [vmem:[#allocation8 + $0x620] sm:$0xff]
    %v1460 = vld [vmem:[#allocation8 + $0x628] sm:$0xff]
    %v1461 = vld [vmem:[#allocation8 + $0x630] sm:$0xff]
    %v1462 = vld [vmem:[#allocation8 + $0x638] sm:$0xff]
    %v1463 = vld [vmem:[#allocation8 + $0x640] sm:$0xff]
    %v1464 = vld [vmem:[#allocation8 + $0x648] sm:$0xff]
    %v1465 = vld [vmem:[#allocation8 + $0x650] sm:$0xff]
    %v1466 = vld [vmem:[#allocation8 + $0x658] sm:$0xff]
    %v1467 = vld [vmem:[#allocation8 + $0x660] sm:$0xff]
    %v1468 = vld [vmem:[#allocation8 + $0x668] sm:$0xff]
    %v1469 = vld [vmem:[#allocation8 + $0x670] sm:$0xff]
    %v1470 = vld [vmem:[#allocation8 + $0x678] sm:$0xff]
    %v1471 = vld [vmem:[#allocation8 + $0x680] sm:$0xff]
    %v1472 = vld [vmem:[#allocation8 + $0x688] sm:$0xff]
    %v1473 = vld [vmem:[#allocation8 + $0x690] sm:$0xff]
    %v1474 = vld [vmem:[#allocation8 + $0x698] sm:$0xff]
    %v1475 = vld [vmem:[#allocation8 + $0x6a0] sm:$0xff]
    %v1476 = vld [vmem:[#allocation8 + $0x6a8] sm:$0xff]
    %v1477 = vld [vmem:[#allocation8 + $0x6b0] sm:$0xff]
    %v1478 = vld [vmem:[#allocation8 + $0x6b8] sm:$0xff]
    %v1479 = vld [vmem:[#allocation8 + $0x6c0] sm:$0xff]
    %v1480 = vld [vmem:[#allocation8 + $0x6c8] sm:$0xff]
    %v1481 = vld [vmem:[#allocation8 + $0x6d0] sm:$0xff]
    %v1482 = vld [vmem:[#allocation8 + $0x6d8] sm:$0xff]
    %v1483 = vld [vmem:[#allocation8 + $0x6e0] sm:$0xff]
    %v1484 = vld [vmem:[#allocation8 + $0x6e8] sm:$0xff]
    %v1485 = vld [vmem:[#allocation8 + $0x6f0] sm:$0xff]
    %v1486 = vld [vmem:[#allocation8 + $0x6f8] sm:$0xff]
    %v1487 = vld [vmem:[#allocation8 + $0x700] sm:$0xff]
    %v1488 = vld [vmem:[#allocation8 + $0x708] sm:$0xff]
    %v1489 = vld [vmem:[#allocation8 + $0x710] sm:$0xff]
    %v1490 = vld [vmem:[#allocation8 + $0x718] sm:$0xff]
    %v1491 = vld [vmem:[#allocation8 + $0x720] sm:$0xff]
    %v1492 = vld [vmem:[#allocation8 + $0x728] sm:$0xff]
    %v1493 = vld [vmem:[#allocation8 + $0x730] sm:$0xff]
    %v1494 = vld [vmem:[#allocation8 + $0x738] sm:$0xff]
    %v1495 = vld [vmem:[#allocation8 + $0x740] sm:$0xff]
    %v1496 = vld [vmem:[#allocation8 + $0x748] sm:$0xff]
    %v1497 = vld [vmem:[#allocation8 + $0x750] sm:$0xff]
    %v1498 = vld [vmem:[#allocation8 + $0x758] sm:$0xff]
    %v1499 = vld [vmem:[#allocation8 + $0x760] sm:$0xff]
    %v1500 = vld [vmem:[#allocation8 + $0x768] sm:$0xff]
    %v1501 = vld [vmem:[#allocation8 + $0x770] sm:$0xff]
    %v1502 = vld [vmem:[#allocation8 + $0x778] sm:$0xff]
    %v1503 = vld [vmem:[#allocation8 + $0x780] sm:$0xff]
    %v1504 = vld [vmem:[#allocation8 + $0x788] sm:$0xff]
    %v1505 = vld [vmem:[#allocation8 + $0x790] sm:$0xff]
    %v1506 = vld [vmem:[#allocation8 + $0x798] sm:$0xff]
    %v1507 = vld [vmem:[#allocation8 + $0x7a0] sm:$0xff]
    %v1508 = vld [vmem:[#allocation8 + $0x7a8] sm:$0xff]
    %v1509 = vld [vmem:[#allocation8 + $0x7b0] sm:$0xff]
    %v1510 = vld [vmem:[#allocation8 + $0x7b8] sm:$0xff]
    %v1511 = vld [vmem:[#allocation8 + $0x7c0] sm:$0xff]
    %v1512 = vld [vmem:[#allocation8 + $0x7c8] sm:$0xff]
    %v1513 = vld [vmem:[#allocation8 + $0x7d0] sm:$0xff]
    %v1514 = vld [vmem:[#allocation8 + $0x7d8] sm:$0xff]
    %v1515 = vld [vmem:[#allocation8 + $0x7e0] sm:$0xff]
    %v1516 = vld [vmem:[#allocation8 + $0x7e8] sm:$0xff]
    %v1517 = vld [vmem:[#allocation8 + $0x7f0] sm:$0xff]
    %v1518 = vld [vmem:[#allocation8 + $0x7f8] sm:$0xff]
    %v1519 = vld [vmem:[#allocation8 + $0x800] sm:$0xff]
    %v1520 = vld [vmem:[#allocation8 + $0x808] sm:$0xff]
    %v1521 = vld [vmem:[#allocation8 + $0x810] sm:$0xff]
    %v1522 = vld [vmem:[#allocation8 + $0x818] sm:$0xff]
    %v1523 = vld [vmem:[#allocation8 + $0x820] sm:$0xff]
    %v1524 = vld [vmem:[#allocation8 + $0x828] sm:$0xff]
    %v1525 = vld [vmem:[#allocation8 + $0x830] sm:$0xff]
    %v1526 = vld [vmem:[#allocation8 + $0x838] sm:$0xff]
    %v1527 = vld [vmem:[#allocation8 + $0x840] sm:$0xff]
    %v1528 = vld [vmem:[#allocation8 + $0x848] sm:$0xff]
    %v1529 = vld [vmem:[#allocation8 + $0x850] sm:$0xff]
    %v1530 = vld [vmem:[#allocation8 + $0x858] sm:$0xff]
    %v1531 = vld [vmem:[#allocation8 + $0x860] sm:$0xff]
    %v1532 = vld [vmem:[#allocation8 + $0x868] sm:$0xff]
    %v1533 = vld [vmem:[#allocation8 + $0x870] sm:$0xff]
    %v1534 = vld [vmem:[#allocation8 + $0x878] sm:$0xff]
    %v1535 = vld [vmem:[#allocation8 + $0x880] sm:$0xff]
    %v1536 = vld [vmem:[#allocation8 + $0x888] sm:$0xff]
    %v1537 = vld [vmem:[#allocation8 + $0x890] sm:$0xff]
    %v1538 = vld [vmem:[#allocation8 + $0x898] sm:$0xff]
    %v1539 = vld [vmem:[#allocation8 + $0x8a0] sm:$0xff]
    %v1540 = vld [vmem:[#allocation8 + $0x8a8] sm:$0xff]
    %v1541 = vld [vmem:[#allocation8 + $0x8b0] sm:$0xff]
    %v1542 = vld [vmem:[#allocation8 + $0x8b8] sm:$0xff]
    %v1543 = vld [vmem:[#allocation8 + $0x8c0] sm:$0xff]
    %v1544 = vld [vmem:[#allocation8 + $0x8c8] sm:$0xff]
    %v1545 = vld [vmem:[#allocation8 + $0x8d0] sm:$0xff]
    %v1546 = vld [vmem:[#allocation8 + $0x8d8] sm:$0xff]
    %v1547 = vld [vmem:[#allocation8 + $0x8e0] sm:$0xff]
    %v1548 = vld [vmem:[#allocation8 + $0x8e8] sm:$0xff]
    %v1549 = vld [vmem:[#allocation8 + $0x8f0] sm:$0xff]
    %v1550 = vld [vmem:[#allocation8 + $0x8f8] sm:$0xff]
    %v1551 = vld [vmem:[#allocation8 + $0x900] sm:$0xff]
    %v1552 = vld [vmem:[#allocation8 + $0x908] sm:$0xff]
    %v1553 = vld [vmem:[#allocation8 + $0x910] sm:$0xff]
    %v1554 = vld [vmem:[#allocation8 + $0x918] sm:$0xff]
    %v1555 = vld [vmem:[#allocation8 + $0x920] sm:$0xff]
    %v1556 = vld [vmem:[#allocation8 + $0x928] sm:$0xff]
    %v1557 = vld [vmem:[#allocation8 + $0x930] sm:$0xff]
    %v1558 = vld [vmem:[#allocation8 + $0x938] sm:$0xff]
    %v1559 = vld [vmem:[#allocation8 + $0x940] sm:$0xff]
    %v1560 = vld [vmem:[#allocation8 + $0x948] sm:$0xff]
    %v1561 = vld [vmem:[#allocation8 + $0x950] sm:$0xff]
    %v1562 = vld [vmem:[#allocation8 + $0x958] sm:$0xff]
    %v1563 = vld [vmem:[#allocation8 + $0x960] sm:$0xff]
    %v1564 = vld [vmem:[#allocation8 + $0x968] sm:$0xff]
    %v1565 = vld [vmem:[#allocation8 + $0x970] sm:$0xff]
    %v1566 = vld [vmem:[#allocation8 + $0x978] sm:$0xff]
    %v1567 = vld [vmem:[#allocation8 + $0x980] sm:$0xff]
    %v1568 = vld [vmem:[#allocation8 + $0x988] sm:$0xff]
    %v1569 = vld [vmem:[#allocation8 + $0x990] sm:$0xff]
    %v1570 = vld [vmem:[#allocation8 + $0x998] sm:$0xff]
    %v1571 = vld [vmem:[#allocation8 + $0x9a0] sm:$0xff]
    %v1572 = vld [vmem:[#allocation8 + $0x9a8] sm:$0xff]
    %v1573 = vld [vmem:[#allocation8 + $0x9b0] sm:$0xff]
    %v1574 = vld [vmem:[#allocation8 + $0x9b8] sm:$0xff]
    %v1575 = vld [vmem:[#allocation8 + $0x9c0] sm:$0xff]
    %v1576 = vld [vmem:[#allocation8 + $0x9c8] sm:$0xff]
    %v1577 = vld [vmem:[#allocation8 + $0x9d0] sm:$0xff]
    %v1578 = vld [vmem:[#allocation8 + $0x9d8] sm:$0xff]
    %v1579 = vld [vmem:[#allocation8 + $0x9e0] sm:$0xff]
    %v1580 = vld [vmem:[#allocation8 + $0x9e8] sm:$0xff]
    %v1581 = vld [vmem:[#allocation8 + $0x9f0] sm:$0xff]
    %v1582 = vld [vmem:[#allocation8 + $0x9f8] sm:$0xff]
    %v1583 = vld [vmem:[#allocation8 + $0xa00] sm:$0xff]
    %v1584 = vld [vmem:[#allocation8 + $0xa08] sm:$0xff]
    %v1585 = vld [vmem:[#allocation8 + $0xa10] sm:$0xff]
    %v1586 = vld [vmem:[#allocation8 + $0xa18] sm:$0xff]
    %v1587 = vld [vmem:[#allocation8 + $0xa20] sm:$0xff]
    %v1588 = vld [vmem:[#allocation8 + $0xa28] sm:$0xff]
    %v1589 = vld [vmem:[#allocation8 + $0xa30] sm:$0xff]
    %v1590 = vld [vmem:[#allocation8 + $0xa38] sm:$0xff]
    %v1591 = vld [vmem:[#allocation8 + $0xa40] sm:$0xff]
    %v1592 = vld [vmem:[#allocation8 + $0xa48] sm:$0xff]
    %v1593 = vld [vmem:[#allocation8 + $0xa50] sm:$0xff]
    %v1594 = vld [vmem:[#allocation8 + $0xa58] sm:$0xff]
    %v1595 = vld [vmem:[#allocation8 + $0xa60] sm:$0xff]
    %v1596 = vld [vmem:[#allocation8 + $0xa68] sm:$0xff]
    %v1597 = vld [vmem:[#allocation8 + $0xa70] sm:$0xff]
    %v1598 = vld [vmem:[#allocation8 + $0xa78] sm:$0xff]
    %v1599 = vld [vmem:[#allocation8 + $0xa80] sm:$0xff]
    %v1600 = vld [vmem:[#allocation8 + $0xa88] sm:$0xff]
    %v1601 = vld [vmem:[#allocation8 + $0xa90] sm:$0xff]
    %v1602 = vld [vmem:[#allocation8 + $0xa98] sm:$0xff]
    %v1603 = vld [vmem:[#allocation8 + $0xaa0] sm:$0xff]
    %v1604 = vld [vmem:[#allocation8 + $0xaa8] sm:$0xff]
    %v1605 = vld [vmem:[#allocation8 + $0xab0] sm:$0xff]
    %v1606 = vld [vmem:[#allocation8 + $0xab8] sm:$0xff]
    %v1607 = vld [vmem:[#allocation8 + $0xac0] sm:$0xff]
    %v1608 = vld [vmem:[#allocation8 + $0xac8] sm:$0xff]
    %v1609 = vld [vmem:[#allocation8 + $0xad0] sm:$0xff]
    %v1610 = vld [vmem:[#allocation8 + $0xad8] sm:$0xff]
    %v1611 = vld [vmem:[#allocation8 + $0xae0] sm:$0xff]
    %v1612 = vld [vmem:[#allocation8 + $0xae8] sm:$0xff]
    %v1613 = vld [vmem:[#allocation8 + $0xaf0] sm:$0xff]
    %v1614 = vld [vmem:[#allocation8 + $0xaf8] sm:$0xff]
    %v1615 = vld [vmem:[#allocation8 + $0xb00] sm:$0xff]
    %v1616 = vld [vmem:[#allocation8 + $0xb08] sm:$0xff]
    %v1617 = vld [vmem:[#allocation8 + $0xb10] sm:$0xff]
    %v1618 = vld [vmem:[#allocation8 + $0xb18] sm:$0xff]
    %v1619 = vld [vmem:[#allocation8 + $0xb20] sm:$0xff]
    %v1620 = vld [vmem:[#allocation8 + $0xb28] sm:$0xff]
    %v1621 = vld [vmem:[#allocation8 + $0xb30] sm:$0xff]
    %v1622 = vld [vmem:[#allocation8 + $0xb38] sm:$0xff]
    %v1623 = vld [vmem:[#allocation8 + $0xb40] sm:$0xff]
    %v1624 = vld [vmem:[#allocation8 + $0xb48] sm:$0xff]
    %v1625 = vld [vmem:[#allocation8 + $0xb50] sm:$0xff]
    %v1626 = vld [vmem:[#allocation8 + $0xb58] sm:$0xff]
    %v1627 = vld [vmem:[#allocation8 + $0xb60] sm:$0xff]
    %v1628 = vld [vmem:[#allocation8 + $0xb68] sm:$0xff]
    %v1629 = vld [vmem:[#allocation8 + $0xb70] sm:$0xff]
    %v1630 = vld [vmem:[#allocation8 + $0xb78] sm:$0xff]
    %v1631 = vld [vmem:[#allocation8 + $0xb80] sm:$0xff]
    %v1632 = vld [vmem:[#allocation8 + $0xb88] sm:$0xff]
    %v1633 = vld [vmem:[#allocation8 + $0xb90] sm:$0xff]
    %v1634 = vld [vmem:[#allocation8 + $0xb98] sm:$0xff]
    %v1635 = vld [vmem:[#allocation8 + $0xba0] sm:$0xff]
    %v1636 = vld [vmem:[#allocation8 + $0xba8] sm:$0xff]
    %v1637 = vld [vmem:[#allocation8 + $0xbb0] sm:$0xff]
    %v1638 = vld [vmem:[#allocation8 + $0xbb8] sm:$0xff]
    %v1639 = vld [vmem:[#allocation8 + $0xbc0] sm:$0xff]
    %v1640 = vld [vmem:[#allocation8 + $0xbc8] sm:$0xff]
    %v1641 = vld [vmem:[#allocation8 + $0xbd0] sm:$0xff]
    %v1642 = vld [vmem:[#allocation8 + $0xbd8] sm:$0xff]
    %v1643 = vld [vmem:[#allocation8 + $0xbe0] sm:$0xff]
    %v1644 = vld [vmem:[#allocation8 + $0xbe8] sm:$0xff]
    %v1645 = vld [vmem:[#allocation8 + $0xbf0] sm:$0xff]
    %v1646 = vld [vmem:[#allocation8 + $0xbf8] sm:$0xff]
    %v1647 = vld [vmem:[#allocation8 + $0xc00] sm:$0xff]
    %v1648 = vld [vmem:[#allocation8 + $0xc08] sm:$0xff]
    %v1649 = vld [vmem:[#allocation8 + $0xc10] sm:$0xff]
    %v1650 = vld [vmem:[#allocation8 + $0xc18] sm:$0xff]
    %v1651 = vld [vmem:[#allocation8 + $0xc20] sm:$0xff]
    %v1652 = vld [vmem:[#allocation8 + $0xc28] sm:$0xff]
    %v1653 = vld [vmem:[#allocation8 + $0xc30] sm:$0xff]
    %v1654 = vld [vmem:[#allocation8 + $0xc38] sm:$0xff]
    %v1655 = vld [vmem:[#allocation8 + $0xc40] sm:$0xff]
    %v1656 = vld [vmem:[#allocation8 + $0xc48] sm:$0xff]
    %v1657 = vld [vmem:[#allocation8 + $0xc50] sm:$0xff]
    %v1658 = vld [vmem:[#allocation8 + $0xc58] sm:$0xff]
    %v1659 = vld [vmem:[#allocation8 + $0xc60] sm:$0xff]
    %v1660 = vld [vmem:[#allocation8 + $0xc68] sm:$0xff]
    %v1661 = vld [vmem:[#allocation8 + $0xc70] sm:$0xff]
    %v1662 = vld [vmem:[#allocation8 + $0xc78] sm:$0xff]
    %v1663 = vld [vmem:[#allocation8 + $0xc80] sm:$0xff]
    %v1664 = vld [vmem:[#allocation8 + $0xc88] sm:$0xff]
    %v1665 = vld [vmem:[#allocation8 + $0xc90] sm:$0xff]
    %v1666 = vld [vmem:[#allocation8 + $0xc98] sm:$0xff]
    %v1667 = vld [vmem:[#allocation8 + $0xca0] sm:$0xff]
    %v1668 = vld [vmem:[#allocation8 + $0xca8] sm:$0xff]
    %v1669 = vld [vmem:[#allocation8 + $0xcb0] sm:$0xff]
    %v1670 = vld [vmem:[#allocation8 + $0xcb8] sm:$0xff]
    %v1671 = vld [vmem:[#allocation8 + $0xcc0] sm:$0xff]
    %v1672 = vld [vmem:[#allocation8 + $0xcc8] sm:$0xff]
    %v1673 = vld [vmem:[#allocation8 + $0xcd0] sm:$0xff]
    %v1674 = vld [vmem:[#allocation8 + $0xcd8] sm:$0xff]
    %v1675 = vld [vmem:[#allocation8 + $0xce0] sm:$0xff]
    %v1676 = vld [vmem:[#allocation8 + $0xce8] sm:$0xff]
    %v1677 = vld [vmem:[#allocation8 + $0xcf0] sm:$0xff]
    %v1678 = vld [vmem:[#allocation8 + $0xcf8] sm:$0xff]
    %v1679 = vld [vmem:[#allocation8 + $0xd00] sm:$0xff]
    %v1680 = vld [vmem:[#allocation8 + $0xd08] sm:$0xff]
    %v1681 = vld [vmem:[#allocation8 + $0xd10] sm:$0xff]
    %v1682 = vld [vmem:[#allocation8 + $0xd18] sm:$0xff]
    %v1683 = vld [vmem:[#allocation8 + $0xd20] sm:$0xff]
    %v1684 = vld [vmem:[#allocation8 + $0xd28] sm:$0xff]
    %v1685 = vld [vmem:[#allocation8 + $0xd30] sm:$0xff]
    %v1686 = vld [vmem:[#allocation8 + $0xd38] sm:$0xff]
    %v1687 = vld [vmem:[#allocation8 + $0xd40] sm:$0xff]
    %v1688 = vld [vmem:[#allocation8 + $0xd48] sm:$0xff]
    %v1689 = vld [vmem:[#allocation8 + $0xd50] sm:$0xff]
    %v1690 = vld [vmem:[#allocation8 + $0xd58] sm:$0xff]
    %v1691 = vld [vmem:[#allocation8 + $0xd60] sm:$0xff]
    %v1692 = vld [vmem:[#allocation8 + $0xd68] sm:$0xff]
    %v1693 = vld [vmem:[#allocation8 + $0xd70] sm:$0xff]
    %v1694 = vld [vmem:[#allocation8 + $0xd78] sm:$0xff]
    %v1695 = vld [vmem:[#allocation8 + $0xd80] sm:$0xff]
    %v1696 = vld [vmem:[#allocation8 + $0xd88] sm:$0xff]
    %v1697 = vld [vmem:[#allocation8 + $0xd90] sm:$0xff]
    %v1698 = vld [vmem:[#allocation8 + $0xd98] sm:$0xff]
    %v1699 = vld [vmem:[#allocation8 + $0xda0] sm:$0xff]
    %v1700 = vld [vmem:[#allocation8 + $0xda8] sm:$0xff]
    %v1701 = vld [vmem:[#allocation8 + $0xdb0] sm:$0xff]
    %v1702 = vld [vmem:[#allocation8 + $0xdb8] sm:$0xff]
    %v1703 = vld [vmem:[#allocation8 + $0xdc0] sm:$0xff]
    %v1704 = vld [vmem:[#allocation8 + $0xdc8] sm:$0xff]
    %v1705 = vld [vmem:[#allocation8 + $0xdd0] sm:$0xff]
    %v1706 = vld [vmem:[#allocation8 + $0xdd8] sm:$0xff]
    %v1707 = vld [vmem:[#allocation8 + $0xde0] sm:$0xff]
    %v1708 = vld [vmem:[#allocation8 + $0xde8] sm:$0xff]
    %v1709 = vld [vmem:[#allocation8 + $0xdf0] sm:$0xff]
    %v1710 = vld [vmem:[#allocation8 + $0xdf8] sm:$0xff]
    %v1711 = vld [vmem:[#allocation8 + $0xe00] sm:$0xff]
    %v1712 = vld [vmem:[#allocation8 + $0xe08] sm:$0xff]
    %v1713 = vld [vmem:[#allocation8 + $0xe10] sm:$0xff]
    %v1714 = vld [vmem:[#allocation8 + $0xe18] sm:$0xff]
    %v1715 = vld [vmem:[#allocation8 + $0xe20] sm:$0xff]
    %v1716 = vld [vmem:[#allocation8 + $0xe28] sm:$0xff]
    %v1717 = vld [vmem:[#allocation8 + $0xe30] sm:$0xff]
    %v1718 = vld [vmem:[#allocation8 + $0xe38] sm:$0xff]
    %v1719 = vld [vmem:[#allocation8 + $0xe40] sm:$0xff]
    %v1720 = vld [vmem:[#allocation8 + $0xe48] sm:$0xff]
    %v1721 = vld [vmem:[#allocation8 + $0xe50] sm:$0xff]
    %v1722 = vld [vmem:[#allocation8 + $0xe58] sm:$0xff]
    %v1723 = vld [vmem:[#allocation8 + $0xe60] sm:$0xff]
    %v1724 = vld [vmem:[#allocation8 + $0xe68] sm:$0xff]
    %v1725 = vld [vmem:[#allocation8 + $0xe70] sm:$0xff]
    %v1726 = vld [vmem:[#allocation8 + $0xe78] sm:$0xff]
    %v1727 = vld [vmem:[#allocation8 + $0xe80] sm:$0xff]
    %v1728 = vld [vmem:[#allocation8 + $0xe88] sm:$0xff]
    %v1729 = vld [vmem:[#allocation8 + $0xe90] sm:$0xff]
    %v1730 = vld [vmem:[#allocation8 + $0xe98] sm:$0xff]
    %v1731 = vld [vmem:[#allocation8 + $0xea0] sm:$0xff]
    %v1732 = vld [vmem:[#allocation8 + $0xea8] sm:$0xff]
    %v1733 = vld [vmem:[#allocation8 + $0xeb0] sm:$0xff]
    %v1734 = vld [vmem:[#allocation8 + $0xeb8] sm:$0xff]
    %v1735 = vld [vmem:[#allocation8 + $0xec0] sm:$0xff]
    %v1736 = vld [vmem:[#allocation8 + $0xec8] sm:$0xff]
    %v1737 = vld [vmem:[#allocation8 + $0xed0] sm:$0xff]
    %v1738 = vld [vmem:[#allocation8 + $0xed8] sm:$0xff]
    %v1739 = vld [vmem:[#allocation8 + $0xee0] sm:$0xff]
    %v1740 = vld [vmem:[#allocation8 + $0xee8] sm:$0xff]
    %v1741 = vld [vmem:[#allocation8 + $0xef0] sm:$0xff]
    %v1742 = vld [vmem:[#allocation8 + $0xef8] sm:$0xff]
    %v1743 = vld [vmem:[#allocation8 + $0xf00] sm:$0xff]
    %v1744 = vld [vmem:[#allocation8 + $0xf08] sm:$0xff]
    %v1745 = vld [vmem:[#allocation8 + $0xf10] sm:$0xff]
    %v1746 = vld [vmem:[#allocation8 + $0xf18] sm:$0xff]
    %v1747 = vld [vmem:[#allocation8 + $0xf20] sm:$0xff]
    %v1748 = vld [vmem:[#allocation8 + $0xf28] sm:$0xff]
    %v1749 = vld [vmem:[#allocation8 + $0xf30] sm:$0xff]
    %v1750 = vld [vmem:[#allocation8 + $0xf38] sm:$0xff]
    %v1751 = vld [vmem:[#allocation8 + $0xf40] sm:$0xff]
    %v1752 = vld [vmem:[#allocation8 + $0xf48] sm:$0xff]
    %v1753 = vld [vmem:[#allocation8 + $0xf50] sm:$0xff]
    %v1754 = vld [vmem:[#allocation8 + $0xf58] sm:$0xff]
    %v1755 = vld [vmem:[#allocation8 + $0xf60] sm:$0xff]
    %v1756 = vld [vmem:[#allocation8 + $0xf68] sm:$0xff]
    %v1757 = vld [vmem:[#allocation8 + $0xf70] sm:$0xff]
    %v1758 = vld [vmem:[#allocation8 + $0xf78] sm:$0xff]
    %v1759 = vld [vmem:[#allocation8 + $0xf80] sm:$0xff]
    %v1760 = vld [vmem:[#allocation8 + $0xf88] sm:$0xff]
    %v1761 = vld [vmem:[#allocation8 + $0xf90] sm:$0xff]
    %v1762 = vld [vmem:[#allocation8 + $0xf98] sm:$0xff]
    %v1763 = vld [vmem:[#allocation8 + $0xfa0] sm:$0xff]
    %v1764 = vld [vmem:[#allocation8 + $0xfa8] sm:$0xff]
    %v1765 = vld [vmem:[#allocation8 + $0xfb0] sm:$0xff]
    %v1766 = vld [vmem:[#allocation8 + $0xfb8] sm:$0xff]
    %v1767 = vld [vmem:[#allocation8 + $0xfc0] sm:$0xff]
    %v1768 = vld [vmem:[#allocation8 + $0xfc8] sm:$0xff]
    %v1769 = vld [vmem:[#allocation8 + $0xfd0] sm:$0xff]
    %v1770 = vld [vmem:[#allocation8 + $0xfd8] sm:$0xff]
    %v1771 = vld [vmem:[#allocation8 + $0xfe0] sm:$0xff]
    %v1772 = vld [vmem:[#allocation8 + $0xfe8] sm:$0xff]
    %v1773 = vld [vmem:[#allocation8 + $0xff0] sm:$0xff]
    %v1774 = vld [vmem:[#allocation8 + $0xff8] sm:$0xff]
    %v1775 = vpack.c.bf16 %v1271, %v1263
    %v1776 = vpack.c.bf16 %v1272, %v1264
    %v1777 = vpack.c.bf16 %v1273, %v1265
    %v1778 = vpack.c.bf16 %v1274, %v1266
    %v1779 = vpack.c.bf16 %v1275, %v1267
    %v1780 = vpack.c.bf16 %v1276, %v1268
    %v1781 = vpack.c.bf16 %v1277, %v1269
    %v1782 = vpack.c.bf16 %v1278, %v1270
    %v1783 = vpack.c.bf16 %v1287, %v1279
    %v1784 = vpack.c.bf16 %v1288, %v1280
    %v1785 = vpack.c.bf16 %v1289, %v1281
    %v1786 = vpack.c.bf16 %v1290, %v1282
    %v1787 = vpack.c.bf16 %v1291, %v1283
    %v1788 = vpack.c.bf16 %v1292, %v1284
    %v1789 = vpack.c.bf16 %v1293, %v1285
    %v1790 = vpack.c.bf16 %v1294, %v1286
    %v1791 = vpack.c.bf16 %v1303, %v1295
    %v1792 = vpack.c.bf16 %v1304, %v1296
    %v1793 = vpack.c.bf16 %v1305, %v1297
    %v1794 = vpack.c.bf16 %v1306, %v1298
    %v1795 = vpack.c.bf16 %v1307, %v1299
    %v1796 = vpack.c.bf16 %v1308, %v1300
    %v1797 = vpack.c.bf16 %v1309, %v1301
    %v1798 = vpack.c.bf16 %v1310, %v1302
    %v1799 = vpack.c.bf16 %v1319, %v1311
    %v1800 = vpack.c.bf16 %v1320, %v1312
    %v1801 = vpack.c.bf16 %v1321, %v1313
    %v1802 = vpack.c.bf16 %v1322, %v1314
    %v1803 = vpack.c.bf16 %v1323, %v1315
    %v1804 = vpack.c.bf16 %v1324, %v1316
    %v1805 = vpack.c.bf16 %v1325, %v1317
    %v1806 = vpack.c.bf16 %v1326, %v1318
    %v1807 = vpack.c.bf16 %v1335, %v1327
    %v1808 = vpack.c.bf16 %v1336, %v1328
    %v1809 = vpack.c.bf16 %v1337, %v1329
    %v1810 = vpack.c.bf16 %v1338, %v1330
    %v1811 = vpack.c.bf16 %v1339, %v1331
    %v1812 = vpack.c.bf16 %v1340, %v1332
    %v1813 = vpack.c.bf16 %v1341, %v1333
    %v1814 = vpack.c.bf16 %v1342, %v1334
    %v1815 = vpack.c.bf16 %v1351, %v1343
    %v1816 = vpack.c.bf16 %v1352, %v1344
    %v1817 = vpack.c.bf16 %v1353, %v1345
    %v1818 = vpack.c.bf16 %v1354, %v1346
    %v1819 = vpack.c.bf16 %v1355, %v1347
    %v1820 = vpack.c.bf16 %v1356, %v1348
    %v1821 = vpack.c.bf16 %v1357, %v1349
    %v1822 = vpack.c.bf16 %v1358, %v1350
    %v1823 = vpack.c.bf16 %v1367, %v1359
    %v1824 = vpack.c.bf16 %v1368, %v1360
    %v1825 = vpack.c.bf16 %v1369, %v1361
    %v1826 = vpack.c.bf16 %v1370, %v1362
    %v1827 = vpack.c.bf16 %v1371, %v1363
    %v1828 = vpack.c.bf16 %v1372, %v1364
    %v1829 = vpack.c.bf16 %v1373, %v1365
    %v1830 = vpack.c.bf16 %v1374, %v1366
    %v1831 = vpack.c.bf16 %v1383, %v1375
    %v1832 = vpack.c.bf16 %v1384, %v1376
    %v1833 = vpack.c.bf16 %v1385, %v1377
    %v1834 = vpack.c.bf16 %v1386, %v1378
    %v1835 = vpack.c.bf16 %v1387, %v1379
    %v1836 = vpack.c.bf16 %v1388, %v1380
    %v1837 = vpack.c.bf16 %v1389, %v1381
    %v1838 = vpack.c.bf16 %v1390, %v1382
    %v1839 = vpack.c.bf16 %v1399, %v1391
    %v1840 = vpack.c.bf16 %v1400, %v1392
    %v1841 = vpack.c.bf16 %v1401, %v1393
    %v1842 = vpack.c.bf16 %v1402, %v1394
    %v1843 = vpack.c.bf16 %v1403, %v1395
    %v1844 = vpack.c.bf16 %v1404, %v1396
    %v1845 = vpack.c.bf16 %v1405, %v1397
    %v1846 = vpack.c.bf16 %v1406, %v1398
    %v1847 = vpack.c.bf16 %v1415, %v1407
    %v1848 = vpack.c.bf16 %v1416, %v1408
    %v1849 = vpack.c.bf16 %v1417, %v1409
    %v1850 = vpack.c.bf16 %v1418, %v1410
    %v1851 = vpack.c.bf16 %v1419, %v1411
    %v1852 = vpack.c.bf16 %v1420, %v1412
    %v1853 = vpack.c.bf16 %v1421, %v1413
    %v1854 = vpack.c.bf16 %v1422, %v1414
    %v1855 = vpack.c.bf16 %v1431, %v1423
    %v1856 = vpack.c.bf16 %v1432, %v1424
    %v1857 = vpack.c.bf16 %v1433, %v1425
    %v1858 = vpack.c.bf16 %v1434, %v1426
    %v1859 = vpack.c.bf16 %v1435, %v1427
    %v1860 = vpack.c.bf16 %v1436, %v1428
    %v1861 = vpack.c.bf16 %v1437, %v1429
    %v1862 = vpack.c.bf16 %v1438, %v1430
    %v1863 = vpack.c.bf16 %v1447, %v1439
    %v1864 = vpack.c.bf16 %v1448, %v1440
    %v1865 = vpack.c.bf16 %v1449, %v1441
    %v1866 = vpack.c.bf16 %v1450, %v1442
    %v1867 = vpack.c.bf16 %v1451, %v1443
    %v1868 = vpack.c.bf16 %v1452, %v1444
    %v1869 = vpack.c.bf16 %v1453, %v1445
    %v1870 = vpack.c.bf16 %v1454, %v1446
    %v1871 = vpack.c.bf16 %v1463, %v1455
    %v1872 = vpack.c.bf16 %v1464, %v1456
    %v1873 = vpack.c.bf16 %v1465, %v1457
    %v1874 = vpack.c.bf16 %v1466, %v1458
    %v1875 = vpack.c.bf16 %v1467, %v1459
    %v1876 = vpack.c.bf16 %v1468, %v1460
    %v1877 = vpack.c.bf16 %v1469, %v1461
    %v1878 = vpack.c.bf16 %v1470, %v1462
    %v1879 = vpack.c.bf16 %v1479, %v1471
    %v1880 = vpack.c.bf16 %v1480, %v1472
    %v1881 = vpack.c.bf16 %v1481, %v1473
    %v1882 = vpack.c.bf16 %v1482, %v1474
    %v1883 = vpack.c.bf16 %v1483, %v1475
    %v1884 = vpack.c.bf16 %v1484, %v1476
    %v1885 = vpack.c.bf16 %v1485, %v1477
    %v1886 = vpack.c.bf16 %v1486, %v1478
    %v1887 = vpack.c.bf16 %v1495, %v1487
    %v1888 = vpack.c.bf16 %v1496, %v1488
    %v1889 = vpack.c.bf16 %v1497, %v1489
    %v1890 = vpack.c.bf16 %v1498, %v1490
    %v1891 = vpack.c.bf16 %v1499, %v1491
    %v1892 = vpack.c.bf16 %v1500, %v1492
    %v1893 = vpack.c.bf16 %v1501, %v1493
    %v1894 = vpack.c.bf16 %v1502, %v1494
    %v1895 = vpack.c.bf16 %v1511, %v1503
    %v1896 = vpack.c.bf16 %v1512, %v1504
    %v1897 = vpack.c.bf16 %v1513, %v1505
    %v1898 = vpack.c.bf16 %v1514, %v1506
    %v1899 = vpack.c.bf16 %v1515, %v1507
    %v1900 = vpack.c.bf16 %v1516, %v1508
    %v1901 = vpack.c.bf16 %v1517, %v1509
    %v1902 = vpack.c.bf16 %v1518, %v1510
    %v1903 = vpack.c.bf16 %v1527, %v1519
    %v1904 = vpack.c.bf16 %v1528, %v1520
    %v1905 = vpack.c.bf16 %v1529, %v1521
    %v1906 = vpack.c.bf16 %v1530, %v1522
    %v1907 = vpack.c.bf16 %v1531, %v1523
    %v1908 = vpack.c.bf16 %v1532, %v1524
    %v1909 = vpack.c.bf16 %v1533, %v1525
    %v1910 = vpack.c.bf16 %v1534, %v1526
    %v1911 = vpack.c.bf16 %v1543, %v1535
    %v1912 = vpack.c.bf16 %v1544, %v1536
    %v1913 = vpack.c.bf16 %v1545, %v1537
    %v1914 = vpack.c.bf16 %v1546, %v1538
    %v1915 = vpack.c.bf16 %v1547, %v1539
    %v1916 = vpack.c.bf16 %v1548, %v1540
    %v1917 = vpack.c.bf16 %v1549, %v1541
    %v1918 = vpack.c.bf16 %v1550, %v1542
    %v1919 = vpack.c.bf16 %v1559, %v1551
    %v1920 = vpack.c.bf16 %v1560, %v1552
    %v1921 = vpack.c.bf16 %v1561, %v1553
    %v1922 = vpack.c.bf16 %v1562, %v1554
    %v1923 = vpack.c.bf16 %v1563, %v1555
    %v1924 = vpack.c.bf16 %v1564, %v1556
    %v1925 = vpack.c.bf16 %v1565, %v1557
    %v1926 = vpack.c.bf16 %v1566, %v1558
    %v1927 = vpack.c.bf16 %v1575, %v1567
    %v1928 = vpack.c.bf16 %v1576, %v1568
    %v1929 = vpack.c.bf16 %v1577, %v1569
    %v1930 = vpack.c.bf16 %v1578, %v1570
    %v1931 = vpack.c.bf16 %v1579, %v1571
    %v1932 = vpack.c.bf16 %v1580, %v1572
    %v1933 = vpack.c.bf16 %v1581, %v1573
    %v1934 = vpack.c.bf16 %v1582, %v1574
    %v1935 = vpack.c.bf16 %v1591, %v1583
    %v1936 = vpack.c.bf16 %v1592, %v1584
    %v1937 = vpack.c.bf16 %v1593, %v1585
    %v1938 = vpack.c.bf16 %v1594, %v1586
    %v1939 = vpack.c.bf16 %v1595, %v1587
    %v1940 = vpack.c.bf16 %v1596, %v1588
    %v1941 = vpack.c.bf16 %v1597, %v1589
    %v1942 = vpack.c.bf16 %v1598, %v1590
    %v1943 = vpack.c.bf16 %v1607, %v1599
    %v1944 = vpack.c.bf16 %v1608, %v1600
    %v1945 = vpack.c.bf16 %v1609, %v1601
    %v1946 = vpack.c.bf16 %v1610, %v1602
    %v1947 = vpack.c.bf16 %v1611, %v1603
    %v1948 = vpack.c.bf16 %v1612, %v1604
    %v1949 = vpack.c.bf16 %v1613, %v1605
    %v1950 = vpack.c.bf16 %v1614, %v1606
    %v1951 = vpack.c.bf16 %v1623, %v1615
    %v1952 = vpack.c.bf16 %v1624, %v1616
    %v1953 = vpack.c.bf16 %v1625, %v1617
    %v1954 = vpack.c.bf16 %v1626, %v1618
    %v1955 = vpack.c.bf16 %v1627, %v1619
    %v1956 = vpack.c.bf16 %v1628, %v1620
    %v1957 = vpack.c.bf16 %v1629, %v1621
    %v1958 = vpack.c.bf16 %v1630, %v1622
    %v1959 = vpack.c.bf16 %v1639, %v1631
    %v1960 = vpack.c.bf16 %v1640, %v1632
    %v1961 = vpack.c.bf16 %v1641, %v1633
    %v1962 = vpack.c.bf16 %v1642, %v1634
    %v1963 = vpack.c.bf16 %v1643, %v1635
    %v1964 = vpack.c.bf16 %v1644, %v1636
    %v1965 = vpack.c.bf16 %v1645, %v1637
    %v1966 = vpack.c.bf16 %v1646, %v1638
    %v1967 = vpack.c.bf16 %v1655, %v1647
    %v1968 = vpack.c.bf16 %v1656, %v1648
    %v1969 = vpack.c.bf16 %v1657, %v1649
    %v1970 = vpack.c.bf16 %v1658, %v1650
    %v1971 = vpack.c.bf16 %v1659, %v1651
    %v1972 = vpack.c.bf16 %v1660, %v1652
    %v1973 = vpack.c.bf16 %v1661, %v1653
    %v1974 = vpack.c.bf16 %v1662, %v1654
    %v1975 = vpack.c.bf16 %v1671, %v1663
    %v1976 = vpack.c.bf16 %v1672, %v1664
    %v1977 = vpack.c.bf16 %v1673, %v1665
    %v1978 = vpack.c.bf16 %v1674, %v1666
    %v1979 = vpack.c.bf16 %v1675, %v1667
    %v1980 = vpack.c.bf16 %v1676, %v1668
    %v1981 = vpack.c.bf16 %v1677, %v1669
    %v1982 = vpack.c.bf16 %v1678, %v1670
    %v1983 = vpack.c.bf16 %v1687, %v1679
    %v1984 = vpack.c.bf16 %v1688, %v1680
    %v1985 = vpack.c.bf16 %v1689, %v1681
    %v1986 = vpack.c.bf16 %v1690, %v1682
    %v1987 = vpack.c.bf16 %v1691, %v1683
    %v1988 = vpack.c.bf16 %v1692, %v1684
    %v1989 = vpack.c.bf16 %v1693, %v1685
    %v1990 = vpack.c.bf16 %v1694, %v1686
    %v1991 = vpack.c.bf16 %v1703, %v1695
    %v1992 = vpack.c.bf16 %v1704, %v1696
    %v1993 = vpack.c.bf16 %v1705, %v1697
    %v1994 = vpack.c.bf16 %v1706, %v1698
    %v1995 = vpack.c.bf16 %v1707, %v1699
    %v1996 = vpack.c.bf16 %v1708, %v1700
    %v1997 = vpack.c.bf16 %v1709, %v1701
    %v1998 = vpack.c.bf16 %v1710, %v1702
    %v1999 = vpack.c.bf16 %v1719, %v1711
    %v2000 = vpack.c.bf16 %v1720, %v1712
    %v2001 = vpack.c.bf16 %v1721, %v1713
    %v2002 = vpack.c.bf16 %v1722, %v1714
    %v2003 = vpack.c.bf16 %v1723, %v1715
    %v2004 = vpack.c.bf16 %v1724, %v1716
    %v2005 = vpack.c.bf16 %v1725, %v1717
    %v2006 = vpack.c.bf16 %v1726, %v1718
    %v2007 = vpack.c.bf16 %v1735, %v1727
    %v2008 = vpack.c.bf16 %v1736, %v1728
    %v2009 = vpack.c.bf16 %v1737, %v1729
    %v2010 = vpack.c.bf16 %v1738, %v1730
    %v2011 = vpack.c.bf16 %v1739, %v1731
    %v2012 = vpack.c.bf16 %v1740, %v1732
    %v2013 = vpack.c.bf16 %v1741, %v1733
    %v2014 = vpack.c.bf16 %v1742, %v1734
    %v2015 = vpack.c.bf16 %v1751, %v1743
    %v2016 = vpack.c.bf16 %v1752, %v1744
    %v2017 = vpack.c.bf16 %v1753, %v1745
    %v2018 = vpack.c.bf16 %v1754, %v1746
    %v2019 = vpack.c.bf16 %v1755, %v1747
    %v2020 = vpack.c.bf16 %v1756, %v1748
    %v2021 = vpack.c.bf16 %v1757, %v1749
    %v2022 = vpack.c.bf16 %v1758, %v1750
    %v2023 = vpack.c.bf16 %v1767, %v1759
    %v2024 = vpack.c.bf16 %v1768, %v1760
    %v2025 = vpack.c.bf16 %v1769, %v1761
    %v2026 = vpack.c.bf16 %v1770, %v1762
    %v2027 = vpack.c.bf16 %v1771, %v1763
    %v2028 = vpack.c.bf16 %v1772, %v1764
    %v2029 = vpack.c.bf16 %v1773, %v1765
    %v2030 = vpack.c.bf16 %v1774, %v1766
    %v2031 = vld [vmem:[#allocation10] sm:$0xff]
    %v2033 = vlaneseq
    %v2034 = vshrl.u32 %v2033, 7
    %v2035 = vsub.s32 0, %v2034
    %v2036 = vrot.slane %v2031, %v2035
    %v2037 = vlaneseq
    %v2038 = vshrl.u32 %v2037, 7
    %v2039 = vsub.s32 1, %v2038
    %v2040 = vrot.slane %v2031, %v2039
    %v2041 = vlaneseq
    %v2042 = vshrl.u32 %v2041, 7
    %v2043 = vsub.s32 2, %v2042
    %v2044 = vrot.slane %v2031, %v2043
    %v2045 = vlaneseq
    %v2046 = vshrl.u32 %v2045, 7
    %v2047 = vsub.s32 3, %v2046
    %v2048 = vrot.slane %v2031, %v2047
    %v2049 = vlaneseq
    %v2050 = vshrl.u32 %v2049, 7
    %v2051 = vsub.s32 4, %v2050
    %v2052 = vrot.slane %v2031, %v2051
    %v2053 = vlaneseq
    %v2054 = vshrl.u32 %v2053, 7
    %v2055 = vsub.s32 5, %v2054
    %v2056 = vrot.slane %v2031, %v2055
    %v2057 = vlaneseq
    %v2058 = vshrl.u32 %v2057, 7
    %v2059 = vsub.s32 6, %v2058
    %v2060 = vrot.slane %v2031, %v2059
    %v2061 = vlaneseq
    %v2062 = vshrl.u32 %v2061, 7
    %v2063 = vsub.s32 7, %v2062
    %v2064 = vrot.slane %v2031, %v2063
    %2073 = vmatprep.subr.bf16.mxu0 %v1776
    %2074 = vmatpush1.bf16.msra.mxu0 %v1775
    %2075 = vmatprep.subr.bf16.mxu0 %v1784
    %2076 = vmatpush1.bf16.msra.mxu0 %v1783
    %2077 = vmatprep.subr.bf16.mxu0 %v1792
    %2078 = vmatpush1.bf16.msra.mxu0 %v1791
    %2079 = vmatprep.subr.bf16.mxu0 %v1800
    %2080 = vmatpush1.bf16.msra.mxu0 %v1799
    %2081 = vmatprep.subr.bf16.mxu0 %v1808
    %2082 = vmatpush1.bf16.msra.mxu0 %v1807
    %2083 = vmatprep.subr.bf16.mxu0 %v1816
    %2084 = vmatpush1.bf16.msra.mxu0 %v1815
    %2085 = vmatprep.subr.bf16.mxu0 %v1824
    %2086 = vmatpush1.bf16.msra.mxu0 %v1823
    %2087 = vmatprep.subr.bf16.mxu0 %v1832
    %2088 = vmatpush1.bf16.msra.mxu0 %v1831
    %2089 = vmatprep.subr.bf16.mxu0 %v1840
    %2090 = vmatpush1.bf16.msra.mxu0 %v1839
    %2091 = vmatprep.subr.bf16.mxu0 %v1848
    %2092 = vmatpush1.bf16.msra.mxu0 %v1847
    %2093 = vmatprep.subr.bf16.mxu0 %v1856
    %2094 = vmatpush1.bf16.msra.mxu0 %v1855
    %2095 = vmatprep.subr.bf16.mxu0 %v1864
    %2096 = vmatpush1.bf16.msra.mxu0 %v1863
    %2097 = vmatprep.subr.bf16.mxu0 %v1872
    %2098 = vmatpush1.bf16.msra.mxu0 %v1871
    %2099 = vmatprep.subr.bf16.mxu0 %v1880
    %2100 = vmatpush1.bf16.msra.mxu0 %v1879
    %2101 = vmatprep.subr.bf16.mxu0 %v1888
    %2102 = vmatpush1.bf16.msra.mxu0 %v1887
    %2103 = vmatprep.subr.bf16.mxu0 %v1896
    %2104 = vmatpush1.bf16.msra.mxu0 %v1895
    %2105 = vmatprep.mubr.bf16.mxu0 %v1260
    %2106 = vmatmul.mubr.bf16.gmra.mrb[0].mxu0 %v1259
    %v2107 = vpop.f32.mrb[0].mxu0
    %v2108 = vadd.f32 %v2036, %v2107
    %v2109 = vpop.f32.mrb[0].mxu0
    %v2110 = vadd.f32 %v2040, %v2109
    %v2111 = vpop.f32.mrb[0].mxu0
    %v2112 = vpop.f32.mrb[0].mxu0
    %2113 = vdwg.mxu0
    %2114 = vmatprep.subr.bf16.mxu0 %v1904
    %2115 = vmatpush1.bf16.msra.mxu0 %v1903
    %2116 = vmatprep.subr.bf16.mxu0 %v1912
    %2117 = vmatpush1.bf16.msra.mxu0 %v1911
    %2118 = vmatprep.subr.bf16.mxu0 %v1920
    %2119 = vmatpush1.bf16.msra.mxu0 %v1919
    %2120 = vmatprep.subr.bf16.mxu0 %v1928
    %2121 = vmatpush1.bf16.msra.mxu0 %v1927
    %2122 = vmatprep.subr.bf16.mxu0 %v1936
    %2123 = vmatpush1.bf16.msra.mxu0 %v1935
    %2124 = vmatprep.subr.bf16.mxu0 %v1944
    %2125 = vmatpush1.bf16.msra.mxu0 %v1943
    %2126 = vmatprep.subr.bf16.mxu0 %v1952
    %2127 = vmatpush1.bf16.msra.mxu0 %v1951
    %2128 = vmatprep.subr.bf16.mxu0 %v1960
    %2129 = vmatpush1.bf16.msra.mxu0 %v1959
    %2130 = vmatprep.subr.bf16.mxu0 %v1968
    %2131 = vmatpush1.bf16.msra.mxu0 %v1967
    %2132 = vmatprep.subr.bf16.mxu0 %v1976
    %2133 = vmatpush1.bf16.msra.mxu0 %v1975
    %2134 = vmatprep.subr.bf16.mxu0 %v1984
    %2135 = vmatpush1.bf16.msra.mxu0 %v1983
    %2136 = vmatprep.subr.bf16.mxu0 %v1992
    %2137 = vmatpush1.bf16.msra.mxu0 %v1991
    %2138 = vmatprep.subr.bf16.mxu0 %v2000
    %2139 = vmatpush1.bf16.msra.mxu0 %v1999
    %2140 = vmatprep.subr.bf16.mxu0 %v2008
    %2141 = vmatpush1.bf16.msra.mxu0 %v2007
    %2142 = vmatprep.subr.bf16.mxu0 %v2016
    %2143 = vmatpush1.bf16.msra.mxu0 %v2015
    %2144 = vmatprep.subr.bf16.mxu0 %v2024
    %2145 = vmatpush1.bf16.msra.mxu0 %v2023
    %2146 = vmatprep.mubr.bf16.mxu0 %v1262
    %2147 = vmatmul.mubr.bf16.gmra.mrb[0].mxu0 %v1261
    %v2148 = vpop.f32.mrb[0].mxu0
    %v2149 = vadd.f32 %v2108, %v2148
    %v2150 = vpop.f32.mrb[0].mxu0
    %v2151 = vadd.f32 %v2110, %v2150
    %v2152 = vpop.f32.mrb[0].mxu0
    %v2153 = vpop.f32.mrb[0].mxu0
    %2154 = vdwg.mxu0
    %2155 = vmatprep.subr.bf16.mxu0 %v1778
    %2156 = vmatpush1.bf16.msra.mxu0 %v1777
    %2157 = vmatprep.subr.bf16.mxu0 %v1786
    %2158 = vmatpush1.bf16.msra.mxu0 %v1785
    %2159 = vmatprep.subr.bf16.mxu0 %v1794
    %2160 = vmatpush1.bf16.msra.mxu0 %v1793
    %2161 = vmatprep.subr.bf16.mxu0 %v1802
    %2162 = vmatpush1.bf16.msra.mxu0 %v1801
    %2163 = vmatprep.subr.bf16.mxu0 %v1810
    %2164 = vmatpush1.bf16.msra.mxu0 %v1809
    %2165 = vmatprep.subr.bf16.mxu0 %v1818
    %2166 = vmatpush1.bf16.msra.mxu0 %v1817
    %2167 = vmatprep.subr.bf16.mxu0 %v1826
    %2168 = vmatpush1.bf16.msra.mxu0 %v1825
    %2169 = vmatprep.subr.bf16.mxu0 %v1834
    %2170 = vmatpush1.bf16.msra.mxu0 %v1833
    %2171 = vmatprep.subr.bf16.mxu0 %v1842
    %2172 = vmatpush1.bf16.msra.mxu0 %v1841
    %2173 = vmatprep.subr.bf16.mxu0 %v1850
    %2174 = vmatpush1.bf16.msra.mxu0 %v1849
    %2175 = vmatprep.subr.bf16.mxu0 %v1858
    %2176 = vmatpush1.bf16.msra.mxu0 %v1857
    %2177 = vmatprep.subr.bf16.mxu0 %v1866
    %2178 = vmatpush1.bf16.msra.mxu0 %v1865
    %2179 = vmatprep.subr.bf16.mxu0 %v1874
    %2180 = vmatpush1.bf16.msra.mxu0 %v1873
    %2181 = vmatprep.subr.bf16.mxu0 %v1882
    %2182 = vmatpush1.bf16.msra.mxu0 %v1881
    %2183 = vmatprep.subr.bf16.mxu0 %v1890
    %2184 = vmatpush1.bf16.msra.mxu0 %v1889
    %2185 = vmatprep.subr.bf16.mxu0 %v1898
    %2186 = vmatpush1.bf16.msra.mxu0 %v1897
    %2187 = vmatprep.mubr.bf16.mxu0 %v1260
    %2188 = vmatmul.mubr.bf16.gmra.mrb[0].mxu0 %v1259
    %v2189 = vpop.f32.mrb[0].mxu0
    %v2190 = vadd.f32 %v2044, %v2189
    %v2191 = vpop.f32.mrb[0].mxu0
    %v2192 = vadd.f32 %v2048, %v2191
    %v2193 = vpop.f32.mrb[0].mxu0
    %v2194 = vpop.f32.mrb[0].mxu0
    %2195 = vdwg.mxu0
    %2196 = vmatprep.subr.bf16.mxu0 %v1906
    %2197 = vmatpush1.bf16.msra.mxu0 %v1905
    %2198 = vmatprep.subr.bf16.mxu0 %v1914
    %2199 = vmatpush1.bf16.msra.mxu0 %v1913
    %2200 = vmatprep.subr.bf16.mxu0 %v1922
    %2201 = vmatpush1.bf16.msra.mxu0 %v1921
    %2202 = vmatprep.subr.bf16.mxu0 %v1930
    %2203 = vmatpush1.bf16.msra.mxu0 %v1929
    %2204 = vmatprep.subr.bf16.mxu0 %v1938
    %2205 = vmatpush1.bf16.msra.mxu0 %v1937
    %2206 = vmatprep.subr.bf16.mxu0 %v1946
    %2207 = vmatpush1.bf16.msra.mxu0 %v1945
    %2208 = vmatprep.subr.bf16.mxu0 %v1954
    %2209 = vmatpush1.bf16.msra.mxu0 %v1953
    %2210 = vmatprep.subr.bf16.mxu0 %v1962
    %2211 = vmatpush1.bf16.msra.mxu0 %v1961
    %2212 = vmatprep.subr.bf16.mxu0 %v1970
    %2213 = vmatpush1.bf16.msra.mxu0 %v1969
    %2214 = vmatprep.subr.bf16.mxu0 %v1978
    %2215 = vmatpush1.bf16.msra.mxu0 %v1977
    %2216 = vmatprep.subr.bf16.mxu0 %v1986
    %2217 = vmatpush1.bf16.msra.mxu0 %v1985
    %2218 = vmatprep.subr.bf16.mxu0 %v1994
    %2219 = vmatpush1.bf16.msra.mxu0 %v1993
    %2220 = vmatprep.subr.bf16.mxu0 %v2002
    %2221 = vmatpush1.bf16.msra.mxu0 %v2001
    %2222 = vmatprep.subr.bf16.mxu0 %v2010
    %2223 = vmatpush1.bf16.msra.mxu0 %v2009
    %2224 = vmatprep.subr.bf16.mxu0 %v2018
    %2225 = vmatpush1.bf16.msra.mxu0 %v2017
    %2226 = vmatprep.subr.bf16.mxu0 %v2026
    %2227 = vmatpush1.bf16.msra.mxu0 %v2025
    %2228 = vmatprep.mubr.bf16.mxu0 %v1262
    %2229 = vmatmul.mubr.bf16.gmra.mrb[0].mxu0 %v1261
    %v2230 = vpop.f32.mrb[0].mxu0
    %v2231 = vadd.f32 %v2190, %v2230
    %v2232 = vpop.f32.mrb[0].mxu0
    %v2233 = vadd.f32 %v2192, %v2232
    %v2234 = vpop.f32.mrb[0].mxu0
    %v2235 = vpop.f32.mrb[0].mxu0
    %2236 = vdwg.mxu0
    %2237 = vmatprep.subr.bf16.mxu0 %v1780
    %2238 = vmatpush1.bf16.msra.mxu0 %v1779
    %2239 = vmatprep.subr.bf16.mxu0 %v1788
    %2240 = vmatpush1.bf16.msra.mxu0 %v1787
    %2241 = vmatprep.subr.bf16.mxu0 %v1796
    %2242 = vmatpush1.bf16.msra.mxu0 %v1795
    %2243 = vmatprep.subr.bf16.mxu0 %v1804
    %2244 = vmatpush1.bf16.msra.mxu0 %v1803
    %2245 = vmatprep.subr.bf16.mxu0 %v1812
    %2246 = vmatpush1.bf16.msra.mxu0 %v1811
    %2247 = vmatprep.subr.bf16.mxu0 %v1820
    %2248 = vmatpush1.bf16.msra.mxu0 %v1819
    %2249 = vmatprep.subr.bf16.mxu0 %v1828
    %2250 = vmatpush1.bf16.msra.mxu0 %v1827
    %2251 = vmatprep.subr.bf16.mxu0 %v1836
    %2252 = vmatpush1.bf16.msra.mxu0 %v1835
    %2253 = vmatprep.subr.bf16.mxu0 %v1844
    %2254 = vmatpush1.bf16.msra.mxu0 %v1843
    %2255 = vmatprep.subr.bf16.mxu0 %v1852
    %2256 = vmatpush1.bf16.msra.mxu0 %v1851
    %2257 = vmatprep.subr.bf16.mxu0 %v1860
    %2258 = vmatpush1.bf16.msra.mxu0 %v1859
    %2259 = vmatprep.subr.bf16.mxu0 %v1868
    %2260 = vmatpush1.bf16.msra.mxu0 %v1867
    %2261 = vmatprep.subr.bf16.mxu0 %v1876
    %2262 = vmatpush1.bf16.msra.mxu0 %v1875
    %2263 = vmatprep.subr.bf16.mxu0 %v1884
    %2264 = vmatpush1.bf16.msra.mxu0 %v1883
    %2265 = vmatprep.subr.bf16.mxu0 %v1892
    %2266 = vmatpush1.bf16.msra.mxu0 %v1891
    %2267 = vmatprep.subr.bf16.mxu0 %v1900
    %2268 = vmatpush1.bf16.msra.mxu0 %v1899
    %2269 = vmatprep.mubr.bf16.mxu0 %v1260
    %2270 = vmatmul.mubr.bf16.gmra.mrb[0].mxu0 %v1259
    %v2271 = vpop.f32.mrb[0].mxu0
    %v2272 = vadd.f32 %v2052, %v2271
    %v2273 = vpop.f32.mrb[0].mxu0
    %v2274 = vadd.f32 %v2056, %v2273
    %v2275 = vpop.f32.mrb[0].mxu0
    %v2276 = vpop.f32.mrb[0].mxu0
    %2277 = vdwg.mxu0
    %2278 = vmatprep.subr.bf16.mxu0 %v1908
    %2279 = vmatpush1.bf16.msra.mxu0 %v1907
    %2280 = vmatprep.subr.bf16.mxu0 %v1916
    %2281 = vmatpush1.bf16.msra.mxu0 %v1915
    %2282 = vmatprep.subr.bf16.mxu0 %v1924
    %2283 = vmatpush1.bf16.msra.mxu0 %v1923
    %2284 = vmatprep.subr.bf16.mxu0 %v1932
    %2285 = vmatpush1.bf16.msra.mxu0 %v1931
    %2286 = vmatprep.subr.bf16.mxu0 %v1940
    %2287 = vmatpush1.bf16.msra.mxu0 %v1939
    %2288 = vmatprep.subr.bf16.mxu0 %v1948
    %2289 = vmatpush1.bf16.msra.mxu0 %v1947
    %2290 = vmatprep.subr.bf16.mxu0 %v1956
    %2291 = vmatpush1.bf16.msra.mxu0 %v1955
    %2292 = vmatprep.subr.bf16.mxu0 %v1964
    %2293 = vmatpush1.bf16.msra.mxu0 %v1963
    %2294 = vmatprep.subr.bf16.mxu0 %v1972
    %2295 = vmatpush1.bf16.msra.mxu0 %v1971
    %2296 = vmatprep.subr.bf16.mxu0 %v1980
    %2297 = vmatpush1.bf16.msra.mxu0 %v1979
    %2298 = vmatprep.subr.bf16.mxu0 %v1988
    %2299 = vmatpush1.bf16.msra.mxu0 %v1987
    %2300 = vmatprep.subr.bf16.mxu0 %v1996
    %2301 = vmatpush1.bf16.msra.mxu0 %v1995
    %2302 = vmatprep.subr.bf16.mxu0 %v2004
    %2303 = vmatpush1.bf16.msra.mxu0 %v2003
    %2304 = vmatprep.subr.bf16.mxu0 %v2012
    %2305 = vmatpush1.bf16.msra.mxu0 %v2011
    %2306 = vmatprep.subr.bf16.mxu0 %v2020
    %2307 = vmatpush1.bf16.msra.mxu0 %v2019
    %2308 = vmatprep.subr.bf16.mxu0 %v2028
    %2309 = vmatpush1.bf16.msra.mxu0 %v2027
    %2310 = vmatprep.mubr.bf16.mxu0 %v1262
    %2311 = vmatmul.mubr.bf16.gmra.mrb[0].mxu0 %v1261
    %v2312 = vpop.f32.mrb[0].mxu0
    %v2313 = vadd.f32 %v2272, %v2312
    %v2314 = vpop.f32.mrb[0].mxu0
    %v2315 = vadd.f32 %v2274, %v2314
    %v2316 = vpop.f32.mrb[0].mxu0
    %v2317 = vpop.f32.mrb[0].mxu0
    %2318 = vdwg.mxu0
    %2319 = vmatprep.subr.bf16.mxu0 %v1782
    %2320 = vmatpush1.bf16.msra.mxu0 %v1781
    %2321 = vmatprep.subr.bf16.mxu0 %v1790
    %2322 = vmatpush1.bf16.msra.mxu0 %v1789
    %2323 = vmatprep.subr.bf16.mxu0 %v1798
    %2324 = vmatpush1.bf16.msra.mxu0 %v1797
    %2325 = vmatprep.subr.bf16.mxu0 %v1806
    %2326 = vmatpush1.bf16.msra.mxu0 %v1805
    %2327 = vmatprep.subr.bf16.mxu0 %v1814
    %2328 = vmatpush1.bf16.msra.mxu0 %v1813
    %2329 = vmatprep.subr.bf16.mxu0 %v1822
    %2330 = vmatpush1.bf16.msra.mxu0 %v1821
    %2331 = vmatprep.subr.bf16.mxu0 %v1830
    %2332 = vmatpush1.bf16.msra.mxu0 %v1829
    %2333 = vmatprep.subr.bf16.mxu0 %v1838
    %2334 = vmatpush1.bf16.msra.mxu0 %v1837
    %2335 = vmatprep.subr.bf16.mxu0 %v1846
    %2336 = vmatpush1.bf16.msra.mxu0 %v1845
    %2337 = vmatprep.subr.bf16.mxu0 %v1854
    %2338 = vmatpush1.bf16.msra.mxu0 %v1853
    %2339 = vmatprep.subr.bf16.mxu0 %v1862
    %2340 = vmatpush1.bf16.msra.mxu0 %v1861
    %2341 = vmatprep.subr.bf16.mxu0 %v1870
    %2342 = vmatpush1.bf16.msra.mxu0 %v1869
    %2343 = vmatprep.subr.bf16.mxu0 %v1878
    %2344 = vmatpush1.bf16.msra.mxu0 %v1877
    %2345 = vmatprep.subr.bf16.mxu0 %v1886
    %2346 = vmatpush1.bf16.msra.mxu0 %v1885
    %2347 = vmatprep.subr.bf16.mxu0 %v1894
    %2348 = vmatpush1.bf16.msra.mxu0 %v1893
    %2349 = vmatprep.subr.bf16.mxu0 %v1902
    %2350 = vmatpush1.bf16.msra.mxu0 %v1901
    %2351 = vmatprep.mubr.bf16.mxu0 %v1260
    %2352 = vmatmul.mubr.bf16.gmra.mrb[0].mxu0 %v1259
    %v2353 = vpop.f32.mrb[0].mxu0
    %v2354 = vadd.f32 %v2060, %v2353
    %v2355 = vpop.f32.mrb[0].mxu0
    %v2356 = vadd.f32 %v2064, %v2355
    %v2357 = vpop.f32.mrb[0].mxu0
    %v2358 = vpop.f32.mrb[0].mxu0
    %2359 = vdwg.mxu0
    %2360 = vmatprep.subr.bf16.mxu0 %v1910
    %2361 = vmatpush1.bf16.msra.mxu0 %v1909
    %2362 = vmatprep.subr.bf16.mxu0 %v1918
    %2363 = vmatpush1.bf16.msra.mxu0 %v1917
    %2364 = vmatprep.subr.bf16.mxu0 %v1926
    %2365 = vmatpush1.bf16.msra.mxu0 %v1925
    %2366 = vmatprep.subr.bf16.mxu0 %v1934
    %2367 = vmatpush1.bf16.msra.mxu0 %v1933
    %2368 = vmatprep.subr.bf16.mxu0 %v1942
    %2369 = vmatpush1.bf16.msra.mxu0 %v1941
    %2370 = vmatprep.subr.bf16.mxu0 %v1950
    %2371 = vmatpush1.bf16.msra.mxu0 %v1949
    %2372 = vmatprep.subr.bf16.mxu0 %v1958
    %2373 = vmatpush1.bf16.msra.mxu0 %v1957
    %2374 = vmatprep.subr.bf16.mxu0 %v1966
    %2375 = vmatpush1.bf16.msra.mxu0 %v1965
    %2376 = vmatprep.subr.bf16.mxu0 %v1974
    %2377 = vmatpush1.bf16.msra.mxu0 %v1973
    %2378 = vmatprep.subr.bf16.mxu0 %v1982
    %2379 = vmatpush1.bf16.msra.mxu0 %v1981
    %2380 = vmatprep.subr.bf16.mxu0 %v1990
    %2381 = vmatpush1.bf16.msra.mxu0 %v1989
    %2382 = vmatprep.subr.bf16.mxu0 %v1998
    %2383 = vmatpush1.bf16.msra.mxu0 %v1997
    %2384 = vmatprep.subr.bf16.mxu0 %v2006
    %2385 = vmatpush1.bf16.msra.mxu0 %v2005
    %2386 = vmatprep.subr.bf16.mxu0 %v2014
    %2387 = vmatpush1.bf16.msra.mxu0 %v2013
    %2388 = vmatprep.subr.bf16.mxu0 %v2022
    %2389 = vmatpush1.bf16.msra.mxu0 %v2021
    %2390 = vmatprep.subr.bf16.mxu0 %v2030
    %2391 = vmatpush1.bf16.msra.mxu0 %v2029
    %2392 = vmatprep.mubr.bf16.mxu0 %v1262
    %2393 = vmatmul.mubr.bf16.gmra.mrb[0].mxu0 %v1261
    %v2394 = vpop.f32.mrb[0].mxu0
    %v2395 = vadd.f32 %v2354, %v2394
    %v2396 = vpop.f32.mrb[0].mxu0
    %v2397 = vadd.f32 %v2356, %v2396
    %v2398 = vpop.f32.mrb[0].mxu0
    %v2399 = vpop.f32.mrb[0].mxu0
    %2400 = vdwg.mxu0
    %v2401 = vxor.u32 %v2149, 2147483648
    %v2402 = vxor.u32 %v2151, 2147483648
    %v2403 = vxor.u32 %v2231, 2147483648
    %v2404 = vxor.u32 %v2233, 2147483648
    %v2405 = vxor.u32 %v2313, 2147483648
    %v2406 = vxor.u32 %v2315, 2147483648
    %v2407 = vxor.u32 %v2395, 2147483648
    %v2408 = vxor.u32 %v2397, 2147483648
    %v2409 = vmul.f32 %v2401, 1.442695
    %v2410 = vpow.pop %v2409
    %v2411 = vmul.f32 %v2402, 1.442695
    %v2412 = vpow.pop %v2411
    %v2413 = vmul.f32 %v2403, 1.442695
    %v2414 = vpow.pop %v2413
    %v2415 = vmul.f32 %v2404, 1.442695
    %v2416 = vpow.pop %v2415
    %v2417 = vmul.f32 %v2405, 1.442695
    %v2418 = vpow.pop %v2417
    %v2419 = vmul.f32 %v2406, 1.442695
    %v2420 = vpow.pop %v2419
    %v2421 = vmul.f32 %v2407, 1.442695
    %v2422 = vpow.pop %v2421
    %v2423 = vmul.f32 %v2408, 1.442695
    %v2424 = vpow.pop %v2423
    %v2425 = vadd.f32 %v2410, 1.0
    %v2426 = vadd.f32 %v2412, 1.0
    %v2427 = vadd.f32 %v2414, 1.0
    %v2428 = vadd.f32 %v2416, 1.0
    %v2429 = vadd.f32 %v2418, 1.0
    %v2430 = vadd.f32 %v2420, 1.0
    %v2431 = vadd.f32 %v2422, 1.0
    %v2432 = vadd.f32 %v2424, 1.0
    %v2433 = vrcp.pop %v2425
    %v2434 = vmul.f32 1.0, %v2433
    %v2435 = vrcp.pop %v2426
    %v2436 = vmul.f32 1.0, %v2435
    %v2437 = vrcp.pop %v2427
    %v2438 = vmul.f32 1.0, %v2437
    %v2439 = vrcp.pop %v2428
    %v2440 = vmul.f32 1.0, %v2439
    %v2441 = vrcp.pop %v2429
    %v2442 = vmul.f32 1.0, %v2441
    %v2443 = vrcp.pop %v2430
    %v2444 = vmul.f32 1.0, %v2443
    %v2445 = vrcp.pop %v2431
    %v2446 = vmul.f32 1.0, %v2445
    %v2447 = vrcp.pop %v2432
    %v2448 = vmul.f32 1.0, %v2447
    %vm2449 = vcmask 1041408
    %v2450 = vsel %vm2449, %v2434, 0.0
    %v2451 = vrot.slane %v2450, 4
    %v2452 = vadd.f32 %v2450, %v2451
    %v2453 = vrot.slane %v2452, 2
    %v2454 = vadd.f32 %v2452, %v2453
    %v2455 = vrot.slane %v2454, 1
    %v2456 = vadd.f32 %v2454, %v2455
    %v2457 = vsel %vm2449, %v2436, 0.0
    %v2458 = vrot.slane %v2457, 4
    %v2459 = vadd.f32 %v2457, %v2458
    %v2460 = vrot.slane %v2459, 2
    %v2461 = vadd.f32 %v2459, %v2460
    %v2462 = vrot.slane %v2461, 1
    %v2463 = vadd.f32 %v2461, %v2462
    %v2464 = vsel %vm2449, %v2438, 0.0
    %v2465 = vrot.slane %v2464, 4
    %v2466 = vadd.f32 %v2464, %v2465
    %v2467 = vrot.slane %v2466, 2
    %v2468 = vadd.f32 %v2466, %v2467
    %v2469 = vrot.slane %v2468, 1
    %v2470 = vadd.f32 %v2468, %v2469
    %v2471 = vsel %vm2449, %v2440, 0.0
    %v2472 = vrot.slane %v2471, 4
    %v2473 = vadd.f32 %v2471, %v2472
    %v2474 = vrot.slane %v2473, 2
    %v2475 = vadd.f32 %v2473, %v2474
    %v2476 = vrot.slane %v2475, 1
    %v2477 = vadd.f32 %v2475, %v2476
    %v2478 = vsel %vm2449, %v2442, 0.0
    %v2479 = vrot.slane %v2478, 4
    %v2480 = vadd.f32 %v2478, %v2479
    %v2481 = vrot.slane %v2480, 2
    %v2482 = vadd.f32 %v2480, %v2481
    %v2483 = vrot.slane %v2482, 1
    %v2484 = vadd.f32 %v2482, %v2483
    %v2485 = vsel %vm2449, %v2444, 0.0
    %v2486 = vrot.slane %v2485, 4
    %v2487 = vadd.f32 %v2485, %v2486
    %v2488 = vrot.slane %v2487, 2
    %v2489 = vadd.f32 %v2487, %v2488
    %v2490 = vrot.slane %v2489, 1
    %v2491 = vadd.f32 %v2489, %v2490
    %v2492 = vsel %vm2449, %v2446, 0.0
    %v2493 = vrot.slane %v2492, 4
    %v2494 = vadd.f32 %v2492, %v2493
    %v2495 = vrot.slane %v2494, 2
    %v2496 = vadd.f32 %v2494, %v2495
    %v2497 = vrot.slane %v2496, 1
    %v2498 = vadd.f32 %v2496, %v2497
    %v2499 = vsel %vm2449, %v2448, 0.0
    %v2500 = vrot.slane %v2499, 4
    %v2501 = vadd.f32 %v2499, %v2500
    %v2502 = vrot.slane %v2501, 2
    %v2503 = vadd.f32 %v2501, %v2502
    %v2504 = vrot.slane %v2503, 1
    %v2505 = vadd.f32 %v2503, %v2504
    %v2506 = vrcp.pop 2.0
    %v2507 = vmul.f32 %v2456, %v2506
    %v2508 = vmul.f32 %v2463, %v2506
    %v2509 = vmul.f32 %v2470, %v2506
    %v2510 = vmul.f32 %v2477, %v2506
    %v2511 = vmul.f32 %v2484, %v2506
    %v2512 = vmul.f32 %v2491, %v2506
    %v2513 = vmul.f32 %v2498, %v2506
    %v2514 = vmul.f32 %v2505, %v2506
    %v2515 = vmax.f32 %v2507, %v2511
    %v2516 = vmax.f32 %v2508, %v2512
    %v2517 = vmax.f32 %v2509, %v2513
    %v2518 = vmax.f32 %v2510, %v2514
    %v2519 = vmax.f32 %v2515, %v2516
    %v2520 = vmax.f32 %v2517, %v2518
    %v2521 = vmax.f32 %v2519, %v2520
    %2522 = vmax.xlane.f32.xlu0 %v2521
    %v2523 = vpop.xlane.xlu0 %2522
    %v2524 = vsub.f32 %v2507, %v2523
    %v2525 = vsub.f32 %v2508, %v2523
    %v2526 = vsub.f32 %v2509, %v2523
    %v2527 = vsub.f32 %v2510, %v2523
    %v2528 = vsub.f32 %v2511, %v2523
    %v2529 = vsub.f32 %v2512, %v2523
    %v2530 = vsub.f32 %v2513, %v2523
    %v2531 = vsub.f32 %v2514, %v2523
    %v2532 = vmul.f32 %v2524, 1.442695
    %v2533 = vpow.pop %v2532
    %v2534 = vmul.f32 %v2525, 1.442695
    %v2535 = vpow.pop %v2534
    %v2536 = vmul.f32 %v2526, 1.442695
    %v2537 = vpow.pop %v2536
    %v2538 = vmul.f32 %v2527, 1.442695
    %v2539 = vpow.pop %v2538
    %v2540 = vmul.f32 %v2528, 1.442695
    %v2541 = vpow.pop %v2540
    %v2542 = vmul.f32 %v2529, 1.442695
    %v2543 = vpow.pop %v2542
    %v2544 = vmul.f32 %v2530, 1.442695
    %v2545 = vpow.pop %v2544
    %v2546 = vmul.f32 %v2531, 1.442695
    %v2547 = vpow.pop %v2546
    %v2548 = vadd.f32 %v2533, %v2535
    %v2549 = vadd.f32 %v2548, %v2537
    %v2550 = vadd.f32 %v2549, %v2539
    %v2551 = vadd.f32 %v2550, %v2541
    %v2552 = vadd.f32 %v2551, %v2543
    %v2553 = vadd.f32 %v2552, %v2545
    %v2554 = vadd.f32 %v2553, %v2547
    %2555 = vadd.xlane.f32.xlu0 %v2554
    %v2556 = vpop.xlane.xlu0 %2555
    %v2557 = vrcp.pop %v2556
    %v2558 = vmul.f32 %v2533, %v2557
    %v2559 = vmul.f32 %v2535, %v2557
    %v2560 = vmul.f32 %v2537, %v2557
    %v2561 = vmul.f32 %v2539, %v2557
    %v2562 = vmul.f32 %v2541, %v2557
    %v2563 = vmul.f32 %v2543, %v2557
    %v2564 = vmul.f32 %v2545, %v2557
    %v2565 = vmul.f32 %v2547, %v2557
    %v2574 = vcombine.low %v2558, %v2559
    %v2575 = vcombine.low %v2560, %v2561
    %v2577 = vunpack.c.l.s4 1983009808
    %v2578 = vunpack.c.0.s8 %v2577
    %v2579 = vlaneseq
    %v2580 = vshrl.u32 %v2579, 7
    %v2581 = vsub.s32 %v2578, %v2580
    %v2582 = vrot.slane %v2574, %v2581
    %v2584 = vunpack.c.l.s4 1983009808
    %v2585 = vunpack.c.0.s8 %v2584
    %v2586 = vlaneseq
    %v2587 = vshrl.u32 %v2586, 7
    %v2588 = vsub.s32 %v2585, %v2587
    %v2589 = vrot.slane %v2575, %v2588
    %v2590 = vcombine.low %v2582, %v2589
    %v2591 = vcombine.low %v2562, %v2563
    %v2592 = vcombine.low %v2564, %v2565
    %v2594 = vunpack.c.l.s4 1983009808
    %v2595 = vunpack.c.0.s8 %v2594
    %v2596 = vlaneseq
    %v2597 = vshrl.u32 %v2596, 7
    %v2598 = vsub.s32 %v2595, %v2597
    %v2599 = vrot.slane %v2591, %v2598
    %v2601 = vunpack.c.l.s4 1983009808
    %v2602 = vunpack.c.0.s8 %v2601
    %v2603 = vlaneseq
    %v2604 = vshrl.u32 %v2603, 7
    %v2605 = vsub.s32 %v2602, %v2604
    %v2606 = vrot.slane %v2592, %v2605
    %v2607 = vcombine.low %v2599, %v2606
    %v2610 = vmul.f32 %v83, %v2590
    %v2611 = vmul.f32 %v84, %v2607
    %2612 = vst [vmem:[#allocation11] sm:$0xff] %v2610
    %2613 = vst [vmem:[#allocation11 + $0x8] sm:$0xff] %v2611
    // Predicated region
    $region42: #{tpu_custom_call.1} parent=1 // pred_check
      _
    $region43: #{tpu_custom_call.1} parent=1 // pred_check_branch
      %2615 = sbr.rel (0) target = $region45
    $region44: #{tpu_custom_call.1} parent=1 // pred_region
      %s2617 = ssub.s32 256, 256
      %2618 = vsyncadd [#allocation4], %s2617
      %s2620 = sshll.u32 [#allocation11], 4
      %s2621 = int_to_ptr.vmem [resolvable:$true] %s2620
      %2623 = dma.vmem_to_hbm [thread:$0]  %s2621, 256, %s5, [#allocation4]
    $region45: #{tpu_custom_call.1} parent=1 // pred_fallthru
      _
    // Predicated region
    $region46: #{tpu_custom_call.1} parent=1 // pred_check
      _
    $region47: #{tpu_custom_call.1} parent=1 // pred_check_branch
      %2625 = sbr.rel (0) target = $region49
    $region48: #{tpu_custom_call.1} parent=1 // pred_region
      %2626 = dma.done [#allocation4], 256
    $region49: #{tpu_custom_call.1} parent=1 // pred_fallthru
      _
    %2627 = vsyncpa [#allocation3], 1
    %2628 = vsyncpa [#allocation6], 1
    %2629 = vsyncpa [#allocation9], 1
    %2630 = vsyncpa [#allocation4], 1

</llo_original>
